<compile_context>
chip_gen: v7x
topology: tpu7x:2x2x1
jax: 0.10.0
libtpu: 0.0.40
codegen_flags: <defaults>
</compile_context>

<pallas_src>
import functools

import jax
import jax.numpy as jnp
from jax import lax
from jax.experimental import pallas as pl
from jax.experimental.pallas import tpu as pltpu

EPS = 1e-5      # nn.GroupNorm default eps
PADW = 8        # left margin in the padded scratch -> sublane-aligned interior store


# ----------------------------------------------------------------------------- kernel
def resblock_kernel(x_ref, t_ref, g1_ref, be1_ref, w1_ref, b1_ref,
                    wt_ref, bt_ref, g2_ref, be2_ref, w2_ref, b2_ref,
                    *rest, identity_shortcut):
    if identity_shortcut:
        o_ref, xpad_ref, hpad_ref = rest
    else:
        wsc_ref, bsc_ref, o_ref, xpad_ref, hpad_ref = rest

    _, H, W, Cout = o_ref.shape
    Cin = x_ref.shape[3]
    HW = H * W

    x2 = x_ref[0].astype(jnp.float32).reshape(HW, Cin)        # (HW, Cin)

    # ---- norm1 (GroupNorm, 1 group over H,W,C) + Swish; single-pass stats,
    #      affine folded into one per-channel scale/shift FMA
    n1 = float(HW * Cin)
    mean1 = jnp.sum(x2) / n1
    var1 = jnp.sum(x2 * x2) / n1 - mean1 * mean1
    scale1 = g1_ref[...] * lax.rsqrt(var1 + EPS)               # (1, Cin)
    shift1 = be1_ref[...] - mean1 * scale1
    a1 = x2 * scale1 + shift1
    a1 = a1 * jax.nn.sigmoid(a1)                               # (HW, Cin)

    # ---- conv1: 3x3 pad=1 via zero-padded VMEM scratch + 9 channel matmuls (MXU)
    xpad_ref[...] = jnp.zeros(xpad_ref.shape, xpad_ref.dtype)
    xpad_ref[1:H + 1, PADW:PADW + W, :] = a1.reshape(H, W, Cin)    # aligned interior store
    acc = jnp.zeros((HW, Cout), jnp.float32)
    for kh in range(3):
        for kw in range(3):
            patch = xpad_ref[kh:kh + H, PADW - 1 + kw:PADW - 1 + kw + W, :]
            acc = acc + jnp.dot(patch.reshape(HW, Cin), w1_ref[kh * 3 + kw],
                                preferred_element_type=jnp.float32)

    # ---- time embedding: Swish(t_b) @ Wt; fold its bias + conv1 bias into one row
    trow = t_ref[0].astype(jnp.float32)                        # (1, E)
    trow = trow * jax.nn.sigmoid(trow)
    temb = jnp.dot(trow, wt_ref[...], preferred_element_type=jnp.float32)
    bias1 = b1_ref[...] + bt_ref[...] + temb                   # (1, Cout)

    h = acc + bias1                                            # (HW, Cout)

    # ---- norm2 + Swish (+ dropout == identity at inference)
    n2 = float(HW * Cout)
    mean2 = jnp.sum(h) / n2
    var2 = jnp.sum(h * h) / n2 - mean2 * mean2
    scale2 = g2_ref[...] * lax.rsqrt(var2 + EPS)               # (1, Cout)
    shift2 = be2_ref[...] - mean2 * scale2
    a2 = h * scale2 + shift2
    a2 = a2 * jax.nn.sigmoid(a2)                               # (HW, Cout)

    # ---- conv2: 3x3 pad=1
    hpad_ref[...] = jnp.zeros(hpad_ref.shape, hpad_ref.dtype)
    hpad_ref[1:H + 1, PADW:PADW + W, :] = a2.reshape(H, W, Cout)
    acc2 = jnp.zeros((HW, Cout), jnp.float32)
    for kh in range(3):
        for kw in range(3):
            patch = hpad_ref[kh:kh + H, PADW - 1 + kw:PADW - 1 + kw + W, :]
            acc2 = acc2 + jnp.dot(patch.reshape(HW, Cout), w2_ref[kh * 3 + kw],
                                  preferred_element_type=jnp.float32)

    # ---- shortcut on the original input (identity case skips the matmul entirely)
    if identity_shortcut:
        sc = x2
    else:
        sc = jnp.dot(x2, wsc_ref[...], preferred_element_type=jnp.float32) + bsc_ref[...]

    y = acc2 + b2_ref[...] + sc
    o_ref[0] = y.reshape(H, W, Cout).astype(o_ref.dtype)


# ----------------------------------------------------------------------------- wrapper
def resblockg_forward(x_nchw, t, p):
    """ResidualBlockG.forward(x, t) — x: (B, Cin, H, W), t: (B, emb_dim)."""
    x = jnp.transpose(x_nchw, (0, 2, 3, 1))                    # NCHW -> NHWC
    B, H, W, Cin = x.shape
    Cout = p["b1"].shape[0]
    E = t.shape[1]
    identity = "wsc" not in p                                  # static (pytree structure)

    w1 = p["w1"].reshape(9, Cin, Cout)
    w2 = p["w2"].reshape(9, Cout, Cout)

    def rep(shape):                                            # whole array, grid-invariant
        return pl.BlockSpec(shape, lambda b, _n=len(shape): (0,) * _n)

    in_specs = [
        pl.BlockSpec((1, H, W, Cin), lambda b: (b, 0, 0, 0)),  # x (per sample)
        pl.BlockSpec((1, 1, E), lambda b: (b, 0, 0)),          # t (per sample row)
        rep((1, Cin)), rep((1, Cin)),                          # norm1 gamma / beta
        rep((9, Cin, Cout)), rep((1, Cout)),                   # conv1 w / b
        rep((E, Cout)), rep((1, Cout)),                        # time_emb w / b
        rep((1, Cout)), rep((1, Cout)),                        # norm2 gamma / beta
        rep((9, Cout, Cout)), rep((1, Cout)),                  # conv2 w / b
    ]
    args = [x, t.reshape(B, 1, E),
            p["gn1_g"].reshape(1, Cin), p["gn1_b"].reshape(1, Cin),
            w1, p["b1"].reshape(1, Cout),
            p["wt"], p["bt"].reshape(1, Cout),
            p["gn2_g"].reshape(1, Cout), p["gn2_b"].reshape(1, Cout),
            w2, p["b2"].reshape(1, Cout)]
    if not identity:                                           # 1x1-conv shortcut weights
        in_specs += [rep((Cin, Cout)), rep((1, Cout))]
        args += [p["wsc"], p["bsc"].reshape(1, Cout)]

    out = pl.pallas_call(
        functools.partial(resblock_kernel, identity_shortcut=identity),
        out_shape=jax.ShapeDtypeStruct((B, H, W, Cout), x.dtype),
        grid=(B,),
        in_specs=in_specs,
        out_specs=pl.BlockSpec((1, H, W, Cout), lambda b: (b, 0, 0, 0)),
        scratch_shapes=[
            pltpu.VMEM((H + 2, PADW + W + 1, Cin), jnp.float32),   # padded conv1 input
            pltpu.VMEM((H + 2, PADW + W + 1, Cout), jnp.float32),  # padded conv2 input
        ],
        compiler_params=pltpu.CompilerParams(dimension_semantics=("parallel",)),
    )(*args)

    return jnp.transpose(out, (0, 3, 1, 2))                    # NHWC -> NCHW


# ----------------------------------------------------------------------------- pure-JAX reference
def ref_forward(x_nchw, t, p):
    x = jnp.transpose(x_nchw, (0, 2, 3, 1))

    def gn_swish(v, g, b):
        m = jnp.mean(v, axis=(1, 2, 3), keepdims=True)
        var = jnp.mean((v - m) ** 2, axis=(1, 2, 3), keepdims=True)
        y = (v - m) * lax.rsqrt(var + EPS) * g + b
        return y * jax.nn.sigmoid(y)

    def conv(v, w, b, pad):
        return lax.conv_general_dilated(
            v, w, (1, 1), [(pad, pad), (pad, pad)],
            dimension_numbers=("NHWC", "HWIO", "NHWC")) + b

    a1 = gn_swish(x, p["gn1_g"], p["gn1_b"])
    temb = (t * jax.nn.sigmoid(t)) @ p["wt"] + p["bt"]
    h = conv(a1, p["w1"], p["b1"], 1) + temb[:, None, None, :]
    a2 = gn_swish(h, p["gn2_g"], p["gn2_b"])
    if "wsc" in p:
        sc = conv(x, p["wsc"].reshape(1, 1, *p["wsc"].shape), p["bsc"], 0)
    else:
        sc = x
    y = conv(a2, p["w2"], p["b2"], 1) + sc
    return jnp.transpose(y, (0, 3, 1, 2))


# ----------------------------------------------------------------------------- params
def init_params(key, in_ch, out_ch, emb_dim):
    ks = jax.random.split(key, 12)
    s = 0.1
    n = lambda k, shp: s * jax.random.normal(k, shp, jnp.float32)
    p = {
        "gn1_g": jnp.ones((in_ch,), jnp.float32) + n(ks[0], (in_ch,)),
        "gn1_b": n(ks[1], (in_ch,)),
        "w1": n(ks[2], (3, 3, in_ch, out_ch)),                 # HWIO
        "b1": n(ks[3], (out_ch,)),
        "gn2_g": jnp.ones((out_ch,), jnp.float32) + n(ks[4], (out_ch,)),
        "gn2_b": n(ks[5], (out_ch,)),
        "w2": n(ks[6], (3, 3, out_ch, out_ch)),
        "b2": n(ks[7], (out_ch,)),
        "wt": n(ks[8], (emb_dim, out_ch)),                     # time Linear weight^T
        "bt": n(ks[9], (out_ch,)),
    }
    if in_ch != out_ch:
        p["wsc"] = n(ks[10], (in_ch, out_ch))                  # 1x1 shortcut conv (I,O)
        p["bsc"] = n(ks[11], (out_ch,))
    return p


if __name__ == "__main__":
    B, in_ch, out_ch, emb_dim, H, W = 2, 16, 32, 32, 8, 8

    key = jax.random.PRNGKey(0)
    kx, kt, kp, kp2 = jax.random.split(key, 4)
    t = jax.random.normal(kt, (B, emb_dim), jnp.float32)
    fwd = jax.jit(resblockg_forward)

    # case 1: in_channels != out_channels -> 1x1-conv shortcut
    x = jax.random.normal(kx, (B, in_ch, H, W), jnp.float32)
    params = init_params(kp, in_ch, out_ch, emb_dim)
    out = jax.block_until_ready(fwd(x, t, params))
    ref = jax.block_until_ready(ref_forward(x, t, params))
    assert out.shape == (B, out_ch, H, W)
    assert jnp.allclose(out, ref, rtol=1e-4, atol=1e-4), float(jnp.max(jnp.abs(out - ref)))

    # case 2: in_channels == out_channels -> identity shortcut (no 1x1 matmul in-kernel)
    x2 = jax.random.normal(kx, (B, out_ch, H, W), jnp.float32)
    params2 = init_params(kp2, out_ch, out_ch, emb_dim)
    out2 = jax.block_until_ready(fwd(x2, t, params2))
    ref2 = jax.block_until_ready(ref_forward(x2, t, params2))
    assert jnp.allclose(out2, ref2, rtol=1e-4, atol=1e-4), float(jnp.max(jnp.abs(out2 - ref2)))

    print("KERNEL_OK")
</pallas_src>

<mosaic_0001>
module attributes {stable_mosaic.version = 11 : i64} {
  func.func @resblock_kernel(%arg0: i32, %arg1: memref<1x8x8x16xf32, #tpu.memory_space<vmem>>, %arg2: memref<1x1x32xf32, #tpu.memory_space<vmem>>, %arg3: memref<1x16xf32, #tpu.memory_space<vmem>>, %arg4: memref<1x16xf32, #tpu.memory_space<vmem>>, %arg5: memref<9x16x32xf32, #tpu.memory_space<vmem>>, %arg6: memref<1x32xf32, #tpu.memory_space<vmem>>, %arg7: memref<32x32xf32, #tpu.memory_space<vmem>>, %arg8: memref<1x32xf32, #tpu.memory_space<vmem>>, %arg9: memref<1x32xf32, #tpu.memory_space<vmem>>, %arg10: memref<1x32xf32, #tpu.memory_space<vmem>>, %arg11: memref<9x32x32xf32, #tpu.memory_space<vmem>>, %arg12: memref<1x32xf32, #tpu.memory_space<vmem>>, %arg13: memref<16x32xf32, #tpu.memory_space<vmem>>, %arg14: memref<1x32xf32, #tpu.memory_space<vmem>>, %arg15: memref<1x8x8x32xf32, #tpu.memory_space<vmem>>, %arg16: memref<10x17x16xf32, #tpu.memory_space<vmem>>, %arg17: memref<10x17x32xf32, #tpu.memory_space<vmem>>) attributes {dimension_semantics = [#tpu.dimension_semantics<parallel>], iteration_bounds = array<i64: 2>, scalar_prefetch = 0 : i64, scratch_operands = 2 : i64, tpu.core_type = #tpu.core_type<tc>, window_params = [{transform_indices = @transform_0, window_bounds = array<i64: 1, 8, 8, 16>}, {transform_indices = @transform_1, window_bounds = array<i64: 1, 1, 32>}, {pipeline_mode = #tpu.pipeline_mode<synchronous>, transform_indices = @transform_2, window_bounds = array<i64: 1, 16>}, {pipeline_mode = #tpu.pipeline_mode<synchronous>, transform_indices = @transform_3, window_bounds = array<i64: 1, 16>}, {pipeline_mode = #tpu.pipeline_mode<synchronous>, transform_indices = @transform_4, window_bounds = array<i64: 9, 16, 32>}, {pipeline_mode = #tpu.pipeline_mode<synchronous>, transform_indices = @transform_5, window_bounds = array<i64: 1, 32>}, {pipeline_mode = #tpu.pipeline_mode<synchronous>, transform_indices = @transform_6, window_bounds = array<i64: 32, 32>}, {pipeline_mode = #tpu.pipeline_mode<synchronous>, transform_indices = @transform_7, window_bounds = array<i64: 1, 32>}, {pipeline_mode = #tpu.pipeline_mode<synchronous>, transform_indices = @transform_8, window_bounds = array<i64: 1, 32>}, {pipeline_mode = #tpu.pipeline_mode<synchronous>, transform_indices = @transform_9, window_bounds = array<i64: 1, 32>}, {pipeline_mode = #tpu.pipeline_mode<synchronous>, transform_indices = @transform_10, window_bounds = array<i64: 9, 32, 32>}, {pipeline_mode = #tpu.pipeline_mode<synchronous>, transform_indices = @transform_11, window_bounds = array<i64: 1, 32>}, {pipeline_mode = #tpu.pipeline_mode<synchronous>, transform_indices = @transform_12, window_bounds = array<i64: 16, 32>}, {pipeline_mode = #tpu.pipeline_mode<synchronous>, transform_indices = @transform_13, window_bounds = array<i64: 1, 32>}, {transform_indices = @transform_14, window_bounds = array<i64: 1, 8, 8, 32>}]} {
    %c0 = arith.constant 0 : index
    %c0_0 = arith.constant 0 : index
    %c0_1 = arith.constant 0 : index
    %c0_2 = arith.constant 0 : index
    %0 = vector.load %arg1[%c0, %c0_0, %c0_1, %c0_2] : memref<1x8x8x16xf32, #tpu.memory_space<vmem>>, vector<1x8x8x16xf32>
    %1 = vector.shape_cast %0 : vector<1x8x8x16xf32> to vector<8x8x16xf32>
    %2 = vector.shape_cast %1 : vector<8x8x16xf32> to vector<64x16xf32>
    %3 = vector.shape_cast %2 : vector<64x16xf32> to vector<1x64x16xf32>
    %cst = arith.constant dense<0.000000e+00> : vector<1xf32>
    %4 = vector.multi_reduction <add>, %3, %cst [1, 2] : vector<1x64x16xf32> to vector<1xf32>
    %5 = vector.shape_cast %4 : vector<1xf32> to vector<1x1x1xf32>
    %6 = vector.extract %5[0, 0, 0] : f32 from vector<1x1x1xf32>
    %cst_3 = arith.constant 1.024000e+03 : f32
    %7 = arith.divf %6, %cst_3 : f32
    %8 = arith.mulf %2, %2 : vector<64x16xf32>
    %9 = vector.shape_cast %8 : vector<64x16xf32> to vector<1x64x16xf32>
    %cst_4 = arith.constant dense<0.000000e+00> : vector<1xf32>
    %10 = vector.multi_reduction <add>, %9, %cst_4 [1, 2] : vector<1x64x16xf32> to vector<1xf32>
    %11 = vector.shape_cast %10 : vector<1xf32> to vector<1x1x1xf32>
    %12 = vector.extract %11[0, 0, 0] : f32 from vector<1x1x1xf32>
    %cst_5 = arith.constant 1.024000e+03 : f32
    %13 = arith.divf %12, %cst_5 : f32
    %14 = arith.mulf %7, %7 : f32
    %15 = arith.subf %13, %14 : f32
    %c0_6 = arith.constant 0 : index
    %c0_7 = arith.constant 0 : index
    %16 = vector.load %arg3[%c0_6, %c0_7] : memref<1x16xf32, #tpu.memory_space<vmem>>, vector<1x16xf32>
    %cst_8 = arith.constant 9.99999974E-6 : f32
    %17 = arith.addf %15, %cst_8 : f32
    %18 = math.rsqrt %17 : f32
    %19 = vector.broadcast %18 : f32 to vector<1x16xf32>
    %20 = arith.mulf %16, %19 : vector<1x16xf32>
    %c0_9 = arith.constant 0 : index
    %c0_10 = arith.constant 0 : index
    %21 = vector.load %arg4[%c0_9, %c0_10] : memref<1x16xf32, #tpu.memory_space<vmem>>, vector<1x16xf32>
    %22 = vector.broadcast %7 : f32 to vector<1x16xf32>
    %23 = arith.mulf %22, %20 : vector<1x16xf32>
    %24 = arith.subf %21, %23 : vector<1x16xf32>
    %25 = vector.broadcast %20 : vector<1x16xf32> to vector<64x16xf32>
    %26 = arith.mulf %2, %25 : vector<64x16xf32>
    %27 = vector.broadcast %24 : vector<1x16xf32> to vector<64x16xf32>
    %28 = arith.addf %26, %27 : vector<64x16xf32>
    %29 = arith.negf %28 : vector<64x16xf32>
    %30 = math.exp %29 : vector<64x16xf32>
    %cst_11 = arith.constant 1.000000e+00 : f32
    %31 = vector.broadcast %cst_11 : f32 to vector<64x16xf32>
    %32 = arith.addf %31, %30 : vector<64x16xf32>
    %33 = arith.divf %31, %32 : vector<64x16xf32>
    %34 = arith.mulf %28, %33 : vector<64x16xf32>
    %cst_12 = arith.constant 0.000000e+00 : f32
    %35 = vector.broadcast %cst_12 : f32 to vector<10x17x16xf32>
    %c0_13 = arith.constant 0 : index
    %c0_14 = arith.constant 0 : index
    %c0_15 = arith.constant 0 : index
    %36 = vector.load %arg16[%c0_13, %c0_14, %c0_15] : memref<10x17x16xf32, #tpu.memory_space<vmem>>, vector<10x17x16xf32>
    tpu.vector_store %arg16[%c0_13, %c0_14, %c0_15], %35 {strides = array<i32>} : memref<10x17x16xf32, #tpu.memory_space<vmem>>, vector<10x17x16xf32>,
    %37 = vector.shape_cast %34 : vector<64x16xf32> to vector<8x8x16xf32>
    %c1 = arith.constant 1 : index
    %c8 = arith.constant 8 : index
    %c0_16 = arith.constant 0 : index
    %38 = vector.load %arg16[%c1, %c8, %c0_16] : memref<10x17x16xf32, #tpu.memory_space<vmem>>, vector<8x8x16xf32>
    tpu.vector_store %arg16[%c1, %c8, %c0_16], %37 {strides = array<i32>} : memref<10x17x16xf32, #tpu.memory_space<vmem>>, vector<8x8x16xf32>,
    %cst_17 = arith.constant 0.000000e+00 : f32
    %39 = vector.broadcast %cst_17 : f32 to vector<64x32xf32>
    %c0_18 = arith.constant 0 : index
    %c7 = arith.constant 7 : index
    %c0_19 = arith.constant 0 : index
    %40 = vector.load %arg16[%c0_18, %c7, %c0_19] : memref<10x17x16xf32, #tpu.memory_space<vmem>>, vector<8x8x16xf32>
    %41 = vector.shape_cast %40 : vector<8x8x16xf32> to vector<64x16xf32>
    %c0_20 = arith.constant 0 : index
    %c0_21 = arith.constant 0 : index
    %c0_22 = arith.constant 0 : index
    %42 = vector.load %arg5[%c0_20, %c0_21, %c0_22] : memref<9x16x32xf32, #tpu.memory_space<vmem>>, vector<1x16x32xf32>
    %43 = vector.shape_cast %42 : vector<1x16x32xf32> to vector<16x32xf32>
    %cst_23 = arith.constant dense<0.000000e+00> : vector<64x32xf32>
    %44 = tpu.matmul %41, %43, %cst_23 {dimension_numbers = #tpu.dot_dimension_numbers<[1], [0], [0], [1], [0, 0, 1, 1], [], []>} : vector<64x16xf32>, vector<16x32xf32>, vector<64x32xf32> -> vector<64x32xf32>
    %45 = arith.addf %39, %44 : vector<64x32xf32>
    %c0_24 = arith.constant 0 : index
    %c8_25 = arith.constant 8 : index
    %c0_26 = arith.constant 0 : index
    %46 = vector.load %arg16[%c0_24, %c8_25, %c0_26] : memref<10x17x16xf32, #tpu.memory_space<vmem>>, vector<8x8x16xf32>
    %47 = vector.shape_cast %46 : vector<8x8x16xf32> to vector<64x16xf32>
    %c1_27 = arith.constant 1 : index
    %c0_28 = arith.constant 0 : index
    %c0_29 = arith.constant 0 : index
    %48 = vector.load %arg5[%c1_27, %c0_28, %c0_29] : memref<9x16x32xf32, #tpu.memory_space<vmem>>, vector<1x16x32xf32>
    %49 = vector.shape_cast %48 : vector<1x16x32xf32> to vector<16x32xf32>
    %cst_30 = arith.constant dense<0.000000e+00> : vector<64x32xf32>
    %50 = tpu.matmul %47, %49, %cst_30 {dimension_numbers = #tpu.dot_dimension_numbers<[1], [0], [0], [1], [0, 0, 1, 1], [], []>} : vector<64x16xf32>, vector<16x32xf32>, vector<64x32xf32> -> vector<64x32xf32>
    %51 = arith.addf %45, %50 : vector<64x32xf32>
    %c0_31 = arith.constant 0 : index
    %c9 = arith.constant 9 : index
    %c0_32 = arith.constant 0 : index
    %52 = vector.load %arg16[%c0_31, %c9, %c0_32] : memref<10x17x16xf32, #tpu.memory_space<vmem>>, vector<8x8x16xf32>
    %53 = vector.shape_cast %52 : vector<8x8x16xf32> to vector<64x16xf32>
    %c2 = arith.constant 2 : index
    %c0_33 = arith.constant 0 : index
    %c0_34 = arith.constant 0 : index
    %54 = vector.load %arg5[%c2, %c0_33, %c0_34] : memref<9x16x32xf32, #tpu.memory_space<vmem>>, vector<1x16x32xf32>
    %55 = vector.shape_cast %54 : vector<1x16x32xf32> to vector<16x32xf32>
    %cst_35 = arith.constant dense<0.000000e+00> : vector<64x32xf32>
    %56 = tpu.matmul %53, %55, %cst_35 {dimension_numbers = #tpu.dot_dimension_numbers<[1], [0], [0], [1], [0, 0, 1, 1], [], []>} : vector<64x16xf32>, vector<16x32xf32>, vector<64x32xf32> -> vector<64x32xf32>
    %57 = arith.addf %51, %56 : vector<64x32xf32>
    %c1_36 = arith.constant 1 : index
    %c7_37 = arith.constant 7 : index
    %c0_38 = arith.constant 0 : index
    %58 = vector.load %arg16[%c1_36, %c7_37, %c0_38] : memref<10x17x16xf32, #tpu.memory_space<vmem>>, vector<8x8x16xf32>
    %59 = vector.shape_cast %58 : vector<8x8x16xf32> to vector<64x16xf32>
    %c3 = arith.constant 3 : index
    %c0_39 = arith.constant 0 : index
    %c0_40 = arith.constant 0 : index
    %60 = vector.load %arg5[%c3, %c0_39, %c0_40] : memref<9x16x32xf32, #tpu.memory_space<vmem>>, vector<1x16x32xf32>
    %61 = vector.shape_cast %60 : vector<1x16x32xf32> to vector<16x32xf32>
    %cst_41 = arith.constant dense<0.000000e+00> : vector<64x32xf32>
    %62 = tpu.matmul %59, %61, %cst_41 {dimension_numbers = #tpu.dot_dimension_numbers<[1], [0], [0], [1], [0, 0, 1, 1], [], []>} : vector<64x16xf32>, vector<16x32xf32>, vector<64x32xf32> -> vector<64x32xf32>
    %63 = arith.addf %57, %62 : vector<64x32xf32>
    %c1_42 = arith.constant 1 : index
    %c8_43 = arith.constant 8 : index
    %c0_44 = arith.constant 0 : index
    %64 = vector.load %arg16[%c1_42, %c8_43, %c0_44] : memref<10x17x16xf32, #tpu.memory_space<vmem>>, vector<8x8x16xf32>
    %65 = vector.shape_cast %64 : vector<8x8x16xf32> to vector<64x16xf32>
    %c4 = arith.constant 4 : index
    %c0_45 = arith.constant 0 : index
    %c0_46 = arith.constant 0 : index
    %66 = vector.load %arg5[%c4, %c0_45, %c0_46] : memref<9x16x32xf32, #tpu.memory_space<vmem>>, vector<1x16x32xf32>
    %67 = vector.shape_cast %66 : vector<1x16x32xf32> to vector<16x32xf32>
    %cst_47 = arith.constant dense<0.000000e+00> : vector<64x32xf32>
    %68 = tpu.matmul %65, %67, %cst_47 {dimension_numbers = #tpu.dot_dimension_numbers<[1], [0], [0], [1], [0, 0, 1, 1], [], []>} : vector<64x16xf32>, vector<16x32xf32>, vector<64x32xf32> -> vector<64x32xf32>
    %69 = arith.addf %63, %68 : vector<64x32xf32>
    %c1_48 = arith.constant 1 : index
    %c9_49 = arith.constant 9 : index
    %c0_50 = arith.constant 0 : index
    %70 = vector.load %arg16[%c1_48, %c9_49, %c0_50] : memref<10x17x16xf32, #tpu.memory_space<vmem>>, vector<8x8x16xf32>
    %71 = vector.shape_cast %70 : vector<8x8x16xf32> to vector<64x16xf32>
    %c5 = arith.constant 5 : index
    %c0_51 = arith.constant 0 : index
    %c0_52 = arith.constant 0 : index
    %72 = vector.load %arg5[%c5, %c0_51, %c0_52] : memref<9x16x32xf32, #tpu.memory_space<vmem>>, vector<1x16x32xf32>
    %73 = vector.shape_cast %72 : vector<1x16x32xf32> to vector<16x32xf32>
    %cst_53 = arith.constant dense<0.000000e+00> : vector<64x32xf32>
    %74 = tpu.matmul %71, %73, %cst_53 {dimension_numbers = #tpu.dot_dimension_numbers<[1], [0], [0], [1], [0, 0, 1, 1], [], []>} : vector<64x16xf32>, vector<16x32xf32>, vector<64x32xf32> -> vector<64x32xf32>
    %75 = arith.addf %69, %74 : vector<64x32xf32>
    %c2_54 = arith.constant 2 : index
    %c7_55 = arith.constant 7 : index
    %c0_56 = arith.constant 0 : index
    %76 = vector.load %arg16[%c2_54, %c7_55, %c0_56] : memref<10x17x16xf32, #tpu.memory_space<vmem>>, vector<8x8x16xf32>
    %77 = vector.shape_cast %76 : vector<8x8x16xf32> to vector<64x16xf32>
    %c6 = arith.constant 6 : index
    %c0_57 = arith.constant 0 : index
    %c0_58 = arith.constant 0 : index
    %78 = vector.load %arg5[%c6, %c0_57, %c0_58] : memref<9x16x32xf32, #tpu.memory_space<vmem>>, vector<1x16x32xf32>
    %79 = vector.shape_cast %78 : vector<1x16x32xf32> to vector<16x32xf32>
    %cst_59 = arith.constant dense<0.000000e+00> : vector<64x32xf32>
    %80 = tpu.matmul %77, %79, %cst_59 {dimension_numbers = #tpu.dot_dimension_numbers<[1], [0], [0], [1], [0, 0, 1, 1], [], []>} : vector<64x16xf32>, vector<16x32xf32>, vector<64x32xf32> -> vector<64x32xf32>
    %81 = arith.addf %75, %80 : vector<64x32xf32>
    %c2_60 = arith.constant 2 : index
    %c8_61 = arith.constant 8 : index
    %c0_62 = arith.constant 0 : index
    %82 = vector.load %arg16[%c2_60, %c8_61, %c0_62] : memref<10x17x16xf32, #tpu.memory_space<vmem>>, vector<8x8x16xf32>
    %83 = vector.shape_cast %82 : vector<8x8x16xf32> to vector<64x16xf32>
    %c7_63 = arith.constant 7 : index
    %c0_64 = arith.constant 0 : index
    %c0_65 = arith.constant 0 : index
    %84 = vector.load %arg5[%c7_63, %c0_64, %c0_65] : memref<9x16x32xf32, #tpu.memory_space<vmem>>, vector<1x16x32xf32>
    %85 = vector.shape_cast %84 : vector<1x16x32xf32> to vector<16x32xf32>
    %cst_66 = arith.constant dense<0.000000e+00> : vector<64x32xf32>
    %86 = tpu.matmul %83, %85, %cst_66 {dimension_numbers = #tpu.dot_dimension_numbers<[1], [0], [0], [1], [0, 0, 1, 1], [], []>} : vector<64x16xf32>, vector<16x32xf32>, vector<64x32xf32> -> vector<64x32xf32>
    %87 = arith.addf %81, %86 : vector<64x32xf32>
    %c2_67 = arith.constant 2 : index
    %c9_68 = arith.constant 9 : index
    %c0_69 = arith.constant 0 : index
    %88 = vector.load %arg16[%c2_67, %c9_68, %c0_69] : memref<10x17x16xf32, #tpu.memory_space<vmem>>, vector<8x8x16xf32>
    %89 = vector.shape_cast %88 : vector<8x8x16xf32> to vector<64x16xf32>
    %c8_70 = arith.constant 8 : index
    %c0_71 = arith.constant 0 : index
    %c0_72 = arith.constant 0 : index
    %90 = vector.load %arg5[%c8_70, %c0_71, %c0_72] : memref<9x16x32xf32, #tpu.memory_space<vmem>>, vector<1x16x32xf32>
    %91 = vector.shape_cast %90 : vector<1x16x32xf32> to vector<16x32xf32>
    %cst_73 = arith.constant dense<0.000000e+00> : vector<64x32xf32>
    %92 = tpu.matmul %89, %91, %cst_73 {dimension_numbers = #tpu.dot_dimension_numbers<[1], [0], [0], [1], [0, 0, 1, 1], [], []>} : vector<64x16xf32>, vector<16x32xf32>, vector<64x32xf32> -> vector<64x32xf32>
    %93 = arith.addf %87, %92 : vector<64x32xf32>
    %c0_74 = arith.constant 0 : index
    %c0_75 = arith.constant 0 : index
    %c0_76 = arith.constant 0 : index
    %94 = vector.load %arg2[%c0_74, %c0_75, %c0_76] : memref<1x1x32xf32, #tpu.memory_space<vmem>>, vector<1x1x32xf32>
    %95 = vector.shape_cast %94 : vector<1x1x32xf32> to vector<1x32xf32>
    %96 = arith.negf %95 : vector<1x32xf32>
    %97 = math.exp %96 : vector<1x32xf32>
    %cst_77 = arith.constant 1.000000e+00 : f32
    %98 = vector.broadcast %cst_77 : f32 to vector<1x32xf32>
    %99 = arith.addf %98, %97 : vector<1x32xf32>
    %100 = arith.divf %98, %99 : vector<1x32xf32>
    %101 = arith.mulf %95, %100 : vector<1x32xf32>
    %c0_78 = arith.constant 0 : index
    %c0_79 = arith.constant 0 : index
    %102 = vector.load %arg7[%c0_78, %c0_79] : memref<32x32xf32, #tpu.memory_space<vmem>>, vector<32x32xf32>
    %cst_80 = arith.constant dense<0.000000e+00> : vector<1x32xf32>
    %103 = tpu.matmul %101, %102, %cst_80 {dimension_numbers = #tpu.dot_dimension_numbers<[1], [0], [0], [1], [0, 0, 1, 1], [], []>} : vector<1x32xf32>, vector<32x32xf32>, vector<1x32xf32> -> vector<1x32xf32>
    %c0_81 = arith.constant 0 : index
    %c0_82 = arith.constant 0 : index
    %104 = vector.load %arg6[%c0_81, %c0_82] : memref<1x32xf32, #tpu.memory_space<vmem>>, vector<1x32xf32>
    %c0_83 = arith.constant 0 : index
    %c0_84 = arith.constant 0 : index
    %105 = vector.load %arg8[%c0_83, %c0_84] : memref<1x32xf32, #tpu.memory_space<vmem>>, vector<1x32xf32>
    %106 = arith.addf %104, %105 : vector<1x32xf32>
    %107 = arith.addf %106, %103 : vector<1x32xf32>
    %108 = vector.broadcast %107 : vector<1x32xf32> to vector<64x32xf32>
    %109 = arith.addf %93, %108 : vector<64x32xf32>
    %110 = vector.shape_cast %109 : vector<64x32xf32> to vector<1x64x32xf32>
    %cst_85 = arith.constant dense<0.000000e+00> : vector<1xf32>
    %111 = vector.multi_reduction <add>, %110, %cst_85 [1, 2] : vector<1x64x32xf32> to vector<1xf32>
    %112 = vector.shape_cast %111 : vector<1xf32> to vector<1x1x1xf32>
    %113 = vector.extract %112[0, 0, 0] : f32 from vector<1x1x1xf32>
    %cst_86 = arith.constant 2.048000e+03 : f32
    %114 = arith.divf %113, %cst_86 : f32
    %115 = arith.mulf %109, %109 : vector<64x32xf32>
    %116 = vector.shape_cast %115 : vector<64x32xf32> to vector<1x64x32xf32>
    %cst_87 = arith.constant dense<0.000000e+00> : vector<1xf32>
    %117 = vector.multi_reduction <add>, %116, %cst_87 [1, 2] : vector<1x64x32xf32> to vector<1xf32>
    %118 = vector.shape_cast %117 : vector<1xf32> to vector<1x1x1xf32>
    %119 = vector.extract %118[0, 0, 0] : f32 from vector<1x1x1xf32>
    %cst_88 = arith.constant 2.048000e+03 : f32
    %120 = arith.divf %119, %cst_88 : f32
    %121 = arith.mulf %114, %114 : f32
    %122 = arith.subf %120, %121 : f32
    %c0_89 = arith.constant 0 : index
    %c0_90 = arith.constant 0 : index
    %123 = vector.load %arg9[%c0_89, %c0_90] : memref<1x32xf32, #tpu.memory_space<vmem>>, vector<1x32xf32>
    %cst_91 = arith.constant 9.99999974E-6 : f32
    %124 = arith.addf %122, %cst_91 : f32
    %125 = math.rsqrt %124 : f32
    %126 = vector.broadcast %125 : f32 to vector<1x32xf32>
    %127 = arith.mulf %123, %126 : vector<1x32xf32>
    %c0_92 = arith.constant 0 : index
    %c0_93 = arith.constant 0 : index
    %128 = vector.load %arg10[%c0_92, %c0_93] : memref<1x32xf32, #tpu.memory_space<vmem>>, vector<1x32xf32>
    %129 = vector.broadcast %114 : f32 to vector<1x32xf32>
    %130 = arith.mulf %129, %127 : vector<1x32xf32>
    %131 = arith.subf %128, %130 : vector<1x32xf32>
    %132 = vector.broadcast %127 : vector<1x32xf32> to vector<64x32xf32>
    %133 = arith.mulf %109, %132 : vector<64x32xf32>
    %134 = vector.broadcast %131 : vector<1x32xf32> to vector<64x32xf32>
    %135 = arith.addf %133, %134 : vector<64x32xf32>
    %136 = arith.negf %135 : vector<64x32xf32>
    %137 = math.exp %136 : vector<64x32xf32>
    %cst_94 = arith.constant 1.000000e+00 : f32
    %138 = vector.broadcast %cst_94 : f32 to vector<64x32xf32>
    %139 = arith.addf %138, %137 : vector<64x32xf32>
    %140 = arith.divf %138, %139 : vector<64x32xf32>
    %141 = arith.mulf %135, %140 : vector<64x32xf32>
    %cst_95 = arith.constant 0.000000e+00 : f32
    %142 = vector.broadcast %cst_95 : f32 to vector<10x17x32xf32>
    %c0_96 = arith.constant 0 : index
    %c0_97 = arith.constant 0 : index
    %c0_98 = arith.constant 0 : index
    %143 = vector.load %arg17[%c0_96, %c0_97, %c0_98] : memref<10x17x32xf32, #tpu.memory_space<vmem>>, vector<10x17x32xf32>
    tpu.vector_store %arg17[%c0_96, %c0_97, %c0_98], %142 {strides = array<i32>} : memref<10x17x32xf32, #tpu.memory_space<vmem>>, vector<10x17x32xf32>,
    %144 = vector.shape_cast %141 : vector<64x32xf32> to vector<8x8x32xf32>
    %c1_99 = arith.constant 1 : index
    %c8_100 = arith.constant 8 : index
    %c0_101 = arith.constant 0 : index
    %145 = vector.load %arg17[%c1_99, %c8_100, %c0_101] : memref<10x17x32xf32, #tpu.memory_space<vmem>>, vector<8x8x32xf32>
    tpu.vector_store %arg17[%c1_99, %c8_100, %c0_101], %144 {strides = array<i32>} : memref<10x17x32xf32, #tpu.memory_space<vmem>>, vector<8x8x32xf32>,
    %cst_102 = arith.constant 0.000000e+00 : f32
    %146 = vector.broadcast %cst_102 : f32 to vector<64x32xf32>
    %c0_103 = arith.constant 0 : index
    %c7_104 = arith.constant 7 : index
    %c0_105 = arith.constant 0 : index
    %147 = vector.load %arg17[%c0_103, %c7_104, %c0_105] : memref<10x17x32xf32, #tpu.memory_space<vmem>>, vector<8x8x32xf32>
    %148 = vector.shape_cast %147 : vector<8x8x32xf32> to vector<64x32xf32>
    %c0_106 = arith.constant 0 : index
    %c0_107 = arith.constant 0 : index
    %c0_108 = arith.constant 0 : index
    %149 = vector.load %arg11[%c0_106, %c0_107, %c0_108] : memref<9x32x32xf32, #tpu.memory_space<vmem>>, vector<1x32x32xf32>
    %150 = vector.shape_cast %149 : vector<1x32x32xf32> to vector<32x32xf32>
    %cst_109 = arith.constant dense<0.000000e+00> : vector<64x32xf32>
    %151 = tpu.matmul %148, %150, %cst_109 {dimension_numbers = #tpu.dot_dimension_numbers<[1], [0], [0], [1], [0, 0, 1, 1], [], []>} : vector<64x32xf32>, vector<32x32xf32>, vector<64x32xf32> -> vector<64x32xf32>
    %152 = arith.addf %146, %151 : vector<64x32xf32>
    %c0_110 = arith.constant 0 : index
    %c8_111 = arith.constant 8 : index
    %c0_112 = arith.constant 0 : index
    %153 = vector.load %arg17[%c0_110, %c8_111, %c0_112] : memref<10x17x32xf32, #tpu.memory_space<vmem>>, vector<8x8x32xf32>
    %154 = vector.shape_cast %153 : vector<8x8x32xf32> to vector<64x32xf32>
    %c1_113 = arith.constant 1 : index
    %c0_114 = arith.constant 0 : index
    %c0_115 = arith.constant 0 : index
    %155 = vector.load %arg11[%c1_113, %c0_114, %c0_115] : memref<9x32x32xf32, #tpu.memory_space<vmem>>, vector<1x32x32xf32>
    %156 = vector.shape_cast %155 : vector<1x32x32xf32> to vector<32x32xf32>
    %cst_116 = arith.constant dense<0.000000e+00> : vector<64x32xf32>
    %157 = tpu.matmul %154, %156, %cst_116 {dimension_numbers = #tpu.dot_dimension_numbers<[1], [0], [0], [1], [0, 0, 1, 1], [], []>} : vector<64x32xf32>, vector<32x32xf32>, vector<64x32xf32> -> vector<64x32xf32>
    %158 = arith.addf %152, %157 : vector<64x32xf32>
    %c0_117 = arith.constant 0 : index
    %c9_118 = arith.constant 9 : index
    %c0_119 = arith.constant 0 : index
    %159 = vector.load %arg17[%c0_117, %c9_118, %c0_119] : memref<10x17x32xf32, #tpu.memory_space<vmem>>, vector<8x8x32xf32>
    %160 = vector.shape_cast %159 : vector<8x8x32xf32> to vector<64x32xf32>
    %c2_120 = arith.constant 2 : index
    %c0_121 = arith.constant 0 : index
    %c0_122 = arith.constant 0 : index
    %161 = vector.load %arg11[%c2_120, %c0_121, %c0_122] : memref<9x32x32xf32, #tpu.memory_space<vmem>>, vector<1x32x32xf32>
    %162 = vector.shape_cast %161 : vector<1x32x32xf32> to vector<32x32xf32>
    %cst_123 = arith.constant dense<0.000000e+00> : vector<64x32xf32>
    %163 = tpu.matmul %160, %162, %cst_123 {dimension_numbers = #tpu.dot_dimension_numbers<[1], [0], [0], [1], [0, 0, 1, 1], [], []>} : vector<64x32xf32>, vector<32x32xf32>, vector<64x32xf32> -> vector<64x32xf32>
    %164 = arith.addf %158, %163 : vector<64x32xf32>
    %c1_124 = arith.constant 1 : index
    %c7_125 = arith.constant 7 : index
    %c0_126 = arith.constant 0 : index
    %165 = vector.load %arg17[%c1_124, %c7_125, %c0_126] : memref<10x17x32xf32, #tpu.memory_space<vmem>>, vector<8x8x32xf32>
    %166 = vector.shape_cast %165 : vector<8x8x32xf32> to vector<64x32xf32>
    %c3_127 = arith.constant 3 : index
    %c0_128 = arith.constant 0 : index
    %c0_129 = arith.constant 0 : index
    %167 = vector.load %arg11[%c3_127, %c0_128, %c0_129] : memref<9x32x32xf32, #tpu.memory_space<vmem>>, vector<1x32x32xf32>
    %168 = vector.shape_cast %167 : vector<1x32x32xf32> to vector<32x32xf32>
    %cst_130 = arith.constant dense<0.000000e+00> : vector<64x32xf32>
    %169 = tpu.matmul %166, %168, %cst_130 {dimension_numbers = #tpu.dot_dimension_numbers<[1], [0], [0], [1], [0, 0, 1, 1], [], []>} : vector<64x32xf32>, vector<32x32xf32>, vector<64x32xf32> -> vector<64x32xf32>
    %170 = arith.addf %164, %169 : vector<64x32xf32>
    %c1_131 = arith.constant 1 : index
    %c8_132 = arith.constant 8 : index
    %c0_133 = arith.constant 0 : index
    %171 = vector.load %arg17[%c1_131, %c8_132, %c0_133] : memref<10x17x32xf32, #tpu.memory_space<vmem>>, vector<8x8x32xf32>
    %172 = vector.shape_cast %171 : vector<8x8x32xf32> to vector<64x32xf32>
    %c4_134 = arith.constant 4 : index
    %c0_135 = arith.constant 0 : index
    %c0_136 = arith.constant 0 : index
    %173 = vector.load %arg11[%c4_134, %c0_135, %c0_136] : memref<9x32x32xf32, #tpu.memory_space<vmem>>, vector<1x32x32xf32>
    %174 = vector.shape_cast %173 : vector<1x32x32xf32> to vector<32x32xf32>
    %cst_137 = arith.constant dense<0.000000e+00> : vector<64x32xf32>
    %175 = tpu.matmul %172, %174, %cst_137 {dimension_numbers = #tpu.dot_dimension_numbers<[1], [0], [0], [1], [0, 0, 1, 1], [], []>} : vector<64x32xf32>, vector<32x32xf32>, vector<64x32xf32> -> vector<64x32xf32>
    %176 = arith.addf %170, %175 : vector<64x32xf32>
    %c1_138 = arith.constant 1 : index
    %c9_139 = arith.constant 9 : index
    %c0_140 = arith.constant 0 : index
    %177 = vector.load %arg17[%c1_138, %c9_139, %c0_140] : memref<10x17x32xf32, #tpu.memory_space<vmem>>, vector<8x8x32xf32>
    %178 = vector.shape_cast %177 : vector<8x8x32xf32> to vector<64x32xf32>
    %c5_141 = arith.constant 5 : index
    %c0_142 = arith.constant 0 : index
    %c0_143 = arith.constant 0 : index
    %179 = vector.load %arg11[%c5_141, %c0_142, %c0_143] : memref<9x32x32xf32, #tpu.memory_space<vmem>>, vector<1x32x32xf32>
    %180 = vector.shape_cast %179 : vector<1x32x32xf32> to vector<32x32xf32>
    %cst_144 = arith.constant dense<0.000000e+00> : vector<64x32xf32>
    %181 = tpu.matmul %178, %180, %cst_144 {dimension_numbers = #tpu.dot_dimension_numbers<[1], [0], [0], [1], [0, 0, 1, 1], [], []>} : vector<64x32xf32>, vector<32x32xf32>, vector<64x32xf32> -> vector<64x32xf32>
    %182 = arith.addf %176, %181 : vector<64x32xf32>
    %c2_145 = arith.constant 2 : index
    %c7_146 = arith.constant 7 : index
    %c0_147 = arith.constant 0 : index
    %183 = vector.load %arg17[%c2_145, %c7_146, %c0_147] : memref<10x17x32xf32, #tpu.memory_space<vmem>>, vector<8x8x32xf32>
    %184 = vector.shape_cast %183 : vector<8x8x32xf32> to vector<64x32xf32>
    %c6_148 = arith.constant 6 : index
    %c0_149 = arith.constant 0 : index
    %c0_150 = arith.constant 0 : index
    %185 = vector.load %arg11[%c6_148, %c0_149, %c0_150] : memref<9x32x32xf32, #tpu.memory_space<vmem>>, vector<1x32x32xf32>
    %186 = vector.shape_cast %185 : vector<1x32x32xf32> to vector<32x32xf32>
    %cst_151 = arith.constant dense<0.000000e+00> : vector<64x32xf32>
    %187 = tpu.matmul %184, %186, %cst_151 {dimension_numbers = #tpu.dot_dimension_numbers<[1], [0], [0], [1], [0, 0, 1, 1], [], []>} : vector<64x32xf32>, vector<32x32xf32>, vector<64x32xf32> -> vector<64x32xf32>
    %188 = arith.addf %182, %187 : vector<64x32xf32>
    %c2_152 = arith.constant 2 : index
    %c8_153 = arith.constant 8 : index
    %c0_154 = arith.constant 0 : index
    %189 = vector.load %arg17[%c2_152, %c8_153, %c0_154] : memref<10x17x32xf32, #tpu.memory_space<vmem>>, vector<8x8x32xf32>
    %190 = vector.shape_cast %189 : vector<8x8x32xf32> to vector<64x32xf32>
    %c7_155 = arith.constant 7 : index
    %c0_156 = arith.constant 0 : index
    %c0_157 = arith.constant 0 : index
    %191 = vector.load %arg11[%c7_155, %c0_156, %c0_157] : memref<9x32x32xf32, #tpu.memory_space<vmem>>, vector<1x32x32xf32>
    %192 = vector.shape_cast %191 : vector<1x32x32xf32> to vector<32x32xf32>
    %cst_158 = arith.constant dense<0.000000e+00> : vector<64x32xf32>
    %193 = tpu.matmul %190, %192, %cst_158 {dimension_numbers = #tpu.dot_dimension_numbers<[1], [0], [0], [1], [0, 0, 1, 1], [], []>} : vector<64x32xf32>, vector<32x32xf32>, vector<64x32xf32> -> vector<64x32xf32>
    %194 = arith.addf %188, %193 : vector<64x32xf32>
    %c2_159 = arith.constant 2 : index
    %c9_160 = arith.constant 9 : index
    %c0_161 = arith.constant 0 : index
    %195 = vector.load %arg17[%c2_159, %c9_160, %c0_161] : memref<10x17x32xf32, #tpu.memory_space<vmem>>, vector<8x8x32xf32>
    %196 = vector.shape_cast %195 : vector<8x8x32xf32> to vector<64x32xf32>
    %c8_162 = arith.constant 8 : index
    %c0_163 = arith.constant 0 : index
    %c0_164 = arith.constant 0 : index
    %197 = vector.load %arg11[%c8_162, %c0_163, %c0_164] : memref<9x32x32xf32, #tpu.memory_space<vmem>>, vector<1x32x32xf32>
    %198 = vector.shape_cast %197 : vector<1x32x32xf32> to vector<32x32xf32>
    %cst_165 = arith.constant dense<0.000000e+00> : vector<64x32xf32>
    %199 = tpu.matmul %196, %198, %cst_165 {dimension_numbers = #tpu.dot_dimension_numbers<[1], [0], [0], [1], [0, 0, 1, 1], [], []>} : vector<64x32xf32>, vector<32x32xf32>, vector<64x32xf32> -> vector<64x32xf32>
    %200 = arith.addf %194, %199 : vector<64x32xf32>
    %c0_166 = arith.constant 0 : index
    %c0_167 = arith.constant 0 : index
    %201 = vector.load %arg13[%c0_166, %c0_167] : memref<16x32xf32, #tpu.memory_space<vmem>>, vector<16x32xf32>
    %cst_168 = arith.constant dense<0.000000e+00> : vector<64x32xf32>
    %202 = tpu.matmul %2, %201, %cst_168 {dimension_numbers = #tpu.dot_dimension_numbers<[1], [0], [0], [1], [0, 0, 1, 1], [], []>} : vector<64x16xf32>, vector<16x32xf32>, vector<64x32xf32> -> vector<64x32xf32>
    %c0_169 = arith.constant 0 : index
    %c0_170 = arith.constant 0 : index
    %203 = vector.load %arg14[%c0_169, %c0_170] : memref<1x32xf32, #tpu.memory_space<vmem>>, vector<1x32xf32>
    %204 = vector.broadcast %203 : vector<1x32xf32> to vector<64x32xf32>
    %205 = arith.addf %202, %204 : vector<64x32xf32>
    %c0_171 = arith.constant 0 : index
    %c0_172 = arith.constant 0 : index
    %206 = vector.load %arg12[%c0_171, %c0_172] : memref<1x32xf32, #tpu.memory_space<vmem>>, vector<1x32xf32>
    %207 = vector.broadcast %206 : vector<1x32xf32> to vector<64x32xf32>
    %208 = arith.addf %200, %207 : vector<64x32xf32>
    %209 = arith.addf %208, %205 : vector<64x32xf32>
    %210 = vector.shape_cast %209 : vector<64x32xf32> to vector<8x8x32xf32>
    %c0_173 = arith.constant 0 : index
    %c0_174 = arith.constant 0 : index
    %c0_175 = arith.constant 0 : index
    %c0_176 = arith.constant 0 : index
    %211 = vector.load %arg15[%c0_173, %c0_174, %c0_175, %c0_176] : memref<1x8x8x32xf32, #tpu.memory_space<vmem>>, vector<1x8x8x32xf32>
    %212 = vector.shape_cast %211 : vector<1x8x8x32xf32> to vector<8x8x32xf32>
    %213 = vector.shape_cast %210 : vector<8x8x32xf32> to vector<1x8x8x32xf32>
    tpu.vector_store %arg15[%c0_173, %c0_174, %c0_175, %c0_176], %213 {strides = array<i32>} : memref<1x8x8x32xf32, #tpu.memory_space<vmem>>, vector<1x8x8x32xf32>,
    return
  }
  func.func @transform_0(%arg0: i32) -> (i32, i32, i32, i32) {
    %c0_i32 = arith.constant 0 : i32
    %c0_i32_0 = arith.constant 0 : i32
    %c0_i32_1 = arith.constant 0 : i32
    %c0_i32_2 = arith.constant 0 : i32
    return %arg0, %c0_i32, %c0_i32_0, %c0_i32_1 : i32, i32, i32, i32
  }
  func.func @transform_1(%arg0: i32) -> (i32, i32, i32) {
    %c0_i32 = arith.constant 0 : i32
    %c0_i32_0 = arith.constant 0 : i32
    %c0_i32_1 = arith.constant 0 : i32
    return %arg0, %c0_i32, %c0_i32_0 : i32, i32, i32
  }
  func.func @transform_2(%arg0: i32) -> (i32, i32) {
    %c0_i32 = arith.constant 0 : i32
    %c0_i32_0 = arith.constant 0 : i32
    %c0_i32_1 = arith.constant 0 : i32
    return %c0_i32, %c0_i32_0 : i32, i32
  }
  func.func @transform_3(%arg0: i32) -> (i32, i32) {
    %c0_i32 = arith.constant 0 : i32
    %c0_i32_0 = arith.constant 0 : i32
    %c0_i32_1 = arith.constant 0 : i32
    return %c0_i32, %c0_i32_0 : i32, i32
  }
  func.func @transform_4(%arg0: i32) -> (i32, i32, i32) {
    %c0_i32 = arith.constant 0 : i32
    %c0_i32_0 = arith.constant 0 : i32
    %c0_i32_1 = arith.constant 0 : i32
    %c0_i32_2 = arith.constant 0 : i32
    return %c0_i32, %c0_i32_0, %c0_i32_1 : i32, i32, i32
  }
  func.func @transform_5(%arg0: i32) -> (i32, i32) {
    %c0_i32 = arith.constant 0 : i32
    %c0_i32_0 = arith.constant 0 : i32
    %c0_i32_1 = arith.constant 0 : i32
    return %c0_i32, %c0_i32_0 : i32, i32
  }
  func.func @transform_6(%arg0: i32) -> (i32, i32) {
    %c0_i32 = arith.constant 0 : i32
    %c0_i32_0 = arith.constant 0 : i32
    %c0_i32_1 = arith.constant 0 : i32
    return %c0_i32, %c0_i32_0 : i32, i32
  }
  func.func @transform_7(%arg0: i32) -> (i32, i32) {
    %c0_i32 = arith.constant 0 : i32
    %c0_i32_0 = arith.constant 0 : i32
    %c0_i32_1 = arith.constant 0 : i32
    return %c0_i32, %c0_i32_0 : i32, i32
  }
  func.func @transform_8(%arg0: i32) -> (i32, i32) {
    %c0_i32 = arith.constant 0 : i32
    %c0_i32_0 = arith.constant 0 : i32
    %c0_i32_1 = arith.constant 0 : i32
    return %c0_i32, %c0_i32_0 : i32, i32
  }
  func.func @transform_9(%arg0: i32) -> (i32, i32) {
    %c0_i32 = arith.constant 0 : i32
    %c0_i32_0 = arith.constant 0 : i32
    %c0_i32_1 = arith.constant 0 : i32
    return %c0_i32, %c0_i32_0 : i32, i32
  }
  func.func @transform_10(%arg0: i32) -> (i32, i32, i32) {
    %c0_i32 = arith.constant 0 : i32
    %c0_i32_0 = arith.constant 0 : i32
    %c0_i32_1 = arith.constant 0 : i32
    %c0_i32_2 = arith.constant 0 : i32
    return %c0_i32, %c0_i32_0, %c0_i32_1 : i32, i32, i32
  }
  func.func @transform_11(%arg0: i32) -> (i32, i32) {
    %c0_i32 = arith.constant 0 : i32
    %c0_i32_0 = arith.constant 0 : i32
    %c0_i32_1 = arith.constant 0 : i32
    return %c0_i32, %c0_i32_0 : i32, i32
  }
  func.func @transform_12(%arg0: i32) -> (i32, i32) {
    %c0_i32 = arith.constant 0 : i32
    %c0_i32_0 = arith.constant 0 : i32
    %c0_i32_1 = arith.constant 0 : i32
    return %c0_i32, %c0_i32_0 : i32, i32
  }
  func.func @transform_13(%arg0: i32) -> (i32, i32) {
    %c0_i32 = arith.constant 0 : i32
    %c0_i32_0 = arith.constant 0 : i32
    %c0_i32_1 = arith.constant 0 : i32
    return %c0_i32, %c0_i32_0 : i32, i32
  }
  func.func @transform_14(%arg0: i32) -> (i32, i32, i32, i32) {
    %c0_i32 = arith.constant 0 : i32
    %c0_i32_0 = arith.constant 0 : i32
    %c0_i32_1 = arith.constant 0 : i32
    %c0_i32_2 = arith.constant 0 : i32
    return %arg0, %c0_i32, %c0_i32_0, %c0_i32_1 : i32, i32, i32, i32
  }
}

</mosaic_0001>

<llo_original>
// kernel: resblockg_forward.1
$region0: #{resblockg_forward.1}
  #allocation0 [shape = 'u32[]', space=smem, size = 0x4, offset = 0x4, fixed_abs, tag = 'smem constant byte address 0x4 - core index']
  #allocation1 [shape = 'u32[144,128]{1,0:T(1,128)}', space=vmem, size = 0x12000, scoped, tag = 'internal scratch']
  #allocation2 [shape = 'f32[10,17,16]{2,1,0:T(8,128)}', space=vmem, size = 0x1e000, scoped, tag = 'scratch operand']
  #allocation3 [shape = 'f32[10,17,32]{2,1,0:T(8,128)}', space=vmem, size = 0x1e000, scoped, tag = 'scratch operand']
  %s0 = inlined_call_operand.hbm [shape: f32[2,8,8,16], index: 0, kind: input, shape index: {}]
  %s1 = inlined_call_operand.vmem [shape: f32[2,1,32], index: 1, kind: input, shape index: {}]
  %s2 = inlined_call_operand.vmem [shape: f32[1,16], index: 2, kind: input, shape index: {}]
  %s3 = inlined_call_operand.vmem [shape: f32[1,16], index: 3, kind: input, shape index: {}]
  %s4 = inlined_call_operand.hbm [shape: f32[9,16,32], index: 4, kind: input, shape index: {}]
  %s5 = inlined_call_operand.vmem [shape: f32[1,32], index: 5, kind: input, shape index: {}]
  %s6 = inlined_call_operand.vmem [shape: f32[32,32], index: 6, kind: input, shape index: {}]
  %s7 = inlined_call_operand.vmem [shape: f32[1,32], index: 7, kind: input, shape index: {}]
  %s8 = inlined_call_operand.vmem [shape: f32[1,32], index: 8, kind: input, shape index: {}]
  %s9 = inlined_call_operand.vmem [shape: f32[1,32], index: 9, kind: input, shape index: {}]
  %s10 = inlined_call_operand.hbm [shape: f32[9,32,32], index: 10, kind: input, shape index: {}]
  %s11 = inlined_call_operand.vmem [shape: f32[1,32], index: 11, kind: input, shape index: {}]
  %s12 = inlined_call_operand.vmem [shape: f32[16,32], index: 12, kind: input, shape index: {}]
  %s13 = inlined_call_operand.vmem [shape: f32[1,32], index: 13, kind: input, shape index: {}]
  %s14 = inlined_call_operand.hbm [shape: f32[2,8,8,32], index: 14, kind: output, shape index: {}]
  %s15 = sld [smem:[#allocation0]]
  $region101: #{resblockg_forward.1} parent=0
    _
  %s17 = ssub.s32 1, %s15
  %s18 = scalar_select 0, %s17, %s15
  $region1: #{resblockg_forward.1} parent=0
    #allocation4 [shape = 'u8[65536]{0}', space=vmem, size = 0x10000, scoped, tag = 'input window, operand 0']
    #allocation5 [shape = 's32[2]{0}', space=sflag, size = 0x8, scoped, tag = 'scoped memory for resblockg_forward.1']
    #allocation6 [shape = 's32[2]{0}', space=sflag, size = 0x8, scoped, tag = 'scoped memory for resblockg_forward.1']
    #allocation7 [shape = 'u8[73728]{0}', space=vmem, size = 0x12000, scoped, tag = 'input window, operand 4, single buffered']
    #allocation8 [shape = 's32[1]{0}', space=sflag, size = 0x4, scoped, tag = 'scoped memory for resblockg_forward.1']
    #allocation9 [shape = 'u8[147456]{0}', space=vmem, size = 0x24000, scoped, tag = 'input window, operand 10, single buffered']
    #allocation10 [shape = 'u8[65536]{0}', space=vmem, size = 0x10000, scoped, tag = 'output window, operand 0']
    %19 = vsyncpa [#allocation5], 0
    %s20 = scalar_lea.sflag [#allocation5], 1
    %21 = vsyncpa %s20, 0
    %22 = vsyncpa [#allocation8], 0
    %23 = vsyncpa [#allocation6], 0
    %s24 = scalar_lea.sflag [#allocation6], 1
    %25 = vsyncpa %s24, 0
    loop: start=0, step=1, limit=4
    $region2: #{resblockg_forward.1} parent=1 // loop_pre_header
      _
    $region3: #{resblockg_forward.1} parent=1 // loop_header
      %s27 = sphi 0, %s31
      %p28 = scmp.ge.s32.totalorder %s27, 4
      %s37 = sphi 0, %s39
      %s40 = sphi 0, %s37
      %s41 = sphi 0, %s40
      %s57 = sphi 0, %s41
      %s63 = sphi 0, %s65
      %s66 = sphi 0, %s63
      %s67 = sphi 0, %s66
      %s83 = sphi 0, %s67
      %s87 = sphi 0, %s87
      %s89 = sphi 0, %s87
      %s90 = sphi 0, %s89
      %s104 = sphi 0, %s90
      %s108 = sphi 0, %s108
      %s110 = sphi 0, %s108
      %s111 = sphi 0, %s110
      %s125 = sphi 0, %s111
      %s129 = sphi 0, %s129
      %s131 = sphi 0, %s129
      %s132 = sphi 0, %s131
      %s146 = sphi 0, %s132
      %s150 = sphi 0, %s150
      %s152 = sphi 0, %s150
      %s153 = sphi 0, %s152
      %s167 = sphi 0, %s153
      %s171 = sphi 0, %s171
      %s173 = sphi 0, %s171
      %s174 = sphi 0, %s173
      %s188 = sphi 0, %s174
      %s192 = sphi 0, %s192
      %s194 = sphi 0, %s192
      %s195 = sphi 0, %s194
      %s209 = sphi 0, %s195
      %s213 = sphi 0, %s213
      %s215 = sphi 0, %s213
      %s216 = sphi 0, %s215
      %s230 = sphi 0, %s216
      %s234 = sphi 0, %s234
      %s236 = sphi 0, %s234
      %s237 = sphi 0, %s236
      %s251 = sphi 0, %s237
      %s255 = sphi 0, %s255
      %s257 = sphi 0, %s255
      %s258 = sphi 0, %s257
      %s272 = sphi 0, %s258
      %s276 = sphi 0, %s276
      %s278 = sphi 0, %s276
      %s279 = sphi 0, %s278
      %s293 = sphi 0, %s279
      %s297 = sphi 0, %s297
      %s299 = sphi 0, %s297
      %s300 = sphi 0, %s299
      %s314 = sphi 0, %s300
      %s318 = sphi 0, %s318
      %s320 = sphi 0, %s318
      %s321 = sphi 0, %s320
      %s335 = sphi 0, %s321
      %s341 = sphi 0, %s343
      %s344 = sphi 0, %s341
      %s345 = sphi 0, %s344
      %s361 = sphi 0, %s345
    $region4: #{resblockg_forward.1} parent=1 // loop_header_branch
      %30 = sbr.rel (%p28) target = $region8
    $region5: #{resblockg_forward.1} parent=1 // loop_body
      %s32 = ssub.s32 %s27, 1
      %s33 = ssub.s32 %s27, 2
      %s34 = sadd.s32 %s27, 1
      %s35 = ssub.s32 %s27, %s34
      %p36 = scmp.eq.s32.totalorder %s35, 0
      %s38 = sadd.s32 %s37, 1
      %s39 = scalar_select %p36, %s37, %s38
      %p42 = pneg %p36
      %p43 = scmp.eq.s32.totalorder %s27, 1
      %p44 = por %p42, %p43
      %p45 = scmp.ne.s32.totalorder %s37, %s40
      %p46 = scmp.eq.s32.totalorder %s27, 0
      %p47 = por %p45, %p46
      %p48 = scmp.ne.s32.totalorder %s37, %s40
      %p49 = scmp.eq.s32.totalorder %s32, 1
      %p50 = por %p48, %p49
      %p51 = scmp.ne.s32.totalorder %s40, %s41
      %p52 = scmp.eq.s32.totalorder %s32, 0
      %p53 = por %p51, %p52
      %p54 = scmp.ne.s32.totalorder %s40, %s41
      %p55 = scmp.eq.s32.totalorder %s33, 1
      %p56 = por %p54, %p55
      %p58 = scmp.ne.s32.totalorder %s41, %s57
      %p59 = scmp.eq.s32.totalorder %s33, 0
      %p60 = por %p58, %p59
      %s61 = ssub.s32 %s27, %s34
      %p62 = scmp.eq.s32.totalorder %s61, 0
      %s64 = sadd.s32 %s63, 1
      %s65 = scalar_select %p62, %s63, %s64
      %p68 = pneg %p62
      %p69 = scmp.eq.s32.totalorder %s27, 1
      %p70 = por %p68, %p69
      %p71 = scmp.ne.s32.totalorder %s63, %s66
      %p72 = scmp.eq.s32.totalorder %s27, 0
      %p73 = por %p71, %p72
      %p74 = scmp.ne.s32.totalorder %s63, %s66
      %p75 = scmp.eq.s32.totalorder %s32, 1
      %p76 = por %p74, %p75
      %p77 = scmp.ne.s32.totalorder %s66, %s67
      %p78 = scmp.eq.s32.totalorder %s32, 0
      %p79 = por %p77, %p78
      %p80 = scmp.ne.s32.totalorder %s66, %s67
      %p81 = scmp.eq.s32.totalorder %s33, 1
      %p82 = por %p80, %p81
      %p84 = scmp.ne.s32.totalorder %s67, %s83
      %p85 = scmp.eq.s32.totalorder %s33, 0
      %p86 = por %p84, %p85
      %s88 = sadd.s32 %s87, 1
      %p91 = scmp.eq.s32.totalorder %s27, 1
      %p92 = scmp.ne.s32.totalorder %s87, %s89
      %p93 = scmp.eq.s32.totalorder %s27, 0
      %p94 = por %p92, %p93
      %p95 = scmp.ne.s32.totalorder %s87, %s89
      %p96 = scmp.eq.s32.totalorder %s32, 1
      %p97 = por %p95, %p96
      %p98 = scmp.ne.s32.totalorder %s89, %s90
      %p99 = scmp.eq.s32.totalorder %s32, 0
      %p100 = por %p98, %p99
      %p101 = scmp.ne.s32.totalorder %s89, %s90
      %p102 = scmp.eq.s32.totalorder %s33, 1
      %p103 = por %p101, %p102
      %p105 = scmp.ne.s32.totalorder %s90, %s104
      %p106 = scmp.eq.s32.totalorder %s33, 0
      %p107 = por %p105, %p106
      %s109 = sadd.s32 %s108, 1
      %p112 = scmp.eq.s32.totalorder %s27, 1
      %p113 = scmp.ne.s32.totalorder %s108, %s110
      %p114 = scmp.eq.s32.totalorder %s27, 0
      %p115 = por %p113, %p114
      %p116 = scmp.ne.s32.totalorder %s108, %s110
      %p117 = scmp.eq.s32.totalorder %s32, 1
      %p118 = por %p116, %p117
      %p119 = scmp.ne.s32.totalorder %s110, %s111
      %p120 = scmp.eq.s32.totalorder %s32, 0
      %p121 = por %p119, %p120
      %p122 = scmp.ne.s32.totalorder %s110, %s111
      %p123 = scmp.eq.s32.totalorder %s33, 1
      %p124 = por %p122, %p123
      %p126 = scmp.ne.s32.totalorder %s111, %s125
      %p127 = scmp.eq.s32.totalorder %s33, 0
      %p128 = por %p126, %p127
      %s130 = sadd.s32 %s129, 1
      %p133 = scmp.eq.s32.totalorder %s27, 1
      %p134 = scmp.ne.s32.totalorder %s129, %s131
      %p135 = scmp.eq.s32.totalorder %s27, 0
      %p136 = por %p134, %p135
      %p137 = scmp.ne.s32.totalorder %s129, %s131
      %p138 = scmp.eq.s32.totalorder %s32, 1
      %p139 = por %p137, %p138
      %p140 = scmp.ne.s32.totalorder %s131, %s132
      %p141 = scmp.eq.s32.totalorder %s32, 0
      %p142 = por %p140, %p141
      %p143 = scmp.ne.s32.totalorder %s131, %s132
      %p144 = scmp.eq.s32.totalorder %s33, 1
      %p145 = por %p143, %p144
      %p147 = scmp.ne.s32.totalorder %s132, %s146
      %p148 = scmp.eq.s32.totalorder %s33, 0
      %p149 = por %p147, %p148
      %s151 = sadd.s32 %s150, 1
      %p154 = scmp.eq.s32.totalorder %s27, 1
      %p155 = scmp.ne.s32.totalorder %s150, %s152
      %p156 = scmp.eq.s32.totalorder %s27, 0
      %p157 = por %p155, %p156
      %p158 = scmp.ne.s32.totalorder %s150, %s152
      %p159 = scmp.eq.s32.totalorder %s32, 1
      %p160 = por %p158, %p159
      %p161 = scmp.ne.s32.totalorder %s152, %s153
      %p162 = scmp.eq.s32.totalorder %s32, 0
      %p163 = por %p161, %p162
      %p164 = scmp.ne.s32.totalorder %s152, %s153
      %p165 = scmp.eq.s32.totalorder %s33, 1
      %p166 = por %p164, %p165
      %p168 = scmp.ne.s32.totalorder %s153, %s167
      %p169 = scmp.eq.s32.totalorder %s33, 0
      %p170 = por %p168, %p169
      %s172 = sadd.s32 %s171, 1
      %p175 = scmp.eq.s32.totalorder %s27, 1
      %p176 = scmp.ne.s32.totalorder %s171, %s173
      %p177 = scmp.eq.s32.totalorder %s27, 0
      %p178 = por %p176, %p177
      %p179 = scmp.ne.s32.totalorder %s171, %s173
      %p180 = scmp.eq.s32.totalorder %s32, 1
      %p181 = por %p179, %p180
      %p182 = scmp.ne.s32.totalorder %s173, %s174
      %p183 = scmp.eq.s32.totalorder %s32, 0
      %p184 = por %p182, %p183
      %p185 = scmp.ne.s32.totalorder %s173, %s174
      %p186 = scmp.eq.s32.totalorder %s33, 1
      %p187 = por %p185, %p186
      %p189 = scmp.ne.s32.totalorder %s174, %s188
      %p190 = scmp.eq.s32.totalorder %s33, 0
      %p191 = por %p189, %p190
      %s193 = sadd.s32 %s192, 1
      %p196 = scmp.eq.s32.totalorder %s27, 1
      %p197 = scmp.ne.s32.totalorder %s192, %s194
      %p198 = scmp.eq.s32.totalorder %s27, 0
      %p199 = por %p197, %p198
      %p200 = scmp.ne.s32.totalorder %s192, %s194
      %p201 = scmp.eq.s32.totalorder %s32, 1
      %p202 = por %p200, %p201
      %p203 = scmp.ne.s32.totalorder %s194, %s195
      %p204 = scmp.eq.s32.totalorder %s32, 0
      %p205 = por %p203, %p204
      %p206 = scmp.ne.s32.totalorder %s194, %s195
      %p207 = scmp.eq.s32.totalorder %s33, 1
      %p208 = por %p206, %p207
      %p210 = scmp.ne.s32.totalorder %s195, %s209
      %p211 = scmp.eq.s32.totalorder %s33, 0
      %p212 = por %p210, %p211
      %s214 = sadd.s32 %s213, 1
      %p217 = scmp.eq.s32.totalorder %s27, 1
      %p218 = scmp.ne.s32.totalorder %s213, %s215
      %p219 = scmp.eq.s32.totalorder %s27, 0
      %p220 = por %p218, %p219
      %p221 = scmp.ne.s32.totalorder %s213, %s215
      %p222 = scmp.eq.s32.totalorder %s32, 1
      %p223 = por %p221, %p222
      %p224 = scmp.ne.s32.totalorder %s215, %s216
      %p225 = scmp.eq.s32.totalorder %s32, 0
      %p226 = por %p224, %p225
      %p227 = scmp.ne.s32.totalorder %s215, %s216
      %p228 = scmp.eq.s32.totalorder %s33, 1
      %p229 = por %p227, %p228
      %p231 = scmp.ne.s32.totalorder %s216, %s230
      %p232 = scmp.eq.s32.totalorder %s33, 0
      %p233 = por %p231, %p232
      %s235 = sadd.s32 %s234, 1
      %p238 = scmp.eq.s32.totalorder %s27, 1
      %p239 = scmp.ne.s32.totalorder %s234, %s236
      %p240 = scmp.eq.s32.totalorder %s27, 0
      %p241 = por %p239, %p240
      %p242 = scmp.ne.s32.totalorder %s234, %s236
      %p243 = scmp.eq.s32.totalorder %s32, 1
      %p244 = por %p242, %p243
      %p245 = scmp.ne.s32.totalorder %s236, %s237
      %p246 = scmp.eq.s32.totalorder %s32, 0
      %p247 = por %p245, %p246
      %p248 = scmp.ne.s32.totalorder %s236, %s237
      %p249 = scmp.eq.s32.totalorder %s33, 1
      %p250 = por %p248, %p249
      %p252 = scmp.ne.s32.totalorder %s237, %s251
      %p253 = scmp.eq.s32.totalorder %s33, 0
      %p254 = por %p252, %p253
      %s256 = sadd.s32 %s255, 1
      %p259 = scmp.eq.s32.totalorder %s27, 1
      %p260 = scmp.ne.s32.totalorder %s255, %s257
      %p261 = scmp.eq.s32.totalorder %s27, 0
      %p262 = por %p260, %p261
      %p263 = scmp.ne.s32.totalorder %s255, %s257
      %p264 = scmp.eq.s32.totalorder %s32, 1
      %p265 = por %p263, %p264
      %p266 = scmp.ne.s32.totalorder %s257, %s258
      %p267 = scmp.eq.s32.totalorder %s32, 0
      %p268 = por %p266, %p267
      %p269 = scmp.ne.s32.totalorder %s257, %s258
      %p270 = scmp.eq.s32.totalorder %s33, 1
      %p271 = por %p269, %p270
      %p273 = scmp.ne.s32.totalorder %s258, %s272
      %p274 = scmp.eq.s32.totalorder %s33, 0
      %p275 = por %p273, %p274
      %s277 = sadd.s32 %s276, 1
      %p280 = scmp.eq.s32.totalorder %s27, 1
      %p281 = scmp.ne.s32.totalorder %s276, %s278
      %p282 = scmp.eq.s32.totalorder %s27, 0
      %p283 = por %p281, %p282
      %p284 = scmp.ne.s32.totalorder %s276, %s278
      %p285 = scmp.eq.s32.totalorder %s32, 1
      %p286 = por %p284, %p285
      %p287 = scmp.ne.s32.totalorder %s278, %s279
      %p288 = scmp.eq.s32.totalorder %s32, 0
      %p289 = por %p287, %p288
      %p290 = scmp.ne.s32.totalorder %s278, %s279
      %p291 = scmp.eq.s32.totalorder %s33, 1
      %p292 = por %p290, %p291
      %p294 = scmp.ne.s32.totalorder %s279, %s293
      %p295 = scmp.eq.s32.totalorder %s33, 0
      %p296 = por %p294, %p295
      %s298 = sadd.s32 %s297, 1
      %p301 = scmp.eq.s32.totalorder %s27, 1
      %p302 = scmp.ne.s32.totalorder %s297, %s299
      %p303 = scmp.eq.s32.totalorder %s27, 0
      %p304 = por %p302, %p303
      %p305 = scmp.ne.s32.totalorder %s297, %s299
      %p306 = scmp.eq.s32.totalorder %s32, 1
      %p307 = por %p305, %p306
      %p308 = scmp.ne.s32.totalorder %s299, %s300
      %p309 = scmp.eq.s32.totalorder %s32, 0
      %p310 = por %p308, %p309
      %p311 = scmp.ne.s32.totalorder %s299, %s300
      %p312 = scmp.eq.s32.totalorder %s33, 1
      %p313 = por %p311, %p312
      %p315 = scmp.ne.s32.totalorder %s300, %s314
      %p316 = scmp.eq.s32.totalorder %s33, 0
      %p317 = por %p315, %p316
      %s319 = sadd.s32 %s318, 1
      %p322 = scmp.eq.s32.totalorder %s27, 1
      %p323 = scmp.ne.s32.totalorder %s318, %s320
      %p324 = scmp.eq.s32.totalorder %s27, 0
      %p325 = por %p323, %p324
      %p326 = scmp.ne.s32.totalorder %s318, %s320
      %p327 = scmp.eq.s32.totalorder %s32, 1
      %p328 = por %p326, %p327
      %p329 = scmp.ne.s32.totalorder %s320, %s321
      %p330 = scmp.eq.s32.totalorder %s32, 0
      %p331 = por %p329, %p330
      %p332 = scmp.ne.s32.totalorder %s320, %s321
      %p333 = scmp.eq.s32.totalorder %s33, 1
      %p334 = por %p332, %p333
      %p336 = scmp.ne.s32.totalorder %s321, %s335
      %p337 = scmp.eq.s32.totalorder %s33, 0
      %p338 = por %p336, %p337
      %s339 = ssub.s32 %s27, %s34
      %p340 = scmp.eq.s32.totalorder %s339, 0
      %s342 = sadd.s32 %s341, 1
      %s343 = scalar_select %p340, %s341, %s342
      %p346 = pneg %p340
      %p347 = scmp.eq.s32.totalorder %s27, 1
      %p348 = por %p346, %p347
      %p349 = scmp.ne.s32.totalorder %s341, %s344
      %p350 = scmp.eq.s32.totalorder %s27, 0
      %p351 = por %p349, %p350
      %p352 = scmp.ne.s32.totalorder %s341, %s344
      %p353 = scmp.eq.s32.totalorder %s32, 1
      %p354 = por %p352, %p353
      %p355 = scmp.ne.s32.totalorder %s344, %s345
      %p356 = scmp.eq.s32.totalorder %s32, 0
      %p357 = por %p355, %p356
      %p358 = scmp.ne.s32.totalorder %s344, %s345
      %p359 = scmp.eq.s32.totalorder %s33, 1
      %p360 = por %p358, %p359
      %p362 = scmp.ne.s32.totalorder %s345, %s361
      %p363 = scmp.eq.s32.totalorder %s33, 0
      %p364 = por %p362, %p363
      %p365 = scmp.le.s32.totalorder 1, %s27
      %p366 = scmp.lt.s32.totalorder %s27, 3
      %p367 = pnand %p365, %p366
      %p368 = pneg %p367
      // Predicated region
      $region9: #{resblockg_forward.1} parent=5 // pred_check
        _
      $region10: #{resblockg_forward.1} parent=5 // pred_check_branch
        %370 = sbr.rel (%p367) target = $region12
      $region11: #{resblockg_forward.1} parent=5 // pred_region
        %s371 = ssub.s32 %s27, 1
        // Predicated region
        $region13: #{resblockg_forward.1} parent=11 // pred_check
          %p372 = pneg %p100
        $region14: #{resblockg_forward.1} parent=11 // pred_check_branch
          %374 = sbr.rel (%p372) target = $region16
        $region15: #{resblockg_forward.1} parent=11 // pred_region
          _
        $region16: #{resblockg_forward.1} parent=11 // pred_fallthru
          _
        // Predicated region
        $region17: #{resblockg_forward.1} parent=11 // pred_check
          %p375 = pneg %p121
        $region18: #{resblockg_forward.1} parent=11 // pred_check_branch
          %377 = sbr.rel (%p375) target = $region20
        $region19: #{resblockg_forward.1} parent=11 // pred_region
          _
        $region20: #{resblockg_forward.1} parent=11 // pred_fallthru
          _
        // Predicated region
        $region21: #{resblockg_forward.1} parent=11 // pred_check
          %p378 = pneg %p142
        $region22: #{resblockg_forward.1} parent=11 // pred_check_branch
          %380 = sbr.rel (%p378) target = $region24
        $region23: #{resblockg_forward.1} parent=11 // pred_region
          %s382 = ssub.s32 2304, 2304
          %383 = vsyncadd [#allocation8], %s382
          %s384 = sshll.u32 [#allocation7], 4
          %s385 = int_to_ptr.vmem [resolvable:$true] %s384
          %390 = dma.hbm_to_vmem [thread:$0]  %s4, 2304, %s385, [#allocation8], 128, 128, 8
        $region24: #{resblockg_forward.1} parent=11 // pred_fallthru
          _
        // Predicated region
        $region25: #{resblockg_forward.1} parent=11 // pred_check
          %p391 = pneg %p163
        $region26: #{resblockg_forward.1} parent=11 // pred_check_branch
          %393 = sbr.rel (%p391) target = $region28
        $region27: #{resblockg_forward.1} parent=11 // pred_region
          _
        $region28: #{resblockg_forward.1} parent=11 // pred_fallthru
          _
        // Predicated region
        $region29: #{resblockg_forward.1} parent=11 // pred_check
          %p394 = pneg %p184
        $region30: #{resblockg_forward.1} parent=11 // pred_check_branch
          %396 = sbr.rel (%p394) target = $region32
        $region31: #{resblockg_forward.1} parent=11 // pred_region
          _
        $region32: #{resblockg_forward.1} parent=11 // pred_fallthru
          _
        // Predicated region
        $region33: #{resblockg_forward.1} parent=11 // pred_check
          %p397 = pneg %p205
        $region34: #{resblockg_forward.1} parent=11 // pred_check_branch
          %399 = sbr.rel (%p397) target = $region36
        $region35: #{resblockg_forward.1} parent=11 // pred_region
          _
        $region36: #{resblockg_forward.1} parent=11 // pred_fallthru
          _
        // Predicated region
        $region37: #{resblockg_forward.1} parent=11 // pred_check
          %p400 = pneg %p226
        $region38: #{resblockg_forward.1} parent=11 // pred_check_branch
          %402 = sbr.rel (%p400) target = $region40
        $region39: #{resblockg_forward.1} parent=11 // pred_region
          _
        $region40: #{resblockg_forward.1} parent=11 // pred_fallthru
          _
        // Predicated region
        $region41: #{resblockg_forward.1} parent=11 // pred_check
          %p403 = pneg %p247
        $region42: #{resblockg_forward.1} parent=11 // pred_check_branch
          %405 = sbr.rel (%p403) target = $region44
        $region43: #{resblockg_forward.1} parent=11 // pred_region
          _
        $region44: #{resblockg_forward.1} parent=11 // pred_fallthru
          _
        // Predicated region
        $region45: #{resblockg_forward.1} parent=11 // pred_check
          %p406 = pneg %p268
        $region46: #{resblockg_forward.1} parent=11 // pred_check_branch
          %408 = sbr.rel (%p406) target = $region48
        $region47: #{resblockg_forward.1} parent=11 // pred_region
          %s410 = ssub.s32 4608, 4608
          %411 = vsyncadd [#allocation8], %s410
          %s412 = sshll.u32 [#allocation9], 4
          %s413 = int_to_ptr.vmem [resolvable:$true] %s412
          %418 = dma.hbm_to_vmem [thread:$0]  %s10, 4608, %s413, [#allocation8], 128, 128, 8
        $region48: #{resblockg_forward.1} parent=11 // pred_fallthru
          _
        // Predicated region
        $region49: #{resblockg_forward.1} parent=11 // pred_check
          %p419 = pneg %p289
        $region50: #{resblockg_forward.1} parent=11 // pred_check_branch
          %421 = sbr.rel (%p419) target = $region52
        $region51: #{resblockg_forward.1} parent=11 // pred_region
          _
        $region52: #{resblockg_forward.1} parent=11 // pred_fallthru
          _
        // Predicated region
        $region53: #{resblockg_forward.1} parent=11 // pred_check
          %p422 = pneg %p310
        $region54: #{resblockg_forward.1} parent=11 // pred_check_branch
          %424 = sbr.rel (%p422) target = $region56
        $region55: #{resblockg_forward.1} parent=11 // pred_region
          _
        $region56: #{resblockg_forward.1} parent=11 // pred_fallthru
          _
        // Predicated region
        $region57: #{resblockg_forward.1} parent=11 // pred_check
          %p425 = pneg %p331
        $region58: #{resblockg_forward.1} parent=11 // pred_check_branch
          %427 = sbr.rel (%p425) target = $region60
        $region59: #{resblockg_forward.1} parent=11 // pred_region
          _
        $region60: #{resblockg_forward.1} parent=11 // pred_fallthru
          _
      $region12: #{resblockg_forward.1} parent=5 // pred_fallthru
        _
      %p428 = scmp.lt.s32.totalorder %s27, 2
      // Predicated region
      $region61: #{resblockg_forward.1} parent=5 // pred_check
        %p429 = pneg %p428
      $region62: #{resblockg_forward.1} parent=5 // pred_check_branch
        %431 = sbr.rel (%p429) target = $region64
      $region63: #{resblockg_forward.1} parent=5 // pred_region
        // Predicated region
        $region65: #{resblockg_forward.1} parent=63 // pred_check
          %p432 = pneg %p47
        $region66: #{resblockg_forward.1} parent=63 // pred_check_branch
          %434 = sbr.rel (%p432) target = $region68
        $region67: #{resblockg_forward.1} parent=63 // pred_region
          %s435 = sand.u32 %s37, 1
          %s436 = scalar_lea.sflag [#allocation5], %s435
          %s437 = sand.u32 %s37, 1
          %s438 = smul.addr %s437, 64
          %s439 = scalar_lea.vmem [#allocation4], %s438
          %s441 = ssub.s32 1024, 1024
          %442 = vsyncadd %s436, %s441
          %s443 = smul.addr %s27, 8
          %s444 = smul.addr %s443, 128
          %s445 = scalar_lea.hbm %s0, %s444
          %s446 = sshll.u32 %s439, 4
          %s447 = int_to_ptr.vmem [resolvable:$true] %s446
          %452 = dma.hbm_to_vmem [thread:$0]  %s445, 1024, %s447, %s436, 128, 128, 8
        $region68: #{resblockg_forward.1} parent=63 // pred_fallthru
          _
        // Predicated region
        $region69: #{resblockg_forward.1} parent=63 // pred_check
          %p453 = pneg %p73
        $region70: #{resblockg_forward.1} parent=63 // pred_check_branch
          %455 = sbr.rel (%p453) target = $region72
        $region71: #{resblockg_forward.1} parent=63 // pred_region
          %p456 = scmp.lt.s32.totalorder %s27, 1
          %s457 = scalar_select %p456, %s27, 1
          %s458 = scalar_lea.vmem %s1, %s457
        $region72: #{resblockg_forward.1} parent=63 // pred_fallthru
          _
      $region64: #{resblockg_forward.1} parent=5 // pred_fallthru
        _
      %p459 = scmp.le.s32.totalorder 1, %s27
      %p460 = scmp.lt.s32.totalorder %s27, 3
      %p461 = pnand %p459, %p460
      %p462 = pneg %p461
      // Predicated region
      $region73: #{resblockg_forward.1} parent=5 // pred_check
        _
      $region74: #{resblockg_forward.1} parent=5 // pred_check_branch
        %464 = sbr.rel (%p461) target = $region76
      $region75: #{resblockg_forward.1} parent=5 // pred_region
        %s465 = ssub.s32 %s27, 1
        %s466 = sand.u32 %s40, 1
        %s467 = scalar_lea.sflag [#allocation5], %s466
        %s468 = sand.u32 %s40, 1
        %s469 = smul.addr %s468, 64
        %s470 = scalar_lea.vmem [#allocation4], %s469
        // Predicated region
        $region77: #{resblockg_forward.1} parent=75 // pred_check
          %p471 = pneg %p53
        $region78: #{resblockg_forward.1} parent=75 // pred_check_branch
          %473 = sbr.rel (%p471) target = $region80
        $region79: #{resblockg_forward.1} parent=75 // pred_region
          %474 = dma.done %s467, 1024
        $region80: #{resblockg_forward.1} parent=75 // pred_fallthru
          _
        // Predicated region
        $region81: #{resblockg_forward.1} parent=75 // pred_check
          %p475 = pneg %p142
        $region82: #{resblockg_forward.1} parent=75 // pred_check_branch
          %477 = sbr.rel (%p475) target = $region84
        $region83: #{resblockg_forward.1} parent=75 // pred_region
          %478 = dma.done [#allocation8], 2304
        $region84: #{resblockg_forward.1} parent=75 // pred_fallthru
          _
        // Predicated region
        $region85: #{resblockg_forward.1} parent=75 // pred_check
          %p479 = pneg %p268
        $region86: #{resblockg_forward.1} parent=75 // pred_check_branch
          %481 = sbr.rel (%p479) target = $region88
        $region87: #{resblockg_forward.1} parent=75 // pred_region
          %482 = dma.done [#allocation8], 4608
        $region88: #{resblockg_forward.1} parent=75 // pred_fallthru
          _
        %s483 = sand.u32 %s40, 1
        %s484 = scalar_lea.sflag [#allocation5], %s483
        %s485 = sand.u32 %s40, 1
        %s486 = smul.addr %s485, 64
        %s487 = scalar_lea.vmem [#allocation4], %s486
        %p488 = pneg %p53
        %p489 = pneg %p50
        %p490 = scmp.lt.s32.totalorder %s32, 1
        %s491 = scalar_select %p490, %s32, 1
        %s492 = scalar_lea.vmem %s1, %s491
        %p493 = pneg %p79
        %p494 = pneg %p76
        %p495 = pneg %p100
        %p496 = pneg %p97
        %p497 = pneg %p121
        %p498 = pneg %p118
        %p499 = pneg %p142
        %p500 = pneg %p139
        %p501 = pneg %p163
        %p502 = pneg %p160
        %p503 = pneg %p184
        %p504 = pneg %p181
        %p505 = pneg %p205
        %p506 = pneg %p202
        %p507 = pneg %p226
        %p508 = pneg %p223
        %p509 = pneg %p247
        %p510 = pneg %p244
        %p511 = pneg %p268
        %p512 = pneg %p265
        %p513 = pneg %p289
        %p514 = pneg %p286
        %p515 = pneg %p310
        %p516 = pneg %p307
        %p517 = pneg %p331
        %p518 = pneg %p328
        %p519 = pneg %p357
        %p520 = pneg %p354
        %s521 = sand.u32 %s344, 1
        %s522 = scalar_lea.sflag [#allocation6], %s521
        %s523 = sand.u32 %s344, 1
        %s524 = smul.addr %s523, 64
        %s525 = scalar_lea.vmem [#allocation10], %s524
        %p526 = scmp.lt.s32.totalorder %s32, 1
        %s527 = scalar_select %p526, %s32, 1
        %s528 = scalar_lea.vmem %s1, %s527
        %v529 = vld [vmem:[%s470] sm:$0xff]
        %v530 = vld [vmem:[%s470 + $0x8] sm:$0xff]
        %v531 = vld [vmem:[%s470 + $0x10] sm:$0xff]
        %v532 = vld [vmem:[%s470 + $0x18] sm:$0xff]
        %v533 = vld [vmem:[%s470 + $0x20] sm:$0xff]
        %v534 = vld [vmem:[%s470 + $0x28] sm:$0xff]
        %v535 = vld [vmem:[%s470 + $0x30] sm:$0xff]
        %v536 = vld [vmem:[%s470 + $0x38] sm:$0xff]
        %vm537 = vcmask 130048
        %v538 = vsel %vm537, %v529, 0.0
        %v539 = vsel %vm537, %v530, 0.0
        %v540 = vadd.f32 %v538, %v539
        %v541 = vsel %vm537, %v531, 0.0
        %v542 = vadd.f32 %v540, %v541
        %v543 = vsel %vm537, %v532, 0.0
        %v544 = vadd.f32 %v542, %v543
        %v545 = vsel %vm537, %v533, 0.0
        %v546 = vadd.f32 %v544, %v545
        %v547 = vsel %vm537, %v534, 0.0
        %v548 = vadd.f32 %v546, %v547
        %v549 = vsel %vm537, %v535, 0.0
        %v550 = vadd.f32 %v548, %v549
        %v551 = vsel %vm537, %v536, 0.0
        %v552 = vadd.f32 %v550, %v551
        %553 = vadd.xlane.f32.xlu0 %v552
        %v554 = vpop.xlane.xlu0 %553
        %v555 = vrot.slane %v554, 4
        %v556 = vadd.f32 %v554, %v555
        %v557 = vrot.slane %v556, 2
        %v558 = vadd.f32 %v556, %v557
        %v559 = vrot.slane %v558, 1
        %v560 = vadd.f32 %v558, %v559
        %s561 = vtos %v560
        %v562 = vrcp.pop 1024.0
        %s563 = vtos %v562
        %s564 = smul.f32 %s561, %s563
        %v565 = vmul.f32 %v529, %v529
        %v566 = vmul.f32 %v530, %v530
        %v567 = vmul.f32 %v531, %v531
        %v568 = vmul.f32 %v532, %v532
        %v569 = vmul.f32 %v533, %v533
        %v570 = vmul.f32 %v534, %v534
        %v571 = vmul.f32 %v535, %v535
        %v572 = vmul.f32 %v536, %v536
        %v573 = vsel %vm537, %v565, 0.0
        %v574 = vsel %vm537, %v566, 0.0
        %v575 = vadd.f32 %v573, %v574
        %v576 = vsel %vm537, %v567, 0.0
        %v577 = vadd.f32 %v575, %v576
        %v578 = vsel %vm537, %v568, 0.0
        %v579 = vadd.f32 %v577, %v578
        %v580 = vsel %vm537, %v569, 0.0
        %v581 = vadd.f32 %v579, %v580
        %v582 = vsel %vm537, %v570, 0.0
        %v583 = vadd.f32 %v581, %v582
        %v584 = vsel %vm537, %v571, 0.0
        %v585 = vadd.f32 %v583, %v584
        %v586 = vsel %vm537, %v572, 0.0
        %v587 = vadd.f32 %v585, %v586
        %588 = vadd.xlane.f32.xlu0 %v587
        %v589 = vpop.xlane.xlu0 %588
        %v590 = vrot.slane %v589, 4
        %v591 = vadd.f32 %v589, %v590
        %v592 = vrot.slane %v591, 2
        %v593 = vadd.f32 %v591, %v592
        %v594 = vrot.slane %v593, 1
        %v595 = vadd.f32 %v593, %v594
        %s596 = vtos %v595
        %v597 = vrcp.pop 1024.0
        %s598 = vtos %v597
        %s599 = smul.f32 %s596, %s598
        %s600 = smul.f32 %s564, %s564
        %s601 = ssub.f32 %s599, %s600
        %v602 = vld [vmem:[%s2] sm:$0x1]
        %s603 = sadd.f32 %s601, 1e-05
        %v604 = vstv %s603
        %v605 = vrsqrt.pop %v604
        %s606 = vtos %v605
        %v607 = vstv %s606
        %v608 = vmul.f32 %v602, %v607
        %v609 = vld [vmem:[%s3] sm:$0x1]
        %v610 = vstv %s564
        %v611 = vmul.f32 %v610, %v608
        %v612 = vsub.f32 %v609, %v611
        %v614 = vlaneseq
        %v615 = vshrl.u32 %v614, 7
        %v616 = vsub.s32 0, %v615
        %v617 = vrot.slane %v608, %v616
        %v619 = vmul.f32 %v529, %v617
        %v620 = vmul.f32 %v530, %v617
        %v621 = vmul.f32 %v531, %v617
        %v622 = vmul.f32 %v532, %v617
        %v623 = vmul.f32 %v533, %v617
        %v624 = vmul.f32 %v534, %v617
        %v625 = vmul.f32 %v535, %v617
        %v626 = vmul.f32 %v536, %v617
        %v628 = vlaneseq
        %v629 = vshrl.u32 %v628, 7
        %v630 = vsub.s32 0, %v629
        %v631 = vrot.slane %v612, %v630
        %v633 = vadd.f32 %v619, %v631
        %v634 = vadd.f32 %v620, %v631
        %v635 = vadd.f32 %v621, %v631
        %v636 = vadd.f32 %v622, %v631
        %v637 = vadd.f32 %v623, %v631
        %v638 = vadd.f32 %v624, %v631
        %v639 = vadd.f32 %v625, %v631
        %v640 = vadd.f32 %v626, %v631
        %v641 = vxor.u32 %v633, 2147483648
        %v642 = vxor.u32 %v634, 2147483648
        %v643 = vxor.u32 %v635, 2147483648
        %v644 = vxor.u32 %v636, 2147483648
        %v645 = vxor.u32 %v637, 2147483648
        %v646 = vxor.u32 %v638, 2147483648
        %v647 = vxor.u32 %v639, 2147483648
        %v648 = vxor.u32 %v640, 2147483648
        %v649 = vmul.f32 %v641, 1.442695
        %v650 = vpow.pop %v649
        %v651 = vmul.f32 %v642, 1.442695
        %v652 = vpow.pop %v651
        %v653 = vmul.f32 %v643, 1.442695
        %v654 = vpow.pop %v653
        %v655 = vmul.f32 %v644, 1.442695
        %v656 = vpow.pop %v655
        %v657 = vmul.f32 %v645, 1.442695
        %v658 = vpow.pop %v657
        %v659 = vmul.f32 %v646, 1.442695
        %v660 = vpow.pop %v659
        %v661 = vmul.f32 %v647, 1.442695
        %v662 = vpow.pop %v661
        %v663 = vmul.f32 %v648, 1.442695
        %v664 = vpow.pop %v663
        %v665 = vadd.f32 %v650, 1.0
        %v666 = vadd.f32 %v652, 1.0
        %v667 = vadd.f32 %v654, 1.0
        %v668 = vadd.f32 %v656, 1.0
        %v669 = vadd.f32 %v658, 1.0
        %v670 = vadd.f32 %v660, 1.0
        %v671 = vadd.f32 %v662, 1.0
        %v672 = vadd.f32 %v664, 1.0
        %v673 = vrcp.pop %v665
        %v674 = vmul.f32 1.0, %v673
        %v675 = vrcp.pop %v666
        %v676 = vmul.f32 1.0, %v675
        %v677 = vrcp.pop %v667
        %v678 = vmul.f32 1.0, %v677
        %v679 = vrcp.pop %v668
        %v680 = vmul.f32 1.0, %v679
        %v681 = vrcp.pop %v669
        %v682 = vmul.f32 1.0, %v681
        %v683 = vrcp.pop %v670
        %v684 = vmul.f32 1.0, %v683
        %v685 = vrcp.pop %v671
        %v686 = vmul.f32 1.0, %v685
        %v687 = vrcp.pop %v672
        %v688 = vmul.f32 1.0, %v687
        %v689 = vmul.f32 %v633, %v674
        %v690 = vmul.f32 %v634, %v676
        %v691 = vmul.f32 %v635, %v678
        %v692 = vmul.f32 %v636, %v680
        %v693 = vmul.f32 %v637, %v682
        %v694 = vmul.f32 %v638, %v684
        %v695 = vmul.f32 %v639, %v686
        %v696 = vmul.f32 %v640, %v688
        %697 = vst.msk [vmem:[#allocation2] sm:$0xff] %vm537, 0.0
        %698 = vst.msk [vmem:[#allocation2 + $0x8] sm:$0xff] %vm537, 0.0
        %vm699 = vcmask 122880
        %700 = vst.msk [vmem:[#allocation2 + $0x10] sm:$0x1] %vm699, 0.0
        %701 = vst.msk [vmem:[#allocation2 + $0x18] sm:$0xff] %vm537, 0.0
        %702 = vst.msk [vmem:[#allocation2 + $0x20] sm:$0xff] %vm537, 0.0
        %703 = vst.msk [vmem:[#allocation2 + $0x28] sm:$0x1] %vm699, 0.0
        %704 = vst.msk [vmem:[#allocation2 + $0x30] sm:$0xff] %vm537, 0.0
        %705 = vst.msk [vmem:[#allocation2 + $0x38] sm:$0xff] %vm537, 0.0
        %706 = vst.msk [vmem:[#allocation2 + $0x40] sm:$0x1] %vm699, 0.0
        %707 = vst.msk [vmem:[#allocation2 + $0x48] sm:$0xff] %vm537, 0.0
        %708 = vst.msk [vmem:[#allocation2 + $0x50] sm:$0xff] %vm537, 0.0
        %709 = vst.msk [vmem:[#allocation2 + $0x58] sm:$0x1] %vm699, 0.0
        %710 = vst.msk [vmem:[#allocation2 + $0x60] sm:$0xff] %vm537, 0.0
        %711 = vst.msk [vmem:[#allocation2 + $0x68] sm:$0xff] %vm537, 0.0
        %712 = vst.msk [vmem:[#allocation2 + $0x70] sm:$0x1] %vm699, 0.0
        %713 = vst.msk [vmem:[#allocation2 + $0x78] sm:$0xff] %vm537, 0.0
        %714 = vst.msk [vmem:[#allocation2 + $0x80] sm:$0xff] %vm537, 0.0
        %715 = vst.msk [vmem:[#allocation2 + $0x88] sm:$0x1] %vm699, 0.0
        %716 = vst.msk [vmem:[#allocation2 + $0x90] sm:$0xff] %vm537, 0.0
        %717 = vst.msk [vmem:[#allocation2 + $0x98] sm:$0xff] %vm537, 0.0
        %718 = vst.msk [vmem:[#allocation2 + $0xa0] sm:$0x1] %vm699, 0.0
        %719 = vst.msk [vmem:[#allocation2 + $0xa8] sm:$0xff] %vm537, 0.0
        %720 = vst.msk [vmem:[#allocation2 + $0xb0] sm:$0xff] %vm537, 0.0
        %721 = vst.msk [vmem:[#allocation2 + $0xb8] sm:$0x1] %vm699, 0.0
        %722 = vst.msk [vmem:[#allocation2 + $0xc0] sm:$0xff] %vm537, 0.0
        %723 = vst.msk [vmem:[#allocation2 + $0xc8] sm:$0xff] %vm537, 0.0
        %724 = vst.msk [vmem:[#allocation2 + $0xd0] sm:$0x1] %vm699, 0.0
        %725 = vst.msk [vmem:[#allocation2 + $0xd8] sm:$0xff] %vm537, 0.0
        %726 = vst.msk [vmem:[#allocation2 + $0xe0] sm:$0xff] %vm537, 0.0
        %727 = vst.msk [vmem:[#allocation2 + $0xe8] sm:$0x1] %vm699, 0.0
        %s728 = scalar_lea.vmem [#allocation2], 24
        %729 = vst.msk [vmem:[%s728 + $0x8] sm:$0xff] %vm537, %v689
        %730 = vst.msk [vmem:[%s728 + $0x20] sm:$0xff] %vm537, %v690
        %731 = vst.msk [vmem:[%s728 + $0x38] sm:$0xff] %vm537, %v691
        %732 = vst.msk [vmem:[%s728 + $0x50] sm:$0xff] %vm537, %v692
        %733 = vst.msk [vmem:[%s728 + $0x68] sm:$0xff] %vm537, %v693
        %734 = vst.msk [vmem:[%s728 + $0x80] sm:$0xff] %vm537, %v694
        %735 = vst.msk [vmem:[%s728 + $0x98] sm:$0xff] %vm537, %v695
        %736 = vst.msk [vmem:[%s728 + $0xb0] sm:$0xff] %vm537, %v696
        %v737 = vld [vmem:[#allocation2 + $0x7] sm:$0xff]
        %v738 = vld [vmem:[#allocation2 + $0x1f] sm:$0xff]
        %v739 = vld [vmem:[#allocation2 + $0x37] sm:$0xff]
        %v740 = vld [vmem:[#allocation2 + $0x4f] sm:$0xff]
        %v741 = vld [vmem:[#allocation2 + $0x67] sm:$0xff]
        %v742 = vld [vmem:[#allocation2 + $0x7f] sm:$0xff]
        %v743 = vld [vmem:[#allocation2 + $0x97] sm:$0xff]
        %v744 = vld [vmem:[#allocation2 + $0xaf] sm:$0xff]
        %v745 = vld [vmem:[#allocation7] sm:$0xff]
        %v746 = vld [vmem:[#allocation7 + $0x8] sm:$0xff]
        %v747 = vld [vmem:[#allocation2 + $0x8] sm:$0xff]
        %v748 = vld [vmem:[#allocation2 + $0x20] sm:$0xff]
        %v749 = vld [vmem:[#allocation2 + $0x38] sm:$0xff]
        %v750 = vld [vmem:[#allocation2 + $0x50] sm:$0xff]
        %v751 = vld [vmem:[#allocation2 + $0x68] sm:$0xff]
        %v752 = vld [vmem:[#allocation2 + $0x80] sm:$0xff]
        %v753 = vld [vmem:[#allocation2 + $0x98] sm:$0xff]
        %v754 = vld [vmem:[#allocation2 + $0xb0] sm:$0xff]
        %s755 = scalar_lea.vmem [#allocation7], 16
        %v756 = vld [vmem:[%s755] sm:$0xff]
        %v757 = vld [vmem:[%s755 + $0x8] sm:$0xff]
        %v759 = vsel %vm537, %v747, 0
        %v762 = vsel %vm537, %v748, 0
        %v765 = vsel %vm537, %v749, 0
        %v768 = vsel %vm537, %v750, 0
        %v771 = vsel %vm537, %v751, 0
        %v774 = vsel %vm537, %v752, 0
        %v777 = vsel %vm537, %v753, 0
        %v780 = vsel %vm537, %v754, 0
        %782 = vmatprep.subr.mxu0 0.0
        %783 = vmatpush1.msra.mxu0 %v756
        %784 = vmatprep.subr.mxu0 0.0
        %785 = vmatpush1.msra.mxu0 %v757
        %786 = vmatprep.subr.mxu0 0.0
        %787 = vmatpush1.msra.mxu0 0.0
        %788 = vmatprep.subr.mxu0 0.0
        %789 = vmatpush1.msra.mxu0 0.0
        %790 = vmatprep.subr.mxu0 0.0
        %791 = vmatpush1.msra.mxu0 0.0
        %792 = vmatprep.subr.mxu0 0.0
        %793 = vmatpush1.msra.mxu0 0.0
        %794 = vmatprep.subr.mxu0 0.0
        %795 = vmatpush1.msra.mxu0 0.0
        %796 = vmatprep.subr.mxu0 0.0
        %797 = vmatpush1.msra.mxu0 0.0
        %798 = vmatprep.subr.mxu0 0.0
        %799 = vmatpush1.msra.mxu0 0.0
        %800 = vmatprep.subr.mxu0 0.0
        %801 = vmatpush1.msra.mxu0 0.0
        %802 = vmatprep.subr.mxu0 0.0
        %803 = vmatpush1.msra.mxu0 0.0
        %804 = vmatprep.subr.mxu0 0.0
        %805 = vmatpush1.msra.mxu0 0.0
        %806 = vmatprep.subr.mxu0 0.0
        %807 = vmatpush1.msra.mxu0 0.0
        %808 = vmatprep.subr.mxu0 0.0
        %809 = vmatpush1.msra.mxu0 0.0
        %810 = vmatprep.subr.mxu0 0.0
        %811 = vmatpush1.msra.mxu0 0.0
        %812 = vmatprep.subr.mxu0 0.0
        %813 = vmatpush1.msra.mxu0 0.0
        %814 = vmatprep.subr.mxu0 0.0
        %815 = vmatpush1.msra.mxu0 0.0
        %816 = vmatprep.subr.mxu0 0.0
        %817 = vmatpush1.msra.mxu0 0.0
        %818 = vmatprep.subr.mxu0 0.0
        %819 = vmatpush1.msra.mxu0 0.0
        %820 = vmatprep.subr.mxu0 0.0
        %821 = vmatpush1.msra.mxu0 0.0
        %822 = vmatprep.subr.mxu0 0.0
        %823 = vmatpush1.msra.mxu0 0.0
        %824 = vmatprep.subr.mxu0 0.0
        %825 = vmatpush1.msra.mxu0 0.0
        %826 = vmatprep.subr.mxu0 0.0
        %827 = vmatpush1.msra.mxu0 0.0
        %828 = vmatprep.subr.mxu0 0.0
        %829 = vmatpush1.msra.mxu0 0.0
        %830 = vmatprep.subr.mxu0 0.0
        %831 = vmatpush1.msra.mxu0 0.0
        %832 = vmatprep.subr.mxu0 0.0
        %833 = vmatpush1.msra.mxu0 0.0
        %834 = vmatprep.subr.mxu0 0.0
        %835 = vmatpush1.msra.mxu0 0.0
        %836 = vmatprep.subr.mxu0 0.0
        %837 = vmatpush1.msra.mxu0 0.0
        %838 = vmatprep.subr.mxu0 0.0
        %839 = vmatpush1.msra.mxu0 0.0
        %840 = vmatprep.subr.mxu0 0.0
        %841 = vmatpush1.msra.mxu0 0.0
        %842 = vmatprep.subr.mxu0 0.0
        %843 = vmatpush1.msra.mxu0 0.0
        %844 = vmatprep.subr.mxu0 0.0
        %845 = vmatpush1.msra.mxu0 0.0
        %846 = vmatprep.mubr.f32.mxu0 0.0
        %847 = vmatmul.mubr.f32.gmra.mrb[0].mxu0 %v759
        %v848 = vpop.f32.mrb[0].mxu0
        %v849 = vadd.f32 0.0, %v848
        %v850 = vpop.f32.mrb[0].mxu0
        %851 = vmatprep.mubr.f32.mxu0 0.0
        %852 = vmatmul.mubr.f32.gmra.mrb[0].mxu0 %v762
        %v853 = vpop.f32.mrb[0].mxu0
        %v854 = vadd.f32 0.0, %v853
        %v855 = vpop.f32.mrb[0].mxu0
        %856 = vmatprep.mubr.f32.mxu0 0.0
        %857 = vmatmul.mubr.f32.gmra.mrb[0].mxu0 %v765
        %v858 = vpop.f32.mrb[0].mxu0
        %v859 = vadd.f32 0.0, %v858
        %v860 = vpop.f32.mrb[0].mxu0
        %861 = vmatprep.mubr.f32.mxu0 0.0
        %862 = vmatmul.mubr.f32.gmra.mrb[0].mxu0 %v768
        %v863 = vpop.f32.mrb[0].mxu0
        %v864 = vadd.f32 0.0, %v863
        %v865 = vpop.f32.mrb[0].mxu0
        %866 = vmatprep.mubr.f32.mxu0 0.0
        %867 = vmatmul.mubr.f32.gmra.mrb[0].mxu0 %v771
        %v868 = vpop.f32.mrb[0].mxu0
        %v869 = vadd.f32 0.0, %v868
        %v870 = vpop.f32.mrb[0].mxu0
        %871 = vmatprep.mubr.f32.mxu0 0.0
        %872 = vmatmul.mubr.f32.gmra.mrb[0].mxu0 %v774
        %v873 = vpop.f32.mrb[0].mxu0
        %v874 = vadd.f32 0.0, %v873
        %v875 = vpop.f32.mrb[0].mxu0
        %876 = vmatprep.mubr.f32.mxu0 0.0
        %877 = vmatmul.mubr.f32.gmra.mrb[0].mxu0 %v777
        %v878 = vpop.f32.mrb[0].mxu0
        %v879 = vadd.f32 0.0, %v878
        %v880 = vpop.f32.mrb[0].mxu0
        %881 = vmatprep.mubr.f32.mxu0 0.0
        %882 = vmatmul.mubr.f32.gmra.mrb[0].mxu0 %v780
        %v883 = vpop.f32.mrb[0].mxu0
        %v884 = vadd.f32 0.0, %v883
        %v885 = vpop.f32.mrb[0].mxu0
        %886 = vdwg.mxu0
        %v888 = vsel %vm537, %v737, 0
        %v891 = vsel %vm537, %v738, 0
        %v894 = vsel %vm537, %v739, 0
        %v897 = vsel %vm537, %v740, 0
        %v900 = vsel %vm537, %v741, 0
        %v903 = vsel %vm537, %v742, 0
        %v906 = vsel %vm537, %v743, 0
        %v909 = vsel %vm537, %v744, 0
        %911 = vmatprep.subr.mxu0 0.0
        %912 = vmatpush1.msra.mxu0 %v745
        %913 = vmatprep.subr.mxu0 0.0
        %914 = vmatpush1.msra.mxu0 %v746
        %915 = vmatprep.subr.mxu0 0.0
        %916 = vmatpush1.msra.mxu0 0.0
        %917 = vmatprep.subr.mxu0 0.0
        %918 = vmatpush1.msra.mxu0 0.0
        %919 = vmatprep.subr.mxu0 0.0
        %920 = vmatpush1.msra.mxu0 0.0
        %921 = vmatprep.subr.mxu0 0.0
        %922 = vmatpush1.msra.mxu0 0.0
        %923 = vmatprep.subr.mxu0 0.0
        %924 = vmatpush1.msra.mxu0 0.0
        %925 = vmatprep.subr.mxu0 0.0
        %926 = vmatpush1.msra.mxu0 0.0
        %927 = vmatprep.subr.mxu0 0.0
        %928 = vmatpush1.msra.mxu0 0.0
        %929 = vmatprep.subr.mxu0 0.0
        %930 = vmatpush1.msra.mxu0 0.0
        %931 = vmatprep.subr.mxu0 0.0
        %932 = vmatpush1.msra.mxu0 0.0
        %933 = vmatprep.subr.mxu0 0.0
        %934 = vmatpush1.msra.mxu0 0.0
        %935 = vmatprep.subr.mxu0 0.0
        %936 = vmatpush1.msra.mxu0 0.0
        %937 = vmatprep.subr.mxu0 0.0
        %938 = vmatpush1.msra.mxu0 0.0
        %939 = vmatprep.subr.mxu0 0.0
        %940 = vmatpush1.msra.mxu0 0.0
        %941 = vmatprep.subr.mxu0 0.0
        %942 = vmatpush1.msra.mxu0 0.0
        %943 = vmatprep.subr.mxu0 0.0
        %944 = vmatpush1.msra.mxu0 0.0
        %945 = vmatprep.subr.mxu0 0.0
        %946 = vmatpush1.msra.mxu0 0.0
        %947 = vmatprep.subr.mxu0 0.0
        %948 = vmatpush1.msra.mxu0 0.0
        %949 = vmatprep.subr.mxu0 0.0
        %950 = vmatpush1.msra.mxu0 0.0
        %951 = vmatprep.subr.mxu0 0.0
        %952 = vmatpush1.msra.mxu0 0.0
        %953 = vmatprep.subr.mxu0 0.0
        %954 = vmatpush1.msra.mxu0 0.0
        %955 = vmatprep.subr.mxu0 0.0
        %956 = vmatpush1.msra.mxu0 0.0
        %957 = vmatprep.subr.mxu0 0.0
        %958 = vmatpush1.msra.mxu0 0.0
        %959 = vmatprep.subr.mxu0 0.0
        %960 = vmatpush1.msra.mxu0 0.0
        %961 = vmatprep.subr.mxu0 0.0
        %962 = vmatpush1.msra.mxu0 0.0
        %963 = vmatprep.subr.mxu0 0.0
        %964 = vmatpush1.msra.mxu0 0.0
        %965 = vmatprep.subr.mxu0 0.0
        %966 = vmatpush1.msra.mxu0 0.0
        %967 = vmatprep.subr.mxu0 0.0
        %968 = vmatpush1.msra.mxu0 0.0
        %969 = vmatprep.subr.mxu0 0.0
        %970 = vmatpush1.msra.mxu0 0.0
        %971 = vmatprep.subr.mxu0 0.0
        %972 = vmatpush1.msra.mxu0 0.0
        %973 = vmatprep.subr.mxu0 0.0
        %974 = vmatpush1.msra.mxu0 0.0
        %975 = vmatprep.mubr.f32.mxu0 0.0
        %976 = vmatmul.mubr.f32.gmra.mrb[0].mxu0 %v888
        %v977 = vpop.f32.mrb[0].mxu0
        %v978 = vadd.f32 %v849, %v977
        %v979 = vpop.f32.mrb[0].mxu0
        %980 = vmatprep.mubr.f32.mxu0 0.0
        %981 = vmatmul.mubr.f32.gmra.mrb[0].mxu0 %v891
        %v982 = vpop.f32.mrb[0].mxu0
        %v983 = vadd.f32 %v854, %v982
        %v984 = vpop.f32.mrb[0].mxu0
        %985 = vmatprep.mubr.f32.mxu0 0.0
        %986 = vmatmul.mubr.f32.gmra.mrb[0].mxu0 %v894
        %v987 = vpop.f32.mrb[0].mxu0
        %v988 = vadd.f32 %v859, %v987
        %v989 = vpop.f32.mrb[0].mxu0
        %990 = vmatprep.mubr.f32.mxu0 0.0
        %991 = vmatmul.mubr.f32.gmra.mrb[0].mxu0 %v897
        %v992 = vpop.f32.mrb[0].mxu0
        %v993 = vadd.f32 %v864, %v992
        %v994 = vpop.f32.mrb[0].mxu0
        %995 = vmatprep.mubr.f32.mxu0 0.0
        %996 = vmatmul.mubr.f32.gmra.mrb[0].mxu0 %v900
        %v997 = vpop.f32.mrb[0].mxu0
        %v998 = vadd.f32 %v869, %v997
        %v999 = vpop.f32.mrb[0].mxu0
        %1000 = vmatprep.mubr.f32.mxu0 0.0
        %1001 = vmatmul.mubr.f32.gmra.mrb[0].mxu0 %v903
        %v1002 = vpop.f32.mrb[0].mxu0
        %v1003 = vadd.f32 %v874, %v1002
        %v1004 = vpop.f32.mrb[0].mxu0
        %1005 = vmatprep.mubr.f32.mxu0 0.0
        %1006 = vmatmul.mubr.f32.gmra.mrb[0].mxu0 %v906
        %v1007 = vpop.f32.mrb[0].mxu0
        %v1008 = vadd.f32 %v879, %v1007
        %v1009 = vpop.f32.mrb[0].mxu0
        %1010 = vmatprep.mubr.f32.mxu0 0.0
        %1011 = vmatmul.mubr.f32.gmra.mrb[0].mxu0 %v909
        %v1012 = vpop.f32.mrb[0].mxu0
        %v1013 = vadd.f32 %v884, %v1012
        %v1014 = vpop.f32.mrb[0].mxu0
        %1015 = vdwg.mxu0
        %v1016 = vld [vmem:[#allocation2 + $0x9] sm:$0xff]
        %v1017 = vld [vmem:[#allocation2 + $0x21] sm:$0xff]
        %v1018 = vld [vmem:[#allocation2 + $0x39] sm:$0xff]
        %v1019 = vld [vmem:[#allocation2 + $0x51] sm:$0xff]
        %v1020 = vld [vmem:[#allocation2 + $0x69] sm:$0xff]
        %v1021 = vld [vmem:[#allocation2 + $0x81] sm:$0xff]
        %v1022 = vld [vmem:[#allocation2 + $0x99] sm:$0xff]
        %v1023 = vld [vmem:[#allocation2 + $0xb1] sm:$0xff]
        %s1024 = scalar_lea.vmem [#allocation7], 32
        %v1025 = vld [vmem:[%s1024] sm:$0xff]
        %v1026 = vld [vmem:[%s1024 + $0x8] sm:$0xff]
        %v1028 = vsel %vm537, %v1016, 0
        %v1031 = vsel %vm537, %v1017, 0
        %v1034 = vsel %vm537, %v1018, 0
        %v1037 = vsel %vm537, %v1019, 0
        %v1040 = vsel %vm537, %v1020, 0
        %v1043 = vsel %vm537, %v1021, 0
        %v1046 = vsel %vm537, %v1022, 0
        %v1049 = vsel %vm537, %v1023, 0
        %1051 = vmatprep.subr.mxu0 0.0
        %1052 = vmatpush1.msra.mxu0 %v1025
        %1053 = vmatprep.subr.mxu0 0.0
        %1054 = vmatpush1.msra.mxu0 %v1026
        %1055 = vmatprep.subr.mxu0 0.0
        %1056 = vmatpush1.msra.mxu0 0.0
        %1057 = vmatprep.subr.mxu0 0.0
        %1058 = vmatpush1.msra.mxu0 0.0
        %1059 = vmatprep.subr.mxu0 0.0
        %1060 = vmatpush1.msra.mxu0 0.0
        %1061 = vmatprep.subr.mxu0 0.0
        %1062 = vmatpush1.msra.mxu0 0.0
        %1063 = vmatprep.subr.mxu0 0.0
        %1064 = vmatpush1.msra.mxu0 0.0
        %1065 = vmatprep.subr.mxu0 0.0
        %1066 = vmatpush1.msra.mxu0 0.0
        %1067 = vmatprep.subr.mxu0 0.0
        %1068 = vmatpush1.msra.mxu0 0.0
        %1069 = vmatprep.subr.mxu0 0.0
        %1070 = vmatpush1.msra.mxu0 0.0
        %1071 = vmatprep.subr.mxu0 0.0
        %1072 = vmatpush1.msra.mxu0 0.0
        %1073 = vmatprep.subr.mxu0 0.0
        %1074 = vmatpush1.msra.mxu0 0.0
        %1075 = vmatprep.subr.mxu0 0.0
        %1076 = vmatpush1.msra.mxu0 0.0
        %1077 = vmatprep.subr.mxu0 0.0
        %1078 = vmatpush1.msra.mxu0 0.0
        %1079 = vmatprep.subr.mxu0 0.0
        %1080 = vmatpush1.msra.mxu0 0.0
        %1081 = vmatprep.subr.mxu0 0.0
        %1082 = vmatpush1.msra.mxu0 0.0
        %1083 = vmatprep.subr.mxu0 0.0
        %1084 = vmatpush1.msra.mxu0 0.0
        %1085 = vmatprep.subr.mxu0 0.0
        %1086 = vmatpush1.msra.mxu0 0.0
        %1087 = vmatprep.subr.mxu0 0.0
        %1088 = vmatpush1.msra.mxu0 0.0
        %1089 = vmatprep.subr.mxu0 0.0
        %1090 = vmatpush1.msra.mxu0 0.0
        %1091 = vmatprep.subr.mxu0 0.0
        %1092 = vmatpush1.msra.mxu0 0.0
        %1093 = vmatprep.subr.mxu0 0.0
        %1094 = vmatpush1.msra.mxu0 0.0
        %1095 = vmatprep.subr.mxu0 0.0
        %1096 = vmatpush1.msra.mxu0 0.0
        %1097 = vmatprep.subr.mxu0 0.0
        %1098 = vmatpush1.msra.mxu0 0.0
        %1099 = vmatprep.subr.mxu0 0.0
        %1100 = vmatpush1.msra.mxu0 0.0
        %1101 = vmatprep.subr.mxu0 0.0
        %1102 = vmatpush1.msra.mxu0 0.0
        %1103 = vmatprep.subr.mxu0 0.0
        %1104 = vmatpush1.msra.mxu0 0.0
        %1105 = vmatprep.subr.mxu0 0.0
        %1106 = vmatpush1.msra.mxu0 0.0
        %1107 = vmatprep.subr.mxu0 0.0
        %1108 = vmatpush1.msra.mxu0 0.0
        %1109 = vmatprep.subr.mxu0 0.0
        %1110 = vmatpush1.msra.mxu0 0.0
        %1111 = vmatprep.subr.mxu0 0.0
        %1112 = vmatpush1.msra.mxu0 0.0
        %1113 = vmatprep.subr.mxu0 0.0
        %1114 = vmatpush1.msra.mxu0 0.0
        %1115 = vmatprep.mubr.f32.mxu0 0.0
        %1116 = vmatmul.mubr.f32.gmra.mrb[0].mxu0 %v1028
        %v1117 = vpop.f32.mrb[0].mxu0
        %v1118 = vadd.f32 0.0, %v1117
        %v1119 = vpop.f32.mrb[0].mxu0
        %1120 = vmatprep.mubr.f32.mxu0 0.0
        %1121 = vmatmul.mubr.f32.gmra.mrb[0].mxu0 %v1031
        %v1122 = vpop.f32.mrb[0].mxu0
        %v1123 = vadd.f32 0.0, %v1122
        %v1124 = vpop.f32.mrb[0].mxu0
        %1125 = vmatprep.mubr.f32.mxu0 0.0
        %1126 = vmatmul.mubr.f32.gmra.mrb[0].mxu0 %v1034
        %v1127 = vpop.f32.mrb[0].mxu0
        %v1128 = vadd.f32 0.0, %v1127
        %v1129 = vpop.f32.mrb[0].mxu0
        %1130 = vmatprep.mubr.f32.mxu0 0.0
        %1131 = vmatmul.mubr.f32.gmra.mrb[0].mxu0 %v1037
        %v1132 = vpop.f32.mrb[0].mxu0
        %v1133 = vadd.f32 0.0, %v1132
        %v1134 = vpop.f32.mrb[0].mxu0
        %1135 = vmatprep.mubr.f32.mxu0 0.0
        %1136 = vmatmul.mubr.f32.gmra.mrb[0].mxu0 %v1040
        %v1137 = vpop.f32.mrb[0].mxu0
        %v1138 = vadd.f32 0.0, %v1137
        %v1139 = vpop.f32.mrb[0].mxu0
        %1140 = vmatprep.mubr.f32.mxu0 0.0
        %1141 = vmatmul.mubr.f32.gmra.mrb[0].mxu0 %v1043
        %v1142 = vpop.f32.mrb[0].mxu0
        %v1143 = vadd.f32 0.0, %v1142
        %v1144 = vpop.f32.mrb[0].mxu0
        %1145 = vmatprep.mubr.f32.mxu0 0.0
        %1146 = vmatmul.mubr.f32.gmra.mrb[0].mxu0 %v1046
        %v1147 = vpop.f32.mrb[0].mxu0
        %v1148 = vadd.f32 0.0, %v1147
        %v1149 = vpop.f32.mrb[0].mxu0
        %1150 = vmatprep.mubr.f32.mxu0 0.0
        %1151 = vmatmul.mubr.f32.gmra.mrb[0].mxu0 %v1049
        %v1152 = vpop.f32.mrb[0].mxu0
        %v1153 = vadd.f32 0.0, %v1152
        %v1154 = vpop.f32.mrb[0].mxu0
        %1155 = vdwg.mxu0
        %v1156 = vadd.f32 %v978, %v1118
        %v1157 = vadd.f32 %v983, %v1123
        %v1158 = vadd.f32 %v988, %v1128
        %v1159 = vadd.f32 %v993, %v1133
        %v1160 = vadd.f32 %v998, %v1138
        %v1161 = vadd.f32 %v1003, %v1143
        %v1162 = vadd.f32 %v1008, %v1148
        %v1163 = vadd.f32 %v1013, %v1153
        %v1164 = vld [vmem:[%s728 + $0x7] sm:$0xff]
        %v1165 = vld [vmem:[%s728 + $0x1f] sm:$0xff]
        %v1166 = vld [vmem:[%s728 + $0x37] sm:$0xff]
        %v1167 = vld [vmem:[%s728 + $0x4f] sm:$0xff]
        %v1168 = vld [vmem:[%s728 + $0x67] sm:$0xff]
        %v1169 = vld [vmem:[%s728 + $0x7f] sm:$0xff]
        %v1170 = vld [vmem:[%s728 + $0x97] sm:$0xff]
        %v1171 = vld [vmem:[%s728 + $0xaf] sm:$0xff]
        %s1172 = scalar_lea.vmem [#allocation7], 48
        %v1173 = vld [vmem:[%s1172] sm:$0xff]
        %v1174 = vld [vmem:[%s1172 + $0x8] sm:$0xff]
        %v1176 = vsel %vm537, %v1164, 0
        %v1179 = vsel %vm537, %v1165, 0
        %v1182 = vsel %vm537, %v1166, 0
        %v1185 = vsel %vm537, %v1167, 0
        %v1188 = vsel %vm537, %v1168, 0
        %v1191 = vsel %vm537, %v1169, 0
        %v1194 = vsel %vm537, %v1170, 0
        %v1197 = vsel %vm537, %v1171, 0
        %1199 = vmatprep.subr.mxu0 0.0
        %1200 = vmatpush1.msra.mxu0 %v1173
        %1201 = vmatprep.subr.mxu0 0.0
        %1202 = vmatpush1.msra.mxu0 %v1174
        %1203 = vmatprep.subr.mxu0 0.0
        %1204 = vmatpush1.msra.mxu0 0.0
        %1205 = vmatprep.subr.mxu0 0.0
        %1206 = vmatpush1.msra.mxu0 0.0
        %1207 = vmatprep.subr.mxu0 0.0
        %1208 = vmatpush1.msra.mxu0 0.0
        %1209 = vmatprep.subr.mxu0 0.0
        %1210 = vmatpush1.msra.mxu0 0.0
        %1211 = vmatprep.subr.mxu0 0.0
        %1212 = vmatpush1.msra.mxu0 0.0
        %1213 = vmatprep.subr.mxu0 0.0
        %1214 = vmatpush1.msra.mxu0 0.0
        %1215 = vmatprep.subr.mxu0 0.0
        %1216 = vmatpush1.msra.mxu0 0.0
        %1217 = vmatprep.subr.mxu0 0.0
        %1218 = vmatpush1.msra.mxu0 0.0
        %1219 = vmatprep.subr.mxu0 0.0
        %1220 = vmatpush1.msra.mxu0 0.0
        %1221 = vmatprep.subr.mxu0 0.0
        %1222 = vmatpush1.msra.mxu0 0.0
        %1223 = vmatprep.subr.mxu0 0.0
        %1224 = vmatpush1.msra.mxu0 0.0
        %1225 = vmatprep.subr.mxu0 0.0
        %1226 = vmatpush1.msra.mxu0 0.0
        %1227 = vmatprep.subr.mxu0 0.0
        %1228 = vmatpush1.msra.mxu0 0.0
        %1229 = vmatprep.subr.mxu0 0.0
        %1230 = vmatpush1.msra.mxu0 0.0
        %1231 = vmatprep.subr.mxu0 0.0
        %1232 = vmatpush1.msra.mxu0 0.0
        %1233 = vmatprep.subr.mxu0 0.0
        %1234 = vmatpush1.msra.mxu0 0.0
        %1235 = vmatprep.subr.mxu0 0.0
        %1236 = vmatpush1.msra.mxu0 0.0
        %1237 = vmatprep.subr.mxu0 0.0
        %1238 = vmatpush1.msra.mxu0 0.0
        %1239 = vmatprep.subr.mxu0 0.0
        %1240 = vmatpush1.msra.mxu0 0.0
        %1241 = vmatprep.subr.mxu0 0.0
        %1242 = vmatpush1.msra.mxu0 0.0
        %1243 = vmatprep.subr.mxu0 0.0
        %1244 = vmatpush1.msra.mxu0 0.0
        %1245 = vmatprep.subr.mxu0 0.0
        %1246 = vmatpush1.msra.mxu0 0.0
        %1247 = vmatprep.subr.mxu0 0.0
        %1248 = vmatpush1.msra.mxu0 0.0
        %1249 = vmatprep.subr.mxu0 0.0
        %1250 = vmatpush1.msra.mxu0 0.0
        %1251 = vmatprep.subr.mxu0 0.0
        %1252 = vmatpush1.msra.mxu0 0.0
        %1253 = vmatprep.subr.mxu0 0.0
        %1254 = vmatpush1.msra.mxu0 0.0
        %1255 = vmatprep.subr.mxu0 0.0
        %1256 = vmatpush1.msra.mxu0 0.0
        %1257 = vmatprep.subr.mxu0 0.0
        %1258 = vmatpush1.msra.mxu0 0.0
        %1259 = vmatprep.subr.mxu0 0.0
        %1260 = vmatpush1.msra.mxu0 0.0
        %1261 = vmatprep.subr.mxu0 0.0
        %1262 = vmatpush1.msra.mxu0 0.0
        %1263 = vmatprep.mubr.f32.mxu0 0.0
        %1264 = vmatmul.mubr.f32.gmra.mrb[0].mxu0 %v1176
        %v1265 = vpop.f32.mrb[0].mxu0
        %v1266 = vadd.f32 0.0, %v1265
        %v1267 = vpop.f32.mrb[0].mxu0
        %1268 = vmatprep.mubr.f32.mxu0 0.0
        %1269 = vmatmul.mubr.f32.gmra.mrb[0].mxu0 %v1179
        %v1270 = vpop.f32.mrb[0].mxu0
        %v1271 = vadd.f32 0.0, %v1270
        %v1272 = vpop.f32.mrb[0].mxu0
        %1273 = vmatprep.mubr.f32.mxu0 0.0
        %1274 = vmatmul.mubr.f32.gmra.mrb[0].mxu0 %v1182
        %v1275 = vpop.f32.mrb[0].mxu0
        %v1276 = vadd.f32 0.0, %v1275
        %v1277 = vpop.f32.mrb[0].mxu0
        %1278 = vmatprep.mubr.f32.mxu0 0.0
        %1279 = vmatmul.mubr.f32.gmra.mrb[0].mxu0 %v1185
        %v1280 = vpop.f32.mrb[0].mxu0
        %v1281 = vadd.f32 0.0, %v1280
        %v1282 = vpop.f32.mrb[0].mxu0
        %1283 = vmatprep.mubr.f32.mxu0 0.0
        %1284 = vmatmul.mubr.f32.gmra.mrb[0].mxu0 %v1188
        %v1285 = vpop.f32.mrb[0].mxu0
        %v1286 = vadd.f32 0.0, %v1285
        %v1287 = vpop.f32.mrb[0].mxu0
        %1288 = vmatprep.mubr.f32.mxu0 0.0
        %1289 = vmatmul.mubr.f32.gmra.mrb[0].mxu0 %v1191
        %v1290 = vpop.f32.mrb[0].mxu0
        %v1291 = vadd.f32 0.0, %v1290
        %v1292 = vpop.f32.mrb[0].mxu0
        %1293 = vmatprep.mubr.f32.mxu0 0.0
        %1294 = vmatmul.mubr.f32.gmra.mrb[0].mxu0 %v1194
        %v1295 = vpop.f32.mrb[0].mxu0
        %v1296 = vadd.f32 0.0, %v1295
        %v1297 = vpop.f32.mrb[0].mxu0
        %1298 = vmatprep.mubr.f32.mxu0 0.0
        %1299 = vmatmul.mubr.f32.gmra.mrb[0].mxu0 %v1197
        %v1300 = vpop.f32.mrb[0].mxu0
        %v1301 = vadd.f32 0.0, %v1300
        %v1302 = vpop.f32.mrb[0].mxu0
        %1303 = vdwg.mxu0
        %v1304 = vadd.f32 %v1156, %v1266
        %v1305 = vadd.f32 %v1157, %v1271
        %v1306 = vadd.f32 %v1158, %v1276
        %v1307 = vadd.f32 %v1159, %v1281
        %v1308 = vadd.f32 %v1160, %v1286
        %v1309 = vadd.f32 %v1161, %v1291
        %v1310 = vadd.f32 %v1162, %v1296
        %v1311 = vadd.f32 %v1163, %v1301
        %v1312 = vld [vmem:[%s728 + $0x8] sm:$0xff]
        %v1313 = vld [vmem:[%s728 + $0x20] sm:$0xff]
        %v1314 = vld [vmem:[%s728 + $0x38] sm:$0xff]
        %v1315 = vld [vmem:[%s728 + $0x50] sm:$0xff]
        %v1316 = vld [vmem:[%s728 + $0x68] sm:$0xff]
        %v1317 = vld [vmem:[%s728 + $0x80] sm:$0xff]
        %v1318 = vld [vmem:[%s728 + $0x98] sm:$0xff]
        %v1319 = vld [vmem:[%s728 + $0xb0] sm:$0xff]
        %s1320 = scalar_lea.vmem [#allocation7], 64
        %v1321 = vld [vmem:[%s1320] sm:$0xff]
        %v1322 = vld [vmem:[%s1320 + $0x8] sm:$0xff]
        %v1324 = vsel %vm537, %v1312, 0
        %v1327 = vsel %vm537, %v1313, 0
        %v1330 = vsel %vm537, %v1314, 0
        %v1333 = vsel %vm537, %v1315, 0
        %v1336 = vsel %vm537, %v1316, 0
        %v1339 = vsel %vm537, %v1317, 0
        %v1342 = vsel %vm537, %v1318, 0
        %v1345 = vsel %vm537, %v1319, 0
        %1347 = vmatprep.subr.mxu0 0.0
        %1348 = vmatpush1.msra.mxu0 %v1321
        %1349 = vmatprep.subr.mxu0 0.0
        %1350 = vmatpush1.msra.mxu0 %v1322
        %1351 = vmatprep.subr.mxu0 0.0
        %1352 = vmatpush1.msra.mxu0 0.0
        %1353 = vmatprep.subr.mxu0 0.0
        %1354 = vmatpush1.msra.mxu0 0.0
        %1355 = vmatprep.subr.mxu0 0.0
        %1356 = vmatpush1.msra.mxu0 0.0
        %1357 = vmatprep.subr.mxu0 0.0
        %1358 = vmatpush1.msra.mxu0 0.0
        %1359 = vmatprep.subr.mxu0 0.0
        %1360 = vmatpush1.msra.mxu0 0.0
        %1361 = vmatprep.subr.mxu0 0.0
        %1362 = vmatpush1.msra.mxu0 0.0
        %1363 = vmatprep.subr.mxu0 0.0
        %1364 = vmatpush1.msra.mxu0 0.0
        %1365 = vmatprep.subr.mxu0 0.0
        %1366 = vmatpush1.msra.mxu0 0.0
        %1367 = vmatprep.subr.mxu0 0.0
        %1368 = vmatpush1.msra.mxu0 0.0
        %1369 = vmatprep.subr.mxu0 0.0
        %1370 = vmatpush1.msra.mxu0 0.0
        %1371 = vmatprep.subr.mxu0 0.0
        %1372 = vmatpush1.msra.mxu0 0.0
        %1373 = vmatprep.subr.mxu0 0.0
        %1374 = vmatpush1.msra.mxu0 0.0
        %1375 = vmatprep.subr.mxu0 0.0
        %1376 = vmatpush1.msra.mxu0 0.0
        %1377 = vmatprep.subr.mxu0 0.0
        %1378 = vmatpush1.msra.mxu0 0.0
        %1379 = vmatprep.subr.mxu0 0.0
        %1380 = vmatpush1.msra.mxu0 0.0
        %1381 = vmatprep.subr.mxu0 0.0
        %1382 = vmatpush1.msra.mxu0 0.0
        %1383 = vmatprep.subr.mxu0 0.0
        %1384 = vmatpush1.msra.mxu0 0.0
        %1385 = vmatprep.subr.mxu0 0.0
        %1386 = vmatpush1.msra.mxu0 0.0
        %1387 = vmatprep.subr.mxu0 0.0
        %1388 = vmatpush1.msra.mxu0 0.0
        %1389 = vmatprep.subr.mxu0 0.0
        %1390 = vmatpush1.msra.mxu0 0.0
        %1391 = vmatprep.subr.mxu0 0.0
        %1392 = vmatpush1.msra.mxu0 0.0
        %1393 = vmatprep.subr.mxu0 0.0
        %1394 = vmatpush1.msra.mxu0 0.0
        %1395 = vmatprep.subr.mxu0 0.0
        %1396 = vmatpush1.msra.mxu0 0.0
        %1397 = vmatprep.subr.mxu0 0.0
        %1398 = vmatpush1.msra.mxu0 0.0
        %1399 = vmatprep.subr.mxu0 0.0
        %1400 = vmatpush1.msra.mxu0 0.0
        %1401 = vmatprep.subr.mxu0 0.0
        %1402 = vmatpush1.msra.mxu0 0.0
        %1403 = vmatprep.subr.mxu0 0.0
        %1404 = vmatpush1.msra.mxu0 0.0
        %1405 = vmatprep.subr.mxu0 0.0
        %1406 = vmatpush1.msra.mxu0 0.0
        %1407 = vmatprep.subr.mxu0 0.0
        %1408 = vmatpush1.msra.mxu0 0.0
        %1409 = vmatprep.subr.mxu0 0.0
        %1410 = vmatpush1.msra.mxu0 0.0
        %1411 = vmatprep.mubr.f32.mxu0 0.0
        %1412 = vmatmul.mubr.f32.gmra.mrb[0].mxu0 %v1324
        %v1413 = vpop.f32.mrb[0].mxu0
        %v1414 = vadd.f32 0.0, %v1413
        %v1415 = vpop.f32.mrb[0].mxu0
        %1416 = vmatprep.mubr.f32.mxu0 0.0
        %1417 = vmatmul.mubr.f32.gmra.mrb[0].mxu0 %v1327
        %v1418 = vpop.f32.mrb[0].mxu0
        %v1419 = vadd.f32 0.0, %v1418
        %v1420 = vpop.f32.mrb[0].mxu0
        %1421 = vmatprep.mubr.f32.mxu0 0.0
        %1422 = vmatmul.mubr.f32.gmra.mrb[0].mxu0 %v1330
        %v1423 = vpop.f32.mrb[0].mxu0
        %v1424 = vadd.f32 0.0, %v1423
        %v1425 = vpop.f32.mrb[0].mxu0
        %1426 = vmatprep.mubr.f32.mxu0 0.0
        %1427 = vmatmul.mubr.f32.gmra.mrb[0].mxu0 %v1333
        %v1428 = vpop.f32.mrb[0].mxu0
        %v1429 = vadd.f32 0.0, %v1428
        %v1430 = vpop.f32.mrb[0].mxu0
        %1431 = vmatprep.mubr.f32.mxu0 0.0
        %1432 = vmatmul.mubr.f32.gmra.mrb[0].mxu0 %v1336
        %v1433 = vpop.f32.mrb[0].mxu0
        %v1434 = vadd.f32 0.0, %v1433
        %v1435 = vpop.f32.mrb[0].mxu0
        %1436 = vmatprep.mubr.f32.mxu0 0.0
        %1437 = vmatmul.mubr.f32.gmra.mrb[0].mxu0 %v1339
        %v1438 = vpop.f32.mrb[0].mxu0
        %v1439 = vadd.f32 0.0, %v1438
        %v1440 = vpop.f32.mrb[0].mxu0
        %1441 = vmatprep.mubr.f32.mxu0 0.0
        %1442 = vmatmul.mubr.f32.gmra.mrb[0].mxu0 %v1342
        %v1443 = vpop.f32.mrb[0].mxu0
        %v1444 = vadd.f32 0.0, %v1443
        %v1445 = vpop.f32.mrb[0].mxu0
        %1446 = vmatprep.mubr.f32.mxu0 0.0
        %1447 = vmatmul.mubr.f32.gmra.mrb[0].mxu0 %v1345
        %v1448 = vpop.f32.mrb[0].mxu0
        %v1449 = vadd.f32 0.0, %v1448
        %v1450 = vpop.f32.mrb[0].mxu0
        %1451 = vdwg.mxu0
        %v1452 = vadd.f32 %v1304, %v1414
        %v1453 = vadd.f32 %v1305, %v1419
        %v1454 = vadd.f32 %v1306, %v1424
        %v1455 = vadd.f32 %v1307, %v1429
        %v1456 = vadd.f32 %v1308, %v1434
        %v1457 = vadd.f32 %v1309, %v1439
        %v1458 = vadd.f32 %v1310, %v1444
        %v1459 = vadd.f32 %v1311, %v1449
        %v1460 = vld [vmem:[%s728 + $0x9] sm:$0xff]
        %v1461 = vld [vmem:[%s728 + $0x21] sm:$0xff]
        %v1462 = vld [vmem:[%s728 + $0x39] sm:$0xff]
        %v1463 = vld [vmem:[%s728 + $0x51] sm:$0xff]
        %v1464 = vld [vmem:[%s728 + $0x69] sm:$0xff]
        %v1465 = vld [vmem:[%s728 + $0x81] sm:$0xff]
        %v1466 = vld [vmem:[%s728 + $0x99] sm:$0xff]
        %v1467 = vld [vmem:[%s728 + $0xb1] sm:$0xff]
        %s1468 = scalar_lea.vmem [#allocation7], 80
        %v1469 = vld [vmem:[%s1468] sm:$0xff]
        %v1470 = vld [vmem:[%s1468 + $0x8] sm:$0xff]
        %v1472 = vsel %vm537, %v1460, 0
        %v1475 = vsel %vm537, %v1461, 0
        %v1478 = vsel %vm537, %v1462, 0
        %v1481 = vsel %vm537, %v1463, 0
        %v1484 = vsel %vm537, %v1464, 0
        %v1487 = vsel %vm537, %v1465, 0
        %v1490 = vsel %vm537, %v1466, 0
        %v1493 = vsel %vm537, %v1467, 0
        %1495 = vmatprep.subr.mxu0 0.0
        %1496 = vmatpush1.msra.mxu0 %v1469
        %1497 = vmatprep.subr.mxu0 0.0
        %1498 = vmatpush1.msra.mxu0 %v1470
        %1499 = vmatprep.subr.mxu0 0.0
        %1500 = vmatpush1.msra.mxu0 0.0
        %1501 = vmatprep.subr.mxu0 0.0
        %1502 = vmatpush1.msra.mxu0 0.0
        %1503 = vmatprep.subr.mxu0 0.0
        %1504 = vmatpush1.msra.mxu0 0.0
        %1505 = vmatprep.subr.mxu0 0.0
        %1506 = vmatpush1.msra.mxu0 0.0
        %1507 = vmatprep.subr.mxu0 0.0
        %1508 = vmatpush1.msra.mxu0 0.0
        %1509 = vmatprep.subr.mxu0 0.0
        %1510 = vmatpush1.msra.mxu0 0.0
        %1511 = vmatprep.subr.mxu0 0.0
        %1512 = vmatpush1.msra.mxu0 0.0
        %1513 = vmatprep.subr.mxu0 0.0
        %1514 = vmatpush1.msra.mxu0 0.0
        %1515 = vmatprep.subr.mxu0 0.0
        %1516 = vmatpush1.msra.mxu0 0.0
        %1517 = vmatprep.subr.mxu0 0.0
        %1518 = vmatpush1.msra.mxu0 0.0
        %1519 = vmatprep.subr.mxu0 0.0
        %1520 = vmatpush1.msra.mxu0 0.0
        %1521 = vmatprep.subr.mxu0 0.0
        %1522 = vmatpush1.msra.mxu0 0.0
        %1523 = vmatprep.subr.mxu0 0.0
        %1524 = vmatpush1.msra.mxu0 0.0
        %1525 = vmatprep.subr.mxu0 0.0
        %1526 = vmatpush1.msra.mxu0 0.0
        %1527 = vmatprep.subr.mxu0 0.0
        %1528 = vmatpush1.msra.mxu0 0.0
        %1529 = vmatprep.subr.mxu0 0.0
        %1530 = vmatpush1.msra.mxu0 0.0
        %1531 = vmatprep.subr.mxu0 0.0
        %1532 = vmatpush1.msra.mxu0 0.0
        %1533 = vmatprep.subr.mxu0 0.0
        %1534 = vmatpush1.msra.mxu0 0.0
        %1535 = vmatprep.subr.mxu0 0.0
        %1536 = vmatpush1.msra.mxu0 0.0
        %1537 = vmatprep.subr.mxu0 0.0
        %1538 = vmatpush1.msra.mxu0 0.0
        %1539 = vmatprep.subr.mxu0 0.0
        %1540 = vmatpush1.msra.mxu0 0.0
        %1541 = vmatprep.subr.mxu0 0.0
        %1542 = vmatpush1.msra.mxu0 0.0
        %1543 = vmatprep.subr.mxu0 0.0
        %1544 = vmatpush1.msra.mxu0 0.0
        %1545 = vmatprep.subr.mxu0 0.0
        %1546 = vmatpush1.msra.mxu0 0.0
        %1547 = vmatprep.subr.mxu0 0.0
        %1548 = vmatpush1.msra.mxu0 0.0
        %1549 = vmatprep.subr.mxu0 0.0
        %1550 = vmatpush1.msra.mxu0 0.0
        %1551 = vmatprep.subr.mxu0 0.0
        %1552 = vmatpush1.msra.mxu0 0.0
        %1553 = vmatprep.subr.mxu0 0.0
        %1554 = vmatpush1.msra.mxu0 0.0
        %1555 = vmatprep.subr.mxu0 0.0
        %1556 = vmatpush1.msra.mxu0 0.0
        %1557 = vmatprep.subr.mxu0 0.0
        %1558 = vmatpush1.msra.mxu0 0.0
        %1559 = vmatprep.mubr.f32.mxu0 0.0
        %1560 = vmatmul.mubr.f32.gmra.mrb[0].mxu0 %v1472
        %v1561 = vpop.f32.mrb[0].mxu0
        %v1562 = vadd.f32 0.0, %v1561
        %v1563 = vpop.f32.mrb[0].mxu0
        %1564 = vmatprep.mubr.f32.mxu0 0.0
        %1565 = vmatmul.mubr.f32.gmra.mrb[0].mxu0 %v1475
        %v1566 = vpop.f32.mrb[0].mxu0
        %v1567 = vadd.f32 0.0, %v1566
        %v1568 = vpop.f32.mrb[0].mxu0
        %1569 = vmatprep.mubr.f32.mxu0 0.0
        %1570 = vmatmul.mubr.f32.gmra.mrb[0].mxu0 %v1478
        %v1571 = vpop.f32.mrb[0].mxu0
        %v1572 = vadd.f32 0.0, %v1571
        %v1573 = vpop.f32.mrb[0].mxu0
        %1574 = vmatprep.mubr.f32.mxu0 0.0
        %1575 = vmatmul.mubr.f32.gmra.mrb[0].mxu0 %v1481
        %v1576 = vpop.f32.mrb[0].mxu0
        %v1577 = vadd.f32 0.0, %v1576
        %v1578 = vpop.f32.mrb[0].mxu0
        %1579 = vmatprep.mubr.f32.mxu0 0.0
        %1580 = vmatmul.mubr.f32.gmra.mrb[0].mxu0 %v1484
        %v1581 = vpop.f32.mrb[0].mxu0
        %v1582 = vadd.f32 0.0, %v1581
        %v1583 = vpop.f32.mrb[0].mxu0
        %1584 = vmatprep.mubr.f32.mxu0 0.0
        %1585 = vmatmul.mubr.f32.gmra.mrb[0].mxu0 %v1487
        %v1586 = vpop.f32.mrb[0].mxu0
        %v1587 = vadd.f32 0.0, %v1586
        %v1588 = vpop.f32.mrb[0].mxu0
        %1589 = vmatprep.mubr.f32.mxu0 0.0
        %1590 = vmatmul.mubr.f32.gmra.mrb[0].mxu0 %v1490
        %v1591 = vpop.f32.mrb[0].mxu0
        %v1592 = vadd.f32 0.0, %v1591
        %v1593 = vpop.f32.mrb[0].mxu0
        %1594 = vmatprep.mubr.f32.mxu0 0.0
        %1595 = vmatmul.mubr.f32.gmra.mrb[0].mxu0 %v1493
        %v1596 = vpop.f32.mrb[0].mxu0
        %v1597 = vadd.f32 0.0, %v1596
        %v1598 = vpop.f32.mrb[0].mxu0
        %1599 = vdwg.mxu0
        %v1600 = vadd.f32 %v1452, %v1562
        %v1601 = vadd.f32 %v1453, %v1567
        %v1602 = vadd.f32 %v1454, %v1572
        %v1603 = vadd.f32 %v1455, %v1577
        %v1604 = vadd.f32 %v1456, %v1582
        %v1605 = vadd.f32 %v1457, %v1587
        %v1606 = vadd.f32 %v1458, %v1592
        %v1607 = vadd.f32 %v1459, %v1597
        %s1608 = scalar_lea.vmem [#allocation2], 48
        %v1609 = vld [vmem:[%s1608 + $0x7] sm:$0xff]
        %v1610 = vld [vmem:[%s1608 + $0x1f] sm:$0xff]
        %v1611 = vld [vmem:[%s1608 + $0x37] sm:$0xff]
        %v1612 = vld [vmem:[%s1608 + $0x4f] sm:$0xff]
        %v1613 = vld [vmem:[%s1608 + $0x67] sm:$0xff]
        %v1614 = vld [vmem:[%s1608 + $0x7f] sm:$0xff]
        %v1615 = vld [vmem:[%s1608 + $0x97] sm:$0xff]
        %v1616 = vld [vmem:[%s1608 + $0xaf] sm:$0xff]
        %s1617 = scalar_lea.vmem [#allocation7], 96
        %v1618 = vld [vmem:[%s1617] sm:$0xff]
        %v1619 = vld [vmem:[%s1617 + $0x8] sm:$0xff]
        %v1621 = vsel %vm537, %v1609, 0
        %v1624 = vsel %vm537, %v1610, 0
        %v1627 = vsel %vm537, %v1611, 0
        %v1630 = vsel %vm537, %v1612, 0
        %v1633 = vsel %vm537, %v1613, 0
        %v1636 = vsel %vm537, %v1614, 0
        %v1639 = vsel %vm537, %v1615, 0
        %v1642 = vsel %vm537, %v1616, 0
        %1644 = vmatprep.subr.mxu0 0.0
        %1645 = vmatpush1.msra.mxu0 %v1618
        %1646 = vmatprep.subr.mxu0 0.0
        %1647 = vmatpush1.msra.mxu0 %v1619
        %1648 = vmatprep.subr.mxu0 0.0
        %1649 = vmatpush1.msra.mxu0 0.0
        %1650 = vmatprep.subr.mxu0 0.0
        %1651 = vmatpush1.msra.mxu0 0.0
        %1652 = vmatprep.subr.mxu0 0.0
        %1653 = vmatpush1.msra.mxu0 0.0
        %1654 = vmatprep.subr.mxu0 0.0
        %1655 = vmatpush1.msra.mxu0 0.0
        %1656 = vmatprep.subr.mxu0 0.0
        %1657 = vmatpush1.msra.mxu0 0.0
        %1658 = vmatprep.subr.mxu0 0.0
        %1659 = vmatpush1.msra.mxu0 0.0
        %1660 = vmatprep.subr.mxu0 0.0
        %1661 = vmatpush1.msra.mxu0 0.0
        %1662 = vmatprep.subr.mxu0 0.0
        %1663 = vmatpush1.msra.mxu0 0.0
        %1664 = vmatprep.subr.mxu0 0.0
        %1665 = vmatpush1.msra.mxu0 0.0
        %1666 = vmatprep.subr.mxu0 0.0
        %1667 = vmatpush1.msra.mxu0 0.0
        %1668 = vmatprep.subr.mxu0 0.0
        %1669 = vmatpush1.msra.mxu0 0.0
        %1670 = vmatprep.subr.mxu0 0.0
        %1671 = vmatpush1.msra.mxu0 0.0
        %1672 = vmatprep.subr.mxu0 0.0
        %1673 = vmatpush1.msra.mxu0 0.0
        %1674 = vmatprep.subr.mxu0 0.0
        %1675 = vmatpush1.msra.mxu0 0.0
        %1676 = vmatprep.subr.mxu0 0.0
        %1677 = vmatpush1.msra.mxu0 0.0
        %1678 = vmatprep.subr.mxu0 0.0
        %1679 = vmatpush1.msra.mxu0 0.0
        %1680 = vmatprep.subr.mxu0 0.0
        %1681 = vmatpush1.msra.mxu0 0.0
        %1682 = vmatprep.subr.mxu0 0.0
        %1683 = vmatpush1.msra.mxu0 0.0
        %1684 = vmatprep.subr.mxu0 0.0
        %1685 = vmatpush1.msra.mxu0 0.0
        %1686 = vmatprep.subr.mxu0 0.0
        %1687 = vmatpush1.msra.mxu0 0.0
        %1688 = vmatprep.subr.mxu0 0.0
        %1689 = vmatpush1.msra.mxu0 0.0
        %1690 = vmatprep.subr.mxu0 0.0
        %1691 = vmatpush1.msra.mxu0 0.0
        %1692 = vmatprep.subr.mxu0 0.0
        %1693 = vmatpush1.msra.mxu0 0.0
        %1694 = vmatprep.subr.mxu0 0.0
        %1695 = vmatpush1.msra.mxu0 0.0
        %1696 = vmatprep.subr.mxu0 0.0
        %1697 = vmatpush1.msra.mxu0 0.0
        %1698 = vmatprep.subr.mxu0 0.0
        %1699 = vmatpush1.msra.mxu0 0.0
        %1700 = vmatprep.subr.mxu0 0.0
        %1701 = vmatpush1.msra.mxu0 0.0
        %1702 = vmatprep.subr.mxu0 0.0
        %1703 = vmatpush1.msra.mxu0 0.0
        %1704 = vmatprep.subr.mxu0 0.0
        %1705 = vmatpush1.msra.mxu0 0.0
        %1706 = vmatprep.subr.mxu0 0.0
        %1707 = vmatpush1.msra.mxu0 0.0
        %1708 = vmatprep.mubr.f32.mxu0 0.0
        %1709 = vmatmul.mubr.f32.gmra.mrb[0].mxu0 %v1621
        %v1710 = vpop.f32.mrb[0].mxu0
        %v1711 = vadd.f32 0.0, %v1710
        %v1712 = vpop.f32.mrb[0].mxu0
        %1713 = vmatprep.mubr.f32.mxu0 0.0
        %1714 = vmatmul.mubr.f32.gmra.mrb[0].mxu0 %v1624
        %v1715 = vpop.f32.mrb[0].mxu0
        %v1716 = vadd.f32 0.0, %v1715
        %v1717 = vpop.f32.mrb[0].mxu0
        %1718 = vmatprep.mubr.f32.mxu0 0.0
        %1719 = vmatmul.mubr.f32.gmra.mrb[0].mxu0 %v1627
        %v1720 = vpop.f32.mrb[0].mxu0
        %v1721 = vadd.f32 0.0, %v1720
        %v1722 = vpop.f32.mrb[0].mxu0
        %1723 = vmatprep.mubr.f32.mxu0 0.0
        %1724 = vmatmul.mubr.f32.gmra.mrb[0].mxu0 %v1630
        %v1725 = vpop.f32.mrb[0].mxu0
        %v1726 = vadd.f32 0.0, %v1725
        %v1727 = vpop.f32.mrb[0].mxu0
        %1728 = vmatprep.mubr.f32.mxu0 0.0
        %1729 = vmatmul.mubr.f32.gmra.mrb[0].mxu0 %v1633
        %v1730 = vpop.f32.mrb[0].mxu0
        %v1731 = vadd.f32 0.0, %v1730
        %v1732 = vpop.f32.mrb[0].mxu0
        %1733 = vmatprep.mubr.f32.mxu0 0.0
        %1734 = vmatmul.mubr.f32.gmra.mrb[0].mxu0 %v1636
        %v1735 = vpop.f32.mrb[0].mxu0
        %v1736 = vadd.f32 0.0, %v1735
        %v1737 = vpop.f32.mrb[0].mxu0
        %1738 = vmatprep.mubr.f32.mxu0 0.0
        %1739 = vmatmul.mubr.f32.gmra.mrb[0].mxu0 %v1639
        %v1740 = vpop.f32.mrb[0].mxu0
        %v1741 = vadd.f32 0.0, %v1740
        %v1742 = vpop.f32.mrb[0].mxu0
        %1743 = vmatprep.mubr.f32.mxu0 0.0
        %1744 = vmatmul.mubr.f32.gmra.mrb[0].mxu0 %v1642
        %v1745 = vpop.f32.mrb[0].mxu0
        %v1746 = vadd.f32 0.0, %v1745
        %v1747 = vpop.f32.mrb[0].mxu0
        %1748 = vdwg.mxu0
        %v1749 = vadd.f32 %v1600, %v1711
        %v1750 = vadd.f32 %v1601, %v1716
        %v1751 = vadd.f32 %v1602, %v1721
        %v1752 = vadd.f32 %v1603, %v1726
        %v1753 = vadd.f32 %v1604, %v1731
        %v1754 = vadd.f32 %v1605, %v1736
        %v1755 = vadd.f32 %v1606, %v1741
        %v1756 = vadd.f32 %v1607, %v1746
        %v1757 = vld [vmem:[%s1608 + $0x8] sm:$0xff]
        %v1758 = vld [vmem:[%s1608 + $0x20] sm:$0xff]
        %v1759 = vld [vmem:[%s1608 + $0x38] sm:$0xff]
        %v1760 = vld [vmem:[%s1608 + $0x50] sm:$0xff]
        %v1761 = vld [vmem:[%s1608 + $0x68] sm:$0xff]
        %v1762 = vld [vmem:[%s1608 + $0x80] sm:$0xff]
        %v1763 = vld [vmem:[%s1608 + $0x98] sm:$0xff]
        %v1764 = vld [vmem:[%s1608 + $0xb0] sm:$0xff]
        %s1765 = scalar_lea.vmem [#allocation7], 112
        %v1766 = vld [vmem:[%s1765] sm:$0xff]
        %v1767 = vld [vmem:[%s1765 + $0x8] sm:$0xff]
        %v1769 = vsel %vm537, %v1757, 0
        %v1772 = vsel %vm537, %v1758, 0
        %v1775 = vsel %vm537, %v1759, 0
        %v1778 = vsel %vm537, %v1760, 0
        %v1781 = vsel %vm537, %v1761, 0
        %v1784 = vsel %vm537, %v1762, 0
        %v1787 = vsel %vm537, %v1763, 0
        %v1790 = vsel %vm537, %v1764, 0
        %1792 = vmatprep.subr.mxu0 0.0
        %1793 = vmatpush1.msra.mxu0 %v1766
        %1794 = vmatprep.subr.mxu0 0.0
        %1795 = vmatpush1.msra.mxu0 %v1767
        %1796 = vmatprep.subr.mxu0 0.0
        %1797 = vmatpush1.msra.mxu0 0.0
        %1798 = vmatprep.subr.mxu0 0.0
        %1799 = vmatpush1.msra.mxu0 0.0
        %1800 = vmatprep.subr.mxu0 0.0
        %1801 = vmatpush1.msra.mxu0 0.0
        %1802 = vmatprep.subr.mxu0 0.0
        %1803 = vmatpush1.msra.mxu0 0.0
        %1804 = vmatprep.subr.mxu0 0.0
        %1805 = vmatpush1.msra.mxu0 0.0
        %1806 = vmatprep.subr.mxu0 0.0
        %1807 = vmatpush1.msra.mxu0 0.0
        %1808 = vmatprep.subr.mxu0 0.0
        %1809 = vmatpush1.msra.mxu0 0.0
        %1810 = vmatprep.subr.mxu0 0.0
        %1811 = vmatpush1.msra.mxu0 0.0
        %1812 = vmatprep.subr.mxu0 0.0
        %1813 = vmatpush1.msra.mxu0 0.0
        %1814 = vmatprep.subr.mxu0 0.0
        %1815 = vmatpush1.msra.mxu0 0.0
        %1816 = vmatprep.subr.mxu0 0.0
        %1817 = vmatpush1.msra.mxu0 0.0
        %1818 = vmatprep.subr.mxu0 0.0
        %1819 = vmatpush1.msra.mxu0 0.0
        %1820 = vmatprep.subr.mxu0 0.0
        %1821 = vmatpush1.msra.mxu0 0.0
        %1822 = vmatprep.subr.mxu0 0.0
        %1823 = vmatpush1.msra.mxu0 0.0
        %1824 = vmatprep.subr.mxu0 0.0
        %1825 = vmatpush1.msra.mxu0 0.0
        %1826 = vmatprep.subr.mxu0 0.0
        %1827 = vmatpush1.msra.mxu0 0.0
        %1828 = vmatprep.subr.mxu0 0.0
        %1829 = vmatpush1.msra.mxu0 0.0
        %1830 = vmatprep.subr.mxu0 0.0
        %1831 = vmatpush1.msra.mxu0 0.0
        %1832 = vmatprep.subr.mxu0 0.0
        %1833 = vmatpush1.msra.mxu0 0.0
        %1834 = vmatprep.subr.mxu0 0.0
        %1835 = vmatpush1.msra.mxu0 0.0
        %1836 = vmatprep.subr.mxu0 0.0
        %1837 = vmatpush1.msra.mxu0 0.0
        %1838 = vmatprep.subr.mxu0 0.0
        %1839 = vmatpush1.msra.mxu0 0.0
        %1840 = vmatprep.subr.mxu0 0.0
        %1841 = vmatpush1.msra.mxu0 0.0
        %1842 = vmatprep.subr.mxu0 0.0
        %1843 = vmatpush1.msra.mxu0 0.0
        %1844 = vmatprep.subr.mxu0 0.0
        %1845 = vmatpush1.msra.mxu0 0.0
        %1846 = vmatprep.subr.mxu0 0.0
        %1847 = vmatpush1.msra.mxu0 0.0
        %1848 = vmatprep.subr.mxu0 0.0
        %1849 = vmatpush1.msra.mxu0 0.0
        %1850 = vmatprep.subr.mxu0 0.0
        %1851 = vmatpush1.msra.mxu0 0.0
        %1852 = vmatprep.subr.mxu0 0.0
        %1853 = vmatpush1.msra.mxu0 0.0
        %1854 = vmatprep.subr.mxu0 0.0
        %1855 = vmatpush1.msra.mxu0 0.0
        %1856 = vmatprep.mubr.f32.mxu0 0.0
        %1857 = vmatmul.mubr.f32.gmra.mrb[0].mxu0 %v1769
        %v1858 = vpop.f32.mrb[0].mxu0
        %v1859 = vadd.f32 0.0, %v1858
        %v1860 = vpop.f32.mrb[0].mxu0
        %1861 = vmatprep.mubr.f32.mxu0 0.0
        %1862 = vmatmul.mubr.f32.gmra.mrb[0].mxu0 %v1772
        %v1863 = vpop.f32.mrb[0].mxu0
        %v1864 = vadd.f32 0.0, %v1863
        %v1865 = vpop.f32.mrb[0].mxu0
        %1866 = vmatprep.mubr.f32.mxu0 0.0
        %1867 = vmatmul.mubr.f32.gmra.mrb[0].mxu0 %v1775
        %v1868 = vpop.f32.mrb[0].mxu0
        %v1869 = vadd.f32 0.0, %v1868
        %v1870 = vpop.f32.mrb[0].mxu0
        %1871 = vmatprep.mubr.f32.mxu0 0.0
        %1872 = vmatmul.mubr.f32.gmra.mrb[0].mxu0 %v1778
        %v1873 = vpop.f32.mrb[0].mxu0
        %v1874 = vadd.f32 0.0, %v1873
        %v1875 = vpop.f32.mrb[0].mxu0
        %1876 = vmatprep.mubr.f32.mxu0 0.0
        %1877 = vmatmul.mubr.f32.gmra.mrb[0].mxu0 %v1781
        %v1878 = vpop.f32.mrb[0].mxu0
        %v1879 = vadd.f32 0.0, %v1878
        %v1880 = vpop.f32.mrb[0].mxu0
        %1881 = vmatprep.mubr.f32.mxu0 0.0
        %1882 = vmatmul.mubr.f32.gmra.mrb[0].mxu0 %v1784
        %v1883 = vpop.f32.mrb[0].mxu0
        %v1884 = vadd.f32 0.0, %v1883
        %v1885 = vpop.f32.mrb[0].mxu0
        %1886 = vmatprep.mubr.f32.mxu0 0.0
        %1887 = vmatmul.mubr.f32.gmra.mrb[0].mxu0 %v1787
        %v1888 = vpop.f32.mrb[0].mxu0
        %v1889 = vadd.f32 0.0, %v1888
        %v1890 = vpop.f32.mrb[0].mxu0
        %1891 = vmatprep.mubr.f32.mxu0 0.0
        %1892 = vmatmul.mubr.f32.gmra.mrb[0].mxu0 %v1790
        %v1893 = vpop.f32.mrb[0].mxu0
        %v1894 = vadd.f32 0.0, %v1893
        %v1895 = vpop.f32.mrb[0].mxu0
        %1896 = vdwg.mxu0
        %v1897 = vadd.f32 %v1749, %v1859
        %v1898 = vadd.f32 %v1750, %v1864
        %v1899 = vadd.f32 %v1751, %v1869
        %v1900 = vadd.f32 %v1752, %v1874
        %v1901 = vadd.f32 %v1753, %v1879
        %v1902 = vadd.f32 %v1754, %v1884
        %v1903 = vadd.f32 %v1755, %v1889
        %v1904 = vadd.f32 %v1756, %v1894
        %v1905 = vld [vmem:[%s1608 + $0x9] sm:$0xff]
        %v1906 = vld [vmem:[%s1608 + $0x21] sm:$0xff]
        %v1907 = vld [vmem:[%s1608 + $0x39] sm:$0xff]
        %v1908 = vld [vmem:[%s1608 + $0x51] sm:$0xff]
        %v1909 = vld [vmem:[%s1608 + $0x69] sm:$0xff]
        %v1910 = vld [vmem:[%s1608 + $0x81] sm:$0xff]
        %v1911 = vld [vmem:[%s1608 + $0x99] sm:$0xff]
        %v1912 = vld [vmem:[%s1608 + $0xb1] sm:$0xff]
        %s1913 = scalar_lea.vmem [#allocation7], 128
        %v1914 = vld [vmem:[%s1913] sm:$0xff]
        %v1915 = vld [vmem:[%s1913 + $0x8] sm:$0xff]
        %v1917 = vsel %vm537, %v1905, 0
        %v1920 = vsel %vm537, %v1906, 0
        %v1923 = vsel %vm537, %v1907, 0
        %v1926 = vsel %vm537, %v1908, 0
        %v1929 = vsel %vm537, %v1909, 0
        %v1932 = vsel %vm537, %v1910, 0
        %v1935 = vsel %vm537, %v1911, 0
        %v1938 = vsel %vm537, %v1912, 0
        %1940 = vmatprep.subr.mxu0 0.0
        %1941 = vmatpush1.msra.mxu0 %v1914
        %1942 = vmatprep.subr.mxu0 0.0
        %1943 = vmatpush1.msra.mxu0 %v1915
        %1944 = vmatprep.subr.mxu0 0.0
        %1945 = vmatpush1.msra.mxu0 0.0
        %1946 = vmatprep.subr.mxu0 0.0
        %1947 = vmatpush1.msra.mxu0 0.0
        %1948 = vmatprep.subr.mxu0 0.0
        %1949 = vmatpush1.msra.mxu0 0.0
        %1950 = vmatprep.subr.mxu0 0.0
        %1951 = vmatpush1.msra.mxu0 0.0
        %1952 = vmatprep.subr.mxu0 0.0
        %1953 = vmatpush1.msra.mxu0 0.0
        %1954 = vmatprep.subr.mxu0 0.0
        %1955 = vmatpush1.msra.mxu0 0.0
        %1956 = vmatprep.subr.mxu0 0.0
        %1957 = vmatpush1.msra.mxu0 0.0
        %1958 = vmatprep.subr.mxu0 0.0
        %1959 = vmatpush1.msra.mxu0 0.0
        %1960 = vmatprep.subr.mxu0 0.0
        %1961 = vmatpush1.msra.mxu0 0.0
        %1962 = vmatprep.subr.mxu0 0.0
        %1963 = vmatpush1.msra.mxu0 0.0
        %1964 = vmatprep.subr.mxu0 0.0
        %1965 = vmatpush1.msra.mxu0 0.0
        %1966 = vmatprep.subr.mxu0 0.0
        %1967 = vmatpush1.msra.mxu0 0.0
        %1968 = vmatprep.subr.mxu0 0.0
        %1969 = vmatpush1.msra.mxu0 0.0
        %1970 = vmatprep.subr.mxu0 0.0
        %1971 = vmatpush1.msra.mxu0 0.0
        %1972 = vmatprep.subr.mxu0 0.0
        %1973 = vmatpush1.msra.mxu0 0.0
        %1974 = vmatprep.subr.mxu0 0.0
        %1975 = vmatpush1.msra.mxu0 0.0
        %1976 = vmatprep.subr.mxu0 0.0
        %1977 = vmatpush1.msra.mxu0 0.0
        %1978 = vmatprep.subr.mxu0 0.0
        %1979 = vmatpush1.msra.mxu0 0.0
        %1980 = vmatprep.subr.mxu0 0.0
        %1981 = vmatpush1.msra.mxu0 0.0
        %1982 = vmatprep.subr.mxu0 0.0
        %1983 = vmatpush1.msra.mxu0 0.0
        %1984 = vmatprep.subr.mxu0 0.0
        %1985 = vmatpush1.msra.mxu0 0.0
        %1986 = vmatprep.subr.mxu0 0.0
        %1987 = vmatpush1.msra.mxu0 0.0
        %1988 = vmatprep.subr.mxu0 0.0
        %1989 = vmatpush1.msra.mxu0 0.0
        %1990 = vmatprep.subr.mxu0 0.0
        %1991 = vmatpush1.msra.mxu0 0.0
        %1992 = vmatprep.subr.mxu0 0.0
        %1993 = vmatpush1.msra.mxu0 0.0
        %1994 = vmatprep.subr.mxu0 0.0
        %1995 = vmatpush1.msra.mxu0 0.0
        %1996 = vmatprep.subr.mxu0 0.0
        %1997 = vmatpush1.msra.mxu0 0.0
        %1998 = vmatprep.subr.mxu0 0.0
        %1999 = vmatpush1.msra.mxu0 0.0
        %2000 = vmatprep.subr.mxu0 0.0
        %2001 = vmatpush1.msra.mxu0 0.0
        %2002 = vmatprep.subr.mxu0 0.0
        %2003 = vmatpush1.msra.mxu0 0.0
        %2004 = vmatprep.mubr.f32.mxu0 0.0
        %2005 = vmatmul.mubr.f32.gmra.mrb[0].mxu0 %v1917
        %v2006 = vpop.f32.mrb[0].mxu0
        %v2007 = vadd.f32 0.0, %v2006
        %v2008 = vpop.f32.mrb[0].mxu0
        %2009 = vmatprep.mubr.f32.mxu0 0.0
        %2010 = vmatmul.mubr.f32.gmra.mrb[0].mxu0 %v1920
        %v2011 = vpop.f32.mrb[0].mxu0
        %v2012 = vadd.f32 0.0, %v2011
        %v2013 = vpop.f32.mrb[0].mxu0
        %2014 = vmatprep.mubr.f32.mxu0 0.0
        %2015 = vmatmul.mubr.f32.gmra.mrb[0].mxu0 %v1923
        %v2016 = vpop.f32.mrb[0].mxu0
        %v2017 = vadd.f32 0.0, %v2016
        %v2018 = vpop.f32.mrb[0].mxu0
        %2019 = vmatprep.mubr.f32.mxu0 0.0
        %2020 = vmatmul.mubr.f32.gmra.mrb[0].mxu0 %v1926
        %v2021 = vpop.f32.mrb[0].mxu0
        %v2022 = vadd.f32 0.0, %v2021
        %v2023 = vpop.f32.mrb[0].mxu0
        %2024 = vmatprep.mubr.f32.mxu0 0.0
        %2025 = vmatmul.mubr.f32.gmra.mrb[0].mxu0 %v1929
        %v2026 = vpop.f32.mrb[0].mxu0
        %v2027 = vadd.f32 0.0, %v2026
        %v2028 = vpop.f32.mrb[0].mxu0
        %2029 = vmatprep.mubr.f32.mxu0 0.0
        %2030 = vmatmul.mubr.f32.gmra.mrb[0].mxu0 %v1932
        %v2031 = vpop.f32.mrb[0].mxu0
        %v2032 = vadd.f32 0.0, %v2031
        %v2033 = vpop.f32.mrb[0].mxu0
        %2034 = vmatprep.mubr.f32.mxu0 0.0
        %2035 = vmatmul.mubr.f32.gmra.mrb[0].mxu0 %v1935
        %v2036 = vpop.f32.mrb[0].mxu0
        %v2037 = vadd.f32 0.0, %v2036
        %v2038 = vpop.f32.mrb[0].mxu0
        %2039 = vmatprep.mubr.f32.mxu0 0.0
        %2040 = vmatmul.mubr.f32.gmra.mrb[0].mxu0 %v1938
        %v2041 = vpop.f32.mrb[0].mxu0
        %v2042 = vadd.f32 0.0, %v2041
        %v2043 = vpop.f32.mrb[0].mxu0
        %2044 = vdwg.mxu0
        %v2045 = vadd.f32 %v1897, %v2007
        %v2046 = vadd.f32 %v1898, %v2012
        %v2047 = vadd.f32 %v1899, %v2017
        %v2048 = vadd.f32 %v1900, %v2022
        %v2049 = vadd.f32 %v1901, %v2027
        %v2050 = vadd.f32 %v1902, %v2032
        %v2051 = vadd.f32 %v1903, %v2037
        %v2052 = vadd.f32 %v1904, %v2042
        %v2053 = vld [vmem:[%s528] sm:$0x1]
        %v2054 = vxor.u32 %v2053, 2147483648
        %v2055 = vmul.f32 %v2054, 1.442695
        %v2056 = vpow.pop %v2055
        %v2057 = vadd.f32 %v2056, 1.0
        %v2058 = vrcp.pop %v2057
        %v2059 = vmul.f32 1.0, %v2058
        %v2060 = vmul.f32 %v2053, %v2059
        %v2061 = vld [vmem:[%s6] sm:$0xff]
        %v2062 = vld [vmem:[%s6 + $0x8] sm:$0xff]
        %v2063 = vld [vmem:[%s6 + $0x10] sm:$0xff]
        %v2064 = vld [vmem:[%s6 + $0x18] sm:$0xff]
        %vm2065 = vcmask 261120
        %v2067 = vsel %vm2065, %v2060, 0
        %2069 = vmatprep.subr.mxu0 0.0
        %2070 = vmatpush1.msra.mxu0 %v2061
        %2071 = vmatprep.subr.mxu0 0.0
        %2072 = vmatpush1.msra.mxu0 %v2062
        %2073 = vmatprep.subr.mxu0 0.0
        %2074 = vmatpush1.msra.mxu0 %v2063
        %2075 = vmatprep.subr.mxu0 0.0
        %2076 = vmatpush1.msra.mxu0 %v2064
        %2077 = vmatprep.subr.mxu0 0.0
        %2078 = vmatpush1.msra.mxu0 0.0
        %2079 = vmatprep.subr.mxu0 0.0
        %2080 = vmatpush1.msra.mxu0 0.0
        %2081 = vmatprep.subr.mxu0 0.0
        %2082 = vmatpush1.msra.mxu0 0.0
        %2083 = vmatprep.subr.mxu0 0.0
        %2084 = vmatpush1.msra.mxu0 0.0
        %2085 = vmatprep.subr.mxu0 0.0
        %2086 = vmatpush1.msra.mxu0 0.0
        %2087 = vmatprep.subr.mxu0 0.0
        %2088 = vmatpush1.msra.mxu0 0.0
        %2089 = vmatprep.subr.mxu0 0.0
        %2090 = vmatpush1.msra.mxu0 0.0
        %2091 = vmatprep.subr.mxu0 0.0
        %2092 = vmatpush1.msra.mxu0 0.0
        %2093 = vmatprep.subr.mxu0 0.0
        %2094 = vmatpush1.msra.mxu0 0.0
        %2095 = vmatprep.subr.mxu0 0.0
        %2096 = vmatpush1.msra.mxu0 0.0
        %2097 = vmatprep.subr.mxu0 0.0
        %2098 = vmatpush1.msra.mxu0 0.0
        %2099 = vmatprep.subr.mxu0 0.0
        %2100 = vmatpush1.msra.mxu0 0.0
        %2101 = vmatprep.subr.mxu0 0.0
        %2102 = vmatpush1.msra.mxu0 0.0
        %2103 = vmatprep.subr.mxu0 0.0
        %2104 = vmatpush1.msra.mxu0 0.0
        %2105 = vmatprep.subr.mxu0 0.0
        %2106 = vmatpush1.msra.mxu0 0.0
        %2107 = vmatprep.subr.mxu0 0.0
        %2108 = vmatpush1.msra.mxu0 0.0
        %2109 = vmatprep.subr.mxu0 0.0
        %2110 = vmatpush1.msra.mxu0 0.0
        %2111 = vmatprep.subr.mxu0 0.0
        %2112 = vmatpush1.msra.mxu0 0.0
        %2113 = vmatprep.subr.mxu0 0.0
        %2114 = vmatpush1.msra.mxu0 0.0
        %2115 = vmatprep.subr.mxu0 0.0
        %2116 = vmatpush1.msra.mxu0 0.0
        %2117 = vmatprep.subr.mxu0 0.0
        %2118 = vmatpush1.msra.mxu0 0.0
        %2119 = vmatprep.subr.mxu0 0.0
        %2120 = vmatpush1.msra.mxu0 0.0
        %2121 = vmatprep.subr.mxu0 0.0
        %2122 = vmatpush1.msra.mxu0 0.0
        %2123 = vmatprep.subr.mxu0 0.0
        %2124 = vmatpush1.msra.mxu0 0.0
        %2125 = vmatprep.subr.mxu0 0.0
        %2126 = vmatpush1.msra.mxu0 0.0
        %2127 = vmatprep.subr.mxu0 0.0
        %2128 = vmatpush1.msra.mxu0 0.0
        %2129 = vmatprep.subr.mxu0 0.0
        %2130 = vmatpush1.msra.mxu0 0.0
        %2131 = vmatprep.subr.mxu0 0.0
        %2132 = vmatpush1.msra.mxu0 0.0
        %2133 = vmatprep.mubr.f32.mxu0 0.0
        %2134 = vmatmul.mubr.f32.gmra.mrb[0].mxu0 %v2067
        %v2135 = vpop.f32.mrb[0].mxu0
        %v2136 = vadd.f32 0.0, %v2135
        %v2137 = vpop.f32.mrb[0].mxu0
        %2138 = vdwg.mxu0
        %v2139 = vld [vmem:[%s5] sm:$0x1]
        %v2140 = vld [vmem:[%s7] sm:$0x1]
        %v2141 = vadd.f32 %v2139, %v2140
        %v2142 = vadd.f32 %v2141, %v2136
        %v2144 = vlaneseq
        %v2145 = vshrl.u32 %v2144, 7
        %v2146 = vsub.s32 0, %v2145
        %v2147 = vrot.slane %v2142, %v2146
        %v2149 = vadd.f32 %v2045, %v2147
        %v2150 = vadd.f32 %v2046, %v2147
        %v2151 = vadd.f32 %v2047, %v2147
        %v2152 = vadd.f32 %v2048, %v2147
        %v2153 = vadd.f32 %v2049, %v2147
        %v2154 = vadd.f32 %v2050, %v2147
        %v2155 = vadd.f32 %v2051, %v2147
        %v2156 = vadd.f32 %v2052, %v2147
        %v2157 = vsel %vm2065, %v2149, 0.0
        %v2158 = vsel %vm2065, %v2150, 0.0
        %v2159 = vadd.f32 %v2157, %v2158
        %v2160 = vsel %vm2065, %v2151, 0.0
        %v2161 = vadd.f32 %v2159, %v2160
        %v2162 = vsel %vm2065, %v2152, 0.0
        %v2163 = vadd.f32 %v2161, %v2162
        %v2164 = vsel %vm2065, %v2153, 0.0
        %v2165 = vadd.f32 %v2163, %v2164
        %v2166 = vsel %vm2065, %v2154, 0.0
        %v2167 = vadd.f32 %v2165, %v2166
        %v2168 = vsel %vm2065, %v2155, 0.0
        %v2169 = vadd.f32 %v2167, %v2168
        %v2170 = vsel %vm2065, %v2156, 0.0
        %v2171 = vadd.f32 %v2169, %v2170
        %2172 = vadd.xlane.f32.xlu0 %v2171
        %v2173 = vpop.xlane.xlu0 %2172
        %v2174 = vrot.slane %v2173, 4
        %v2175 = vadd.f32 %v2173, %v2174
        %v2176 = vrot.slane %v2175, 2
        %v2177 = vadd.f32 %v2175, %v2176
        %v2178 = vrot.slane %v2177, 1
        %v2179 = vadd.f32 %v2177, %v2178
        %s2180 = vtos %v2179
        %v2181 = vrcp.pop 2048.0
        %s2182 = vtos %v2181
        %s2183 = smul.f32 %s2180, %s2182
        %v2184 = vmul.f32 %v2149, %v2149
        %v2185 = vmul.f32 %v2150, %v2150
        %v2186 = vmul.f32 %v2151, %v2151
        %v2187 = vmul.f32 %v2152, %v2152
        %v2188 = vmul.f32 %v2153, %v2153
        %v2189 = vmul.f32 %v2154, %v2154
        %v2190 = vmul.f32 %v2155, %v2155
        %v2191 = vmul.f32 %v2156, %v2156
        %v2192 = vsel %vm2065, %v2184, 0.0
        %v2193 = vsel %vm2065, %v2185, 0.0
        %v2194 = vadd.f32 %v2192, %v2193
        %v2195 = vsel %vm2065, %v2186, 0.0
        %v2196 = vadd.f32 %v2194, %v2195
        %v2197 = vsel %vm2065, %v2187, 0.0
        %v2198 = vadd.f32 %v2196, %v2197
        %v2199 = vsel %vm2065, %v2188, 0.0
        %v2200 = vadd.f32 %v2198, %v2199
        %v2201 = vsel %vm2065, %v2189, 0.0
        %v2202 = vadd.f32 %v2200, %v2201
        %v2203 = vsel %vm2065, %v2190, 0.0
        %v2204 = vadd.f32 %v2202, %v2203
        %v2205 = vsel %vm2065, %v2191, 0.0
        %v2206 = vadd.f32 %v2204, %v2205
        %2207 = vadd.xlane.f32.xlu0 %v2206
        %v2208 = vpop.xlane.xlu0 %2207
        %v2209 = vrot.slane %v2208, 4
        %v2210 = vadd.f32 %v2208, %v2209
        %v2211 = vrot.slane %v2210, 2
        %v2212 = vadd.f32 %v2210, %v2211
        %v2213 = vrot.slane %v2212, 1
        %v2214 = vadd.f32 %v2212, %v2213
        %s2215 = vtos %v2214
        %v2216 = vrcp.pop 2048.0
        %s2217 = vtos %v2216
        %s2218 = smul.f32 %s2215, %s2217
        %s2219 = smul.f32 %s2183, %s2183
        %s2220 = ssub.f32 %s2218, %s2219
        %v2221 = vld [vmem:[%s8] sm:$0x1]
        %s2222 = sadd.f32 %s2220, 1e-05
        %v2223 = vstv %s2222
        %v2224 = vrsqrt.pop %v2223
        %s2225 = vtos %v2224
        %v2226 = vstv %s2225
        %v2227 = vmul.f32 %v2221, %v2226
        %v2228 = vld [vmem:[%s9] sm:$0x1]
        %v2229 = vstv %s2183
        %v2230 = vmul.f32 %v2229, %v2227
        %v2231 = vsub.f32 %v2228, %v2230
        %v2233 = vlaneseq
        %v2234 = vshrl.u32 %v2233, 7
        %v2235 = vsub.s32 0, %v2234
        %v2236 = vrot.slane %v2227, %v2235
        %v2238 = vmul.f32 %v2149, %v2236
        %v2239 = vmul.f32 %v2150, %v2236
        %v2240 = vmul.f32 %v2151, %v2236
        %v2241 = vmul.f32 %v2152, %v2236
        %v2242 = vmul.f32 %v2153, %v2236
        %v2243 = vmul.f32 %v2154, %v2236
        %v2244 = vmul.f32 %v2155, %v2236
        %v2245 = vmul.f32 %v2156, %v2236
        %v2247 = vlaneseq
        %v2248 = vshrl.u32 %v2247, 7
        %v2249 = vsub.s32 0, %v2248
        %v2250 = vrot.slane %v2231, %v2249
        %v2252 = vadd.f32 %v2238, %v2250
        %v2253 = vadd.f32 %v2239, %v2250
        %v2254 = vadd.f32 %v2240, %v2250
        %v2255 = vadd.f32 %v2241, %v2250
        %v2256 = vadd.f32 %v2242, %v2250
        %v2257 = vadd.f32 %v2243, %v2250
        %v2258 = vadd.f32 %v2244, %v2250
        %v2259 = vadd.f32 %v2245, %v2250
        %v2260 = vxor.u32 %v2252, 2147483648
        %v2261 = vxor.u32 %v2253, 2147483648
        %v2262 = vxor.u32 %v2254, 2147483648
        %v2263 = vxor.u32 %v2255, 2147483648
        %v2264 = vxor.u32 %v2256, 2147483648
        %v2265 = vxor.u32 %v2257, 2147483648
        %v2266 = vxor.u32 %v2258, 2147483648
        %v2267 = vxor.u32 %v2259, 2147483648
        %v2268 = vmul.f32 %v2260, 1.442695
        %v2269 = vpow.pop %v2268
        %v2270 = vmul.f32 %v2261, 1.442695
        %v2271 = vpow.pop %v2270
        %v2272 = vmul.f32 %v2262, 1.442695
        %v2273 = vpow.pop %v2272
        %v2274 = vmul.f32 %v2263, 1.442695
        %v2275 = vpow.pop %v2274
        %v2276 = vmul.f32 %v2264, 1.442695
        %v2277 = vpow.pop %v2276
        %v2278 = vmul.f32 %v2265, 1.442695
        %v2279 = vpow.pop %v2278
        %v2280 = vmul.f32 %v2266, 1.442695
        %v2281 = vpow.pop %v2280
        %v2282 = vmul.f32 %v2267, 1.442695
        %v2283 = vpow.pop %v2282
        %v2284 = vadd.f32 %v2269, 1.0
        %v2285 = vadd.f32 %v2271, 1.0
        %v2286 = vadd.f32 %v2273, 1.0
        %v2287 = vadd.f32 %v2275, 1.0
        %v2288 = vadd.f32 %v2277, 1.0
        %v2289 = vadd.f32 %v2279, 1.0
        %v2290 = vadd.f32 %v2281, 1.0
        %v2291 = vadd.f32 %v2283, 1.0
        %v2292 = vrcp.pop %v2284
        %v2293 = vmul.f32 1.0, %v2292
        %v2294 = vrcp.pop %v2285
        %v2295 = vmul.f32 1.0, %v2294
        %v2296 = vrcp.pop %v2286
        %v2297 = vmul.f32 1.0, %v2296
        %v2298 = vrcp.pop %v2287
        %v2299 = vmul.f32 1.0, %v2298
        %v2300 = vrcp.pop %v2288
        %v2301 = vmul.f32 1.0, %v2300
        %v2302 = vrcp.pop %v2289
        %v2303 = vmul.f32 1.0, %v2302
        %v2304 = vrcp.pop %v2290
        %v2305 = vmul.f32 1.0, %v2304
        %v2306 = vrcp.pop %v2291
        %v2307 = vmul.f32 1.0, %v2306
        %v2308 = vmul.f32 %v2252, %v2293
        %v2309 = vmul.f32 %v2253, %v2295
        %v2310 = vmul.f32 %v2254, %v2297
        %v2311 = vmul.f32 %v2255, %v2299
        %v2312 = vmul.f32 %v2256, %v2301
        %v2313 = vmul.f32 %v2257, %v2303
        %v2314 = vmul.f32 %v2258, %v2305
        %v2315 = vmul.f32 %v2259, %v2307
        %2316 = vst.msk [vmem:[#allocation3] sm:$0xff] %vm2065, 0.0
        %2317 = vst.msk [vmem:[#allocation3 + $0x8] sm:$0xff] %vm2065, 0.0
        %vm2318 = vcmask 253952
        %2319 = vst.msk [vmem:[#allocation3 + $0x10] sm:$0x1] %vm2318, 0.0
        %2320 = vst.msk [vmem:[#allocation3 + $0x18] sm:$0xff] %vm2065, 0.0
        %2321 = vst.msk [vmem:[#allocation3 + $0x20] sm:$0xff] %vm2065, 0.0
        %2322 = vst.msk [vmem:[#allocation3 + $0x28] sm:$0x1] %vm2318, 0.0
        %2323 = vst.msk [vmem:[#allocation3 + $0x30] sm:$0xff] %vm2065, 0.0
        %2324 = vst.msk [vmem:[#allocation3 + $0x38] sm:$0xff] %vm2065, 0.0
        %2325 = vst.msk [vmem:[#allocation3 + $0x40] sm:$0x1] %vm2318, 0.0
        %2326 = vst.msk [vmem:[#allocation3 + $0x48] sm:$0xff] %vm2065, 0.0
        %2327 = vst.msk [vmem:[#allocation3 + $0x50] sm:$0xff] %vm2065, 0.0
        %2328 = vst.msk [vmem:[#allocation3 + $0x58] sm:$0x1] %vm2318, 0.0
        %2329 = vst.msk [vmem:[#allocation3 + $0x60] sm:$0xff] %vm2065, 0.0
        %2330 = vst.msk [vmem:[#allocation3 + $0x68] sm:$0xff] %vm2065, 0.0
        %2331 = vst.msk [vmem:[#allocation3 + $0x70] sm:$0x1] %vm2318, 0.0
        %2332 = vst.msk [vmem:[#allocation3 + $0x78] sm:$0xff] %vm2065, 0.0
        %2333 = vst.msk [vmem:[#allocation3 + $0x80] sm:$0xff] %vm2065, 0.0
        %2334 = vst.msk [vmem:[#allocation3 + $0x88] sm:$0x1] %vm2318, 0.0
        %2335 = vst.msk [vmem:[#allocation3 + $0x90] sm:$0xff] %vm2065, 0.0
        %2336 = vst.msk [vmem:[#allocation3 + $0x98] sm:$0xff] %vm2065, 0.0
        %2337 = vst.msk [vmem:[#allocation3 + $0xa0] sm:$0x1] %vm2318, 0.0
        %2338 = vst.msk [vmem:[#allocation3 + $0xa8] sm:$0xff] %vm2065, 0.0
        %2339 = vst.msk [vmem:[#allocation3 + $0xb0] sm:$0xff] %vm2065, 0.0
        %2340 = vst.msk [vmem:[#allocation3 + $0xb8] sm:$0x1] %vm2318, 0.0
        %2341 = vst.msk [vmem:[#allocation3 + $0xc0] sm:$0xff] %vm2065, 0.0
        %2342 = vst.msk [vmem:[#allocation3 + $0xc8] sm:$0xff] %vm2065, 0.0
        %2343 = vst.msk [vmem:[#allocation3 + $0xd0] sm:$0x1] %vm2318, 0.0
        %2344 = vst.msk [vmem:[#allocation3 + $0xd8] sm:$0xff] %vm2065, 0.0
        %2345 = vst.msk [vmem:[#allocation3 + $0xe0] sm:$0xff] %vm2065, 0.0
        %2346 = vst.msk [vmem:[#allocation3 + $0xe8] sm:$0x1] %vm2318, 0.0
        %s2347 = scalar_lea.vmem [#allocation3], 24
        %2348 = vst.msk [vmem:[%s2347 + $0x8] sm:$0xff] %vm2065, %v2308
        %2349 = vst.msk [vmem:[%s2347 + $0x20] sm:$0xff] %vm2065, %v2309
        %2350 = vst.msk [vmem:[%s2347 + $0x38] sm:$0xff] %vm2065, %v2310
        %2351 = vst.msk [vmem:[%s2347 + $0x50] sm:$0xff] %vm2065, %v2311
        %2352 = vst.msk [vmem:[%s2347 + $0x68] sm:$0xff] %vm2065, %v2312
        %2353 = vst.msk [vmem:[%s2347 + $0x80] sm:$0xff] %vm2065, %v2313
        %2354 = vst.msk [vmem:[%s2347 + $0x98] sm:$0xff] %vm2065, %v2314
        %2355 = vst.msk [vmem:[%s2347 + $0xb0] sm:$0xff] %vm2065, %v2315
        %v2356 = vld [vmem:[#allocation3 + $0x7] sm:$0xff]
        %v2357 = vld [vmem:[#allocation3 + $0x1f] sm:$0xff]
        %v2358 = vld [vmem:[#allocation3 + $0x37] sm:$0xff]
        %v2359 = vld [vmem:[#allocation3 + $0x4f] sm:$0xff]
        %v2360 = vld [vmem:[#allocation3 + $0x67] sm:$0xff]
        %v2361 = vld [vmem:[#allocation3 + $0x7f] sm:$0xff]
        %v2362 = vld [vmem:[#allocation3 + $0x97] sm:$0xff]
        %v2363 = vld [vmem:[#allocation3 + $0xaf] sm:$0xff]
        %v2364 = vld [vmem:[#allocation9] sm:$0xff]
        %v2365 = vld [vmem:[#allocation9 + $0x8] sm:$0xff]
        %v2366 = vld [vmem:[#allocation9 + $0x10] sm:$0xff]
        %v2367 = vld [vmem:[#allocation9 + $0x18] sm:$0xff]
        %v2368 = vld [vmem:[#allocation3 + $0x8] sm:$0xff]
        %v2369 = vld [vmem:[#allocation3 + $0x20] sm:$0xff]
        %v2370 = vld [vmem:[#allocation3 + $0x38] sm:$0xff]
        %v2371 = vld [vmem:[#allocation3 + $0x50] sm:$0xff]
        %v2372 = vld [vmem:[#allocation3 + $0x68] sm:$0xff]
        %v2373 = vld [vmem:[#allocation3 + $0x80] sm:$0xff]
        %v2374 = vld [vmem:[#allocation3 + $0x98] sm:$0xff]
        %v2375 = vld [vmem:[#allocation3 + $0xb0] sm:$0xff]
        %s2376 = scalar_lea.vmem [#allocation9], 32
        %v2377 = vld [vmem:[%s2376] sm:$0xff]
        %v2378 = vld [vmem:[%s2376 + $0x8] sm:$0xff]
        %v2379 = vld [vmem:[%s2376 + $0x10] sm:$0xff]
        %v2380 = vld [vmem:[%s2376 + $0x18] sm:$0xff]
        %v2382 = vsel %vm2065, %v2368, 0
        %v2385 = vsel %vm2065, %v2369, 0
        %v2388 = vsel %vm2065, %v2370, 0
        %v2391 = vsel %vm2065, %v2371, 0
        %v2394 = vsel %vm2065, %v2372, 0
        %v2397 = vsel %vm2065, %v2373, 0
        %v2400 = vsel %vm2065, %v2374, 0
        %v2403 = vsel %vm2065, %v2375, 0
        %2405 = vmatprep.subr.mxu0 0.0
        %2406 = vmatpush1.msra.mxu0 %v2377
        %2407 = vmatprep.subr.mxu0 0.0
        %2408 = vmatpush1.msra.mxu0 %v2378
        %2409 = vmatprep.subr.mxu0 0.0
        %2410 = vmatpush1.msra.mxu0 %v2379
        %2411 = vmatprep.subr.mxu0 0.0
        %2412 = vmatpush1.msra.mxu0 %v2380
        %2413 = vmatprep.subr.mxu0 0.0
        %2414 = vmatpush1.msra.mxu0 0.0
        %2415 = vmatprep.subr.mxu0 0.0
        %2416 = vmatpush1.msra.mxu0 0.0
        %2417 = vmatprep.subr.mxu0 0.0
        %2418 = vmatpush1.msra.mxu0 0.0
        %2419 = vmatprep.subr.mxu0 0.0
        %2420 = vmatpush1.msra.mxu0 0.0
        %2421 = vmatprep.subr.mxu0 0.0
        %2422 = vmatpush1.msra.mxu0 0.0
        %2423 = vmatprep.subr.mxu0 0.0
        %2424 = vmatpush1.msra.mxu0 0.0
        %2425 = vmatprep.subr.mxu0 0.0
        %2426 = vmatpush1.msra.mxu0 0.0
        %2427 = vmatprep.subr.mxu0 0.0
        %2428 = vmatpush1.msra.mxu0 0.0
        %2429 = vmatprep.subr.mxu0 0.0
        %2430 = vmatpush1.msra.mxu0 0.0
        %2431 = vmatprep.subr.mxu0 0.0
        %2432 = vmatpush1.msra.mxu0 0.0
        %2433 = vmatprep.subr.mxu0 0.0
        %2434 = vmatpush1.msra.mxu0 0.0
        %2435 = vmatprep.subr.mxu0 0.0
        %2436 = vmatpush1.msra.mxu0 0.0
        %2437 = vmatprep.subr.mxu0 0.0
        %2438 = vmatpush1.msra.mxu0 0.0
        %2439 = vmatprep.subr.mxu0 0.0
        %2440 = vmatpush1.msra.mxu0 0.0
        %2441 = vmatprep.subr.mxu0 0.0
        %2442 = vmatpush1.msra.mxu0 0.0
        %2443 = vmatprep.subr.mxu0 0.0
        %2444 = vmatpush1.msra.mxu0 0.0
        %2445 = vmatprep.subr.mxu0 0.0
        %2446 = vmatpush1.msra.mxu0 0.0
        %2447 = vmatprep.subr.mxu0 0.0
        %2448 = vmatpush1.msra.mxu0 0.0
        %2449 = vmatprep.subr.mxu0 0.0
        %2450 = vmatpush1.msra.mxu0 0.0
        %2451 = vmatprep.subr.mxu0 0.0
        %2452 = vmatpush1.msra.mxu0 0.0
        %2453 = vmatprep.subr.mxu0 0.0
        %2454 = vmatpush1.msra.mxu0 0.0
        %2455 = vmatprep.subr.mxu0 0.0
        %2456 = vmatpush1.msra.mxu0 0.0
        %2457 = vmatprep.subr.mxu0 0.0
        %2458 = vmatpush1.msra.mxu0 0.0
        %2459 = vmatprep.subr.mxu0 0.0
        %2460 = vmatpush1.msra.mxu0 0.0
        %2461 = vmatprep.subr.mxu0 0.0
        %2462 = vmatpush1.msra.mxu0 0.0
        %2463 = vmatprep.subr.mxu0 0.0
        %2464 = vmatpush1.msra.mxu0 0.0
        %2465 = vmatprep.subr.mxu0 0.0
        %2466 = vmatpush1.msra.mxu0 0.0
        %2467 = vmatprep.subr.mxu0 0.0
        %2468 = vmatpush1.msra.mxu0 0.0
        %2469 = vmatprep.mubr.f32.mxu0 0.0
        %2470 = vmatmul.mubr.f32.gmra.mrb[0].mxu0 %v2382
        %v2471 = vpop.f32.mrb[0].mxu0
        %v2472 = vadd.f32 0.0, %v2471
        %v2473 = vpop.f32.mrb[0].mxu0
        %2474 = vmatprep.mubr.f32.mxu0 0.0
        %2475 = vmatmul.mubr.f32.gmra.mrb[0].mxu0 %v2385
        %v2476 = vpop.f32.mrb[0].mxu0
        %v2477 = vadd.f32 0.0, %v2476
        %v2478 = vpop.f32.mrb[0].mxu0
        %2479 = vmatprep.mubr.f32.mxu0 0.0
        %2480 = vmatmul.mubr.f32.gmra.mrb[0].mxu0 %v2388
        %v2481 = vpop.f32.mrb[0].mxu0
        %v2482 = vadd.f32 0.0, %v2481
        %v2483 = vpop.f32.mrb[0].mxu0
        %2484 = vmatprep.mubr.f32.mxu0 0.0
        %2485 = vmatmul.mubr.f32.gmra.mrb[0].mxu0 %v2391
        %v2486 = vpop.f32.mrb[0].mxu0
        %v2487 = vadd.f32 0.0, %v2486
        %v2488 = vpop.f32.mrb[0].mxu0
        %2489 = vmatprep.mubr.f32.mxu0 0.0
        %2490 = vmatmul.mubr.f32.gmra.mrb[0].mxu0 %v2394
        %v2491 = vpop.f32.mrb[0].mxu0
        %v2492 = vadd.f32 0.0, %v2491
        %v2493 = vpop.f32.mrb[0].mxu0
        %2494 = vmatprep.mubr.f32.mxu0 0.0
        %2495 = vmatmul.mubr.f32.gmra.mrb[0].mxu0 %v2397
        %v2496 = vpop.f32.mrb[0].mxu0
        %v2497 = vadd.f32 0.0, %v2496
        %v2498 = vpop.f32.mrb[0].mxu0
        %2499 = vmatprep.mubr.f32.mxu0 0.0
        %2500 = vmatmul.mubr.f32.gmra.mrb[0].mxu0 %v2400
        %v2501 = vpop.f32.mrb[0].mxu0
        %v2502 = vadd.f32 0.0, %v2501
        %v2503 = vpop.f32.mrb[0].mxu0
        %2504 = vmatprep.mubr.f32.mxu0 0.0
        %2505 = vmatmul.mubr.f32.gmra.mrb[0].mxu0 %v2403
        %v2506 = vpop.f32.mrb[0].mxu0
        %v2507 = vadd.f32 0.0, %v2506
        %v2508 = vpop.f32.mrb[0].mxu0
        %2509 = vdwg.mxu0
        %v2511 = vsel %vm2065, %v2356, 0
        %v2514 = vsel %vm2065, %v2357, 0
        %v2517 = vsel %vm2065, %v2358, 0
        %v2520 = vsel %vm2065, %v2359, 0
        %v2523 = vsel %vm2065, %v2360, 0
        %v2526 = vsel %vm2065, %v2361, 0
        %v2529 = vsel %vm2065, %v2362, 0
        %v2532 = vsel %vm2065, %v2363, 0
        %2534 = vmatprep.subr.mxu0 0.0
        %2535 = vmatpush1.msra.mxu0 %v2364
        %2536 = vmatprep.subr.mxu0 0.0
        %2537 = vmatpush1.msra.mxu0 %v2365
        %2538 = vmatprep.subr.mxu0 0.0
        %2539 = vmatpush1.msra.mxu0 %v2366
        %2540 = vmatprep.subr.mxu0 0.0
        %2541 = vmatpush1.msra.mxu0 %v2367
        %2542 = vmatprep.subr.mxu0 0.0
        %2543 = vmatpush1.msra.mxu0 0.0
        %2544 = vmatprep.subr.mxu0 0.0
        %2545 = vmatpush1.msra.mxu0 0.0
        %2546 = vmatprep.subr.mxu0 0.0
        %2547 = vmatpush1.msra.mxu0 0.0
        %2548 = vmatprep.subr.mxu0 0.0
        %2549 = vmatpush1.msra.mxu0 0.0
        %2550 = vmatprep.subr.mxu0 0.0
        %2551 = vmatpush1.msra.mxu0 0.0
        %2552 = vmatprep.subr.mxu0 0.0
        %2553 = vmatpush1.msra.mxu0 0.0
        %2554 = vmatprep.subr.mxu0 0.0
        %2555 = vmatpush1.msra.mxu0 0.0
        %2556 = vmatprep.subr.mxu0 0.0
        %2557 = vmatpush1.msra.mxu0 0.0
        %2558 = vmatprep.subr.mxu0 0.0
        %2559 = vmatpush1.msra.mxu0 0.0
        %2560 = vmatprep.subr.mxu0 0.0
        %2561 = vmatpush1.msra.mxu0 0.0
        %2562 = vmatprep.subr.mxu0 0.0
        %2563 = vmatpush1.msra.mxu0 0.0
        %2564 = vmatprep.subr.mxu0 0.0
        %2565 = vmatpush1.msra.mxu0 0.0
        %2566 = vmatprep.subr.mxu0 0.0
        %2567 = vmatpush1.msra.mxu0 0.0
        %2568 = vmatprep.subr.mxu0 0.0
        %2569 = vmatpush1.msra.mxu0 0.0
        %2570 = vmatprep.subr.mxu0 0.0
        %2571 = vmatpush1.msra.mxu0 0.0
        %2572 = vmatprep.subr.mxu0 0.0
        %2573 = vmatpush1.msra.mxu0 0.0
        %2574 = vmatprep.subr.mxu0 0.0
        %2575 = vmatpush1.msra.mxu0 0.0
        %2576 = vmatprep.subr.mxu0 0.0
        %2577 = vmatpush1.msra.mxu0 0.0
        %2578 = vmatprep.subr.mxu0 0.0
        %2579 = vmatpush1.msra.mxu0 0.0
        %2580 = vmatprep.subr.mxu0 0.0
        %2581 = vmatpush1.msra.mxu0 0.0
        %2582 = vmatprep.subr.mxu0 0.0
        %2583 = vmatpush1.msra.mxu0 0.0
        %2584 = vmatprep.subr.mxu0 0.0
        %2585 = vmatpush1.msra.mxu0 0.0
        %2586 = vmatprep.subr.mxu0 0.0
        %2587 = vmatpush1.msra.mxu0 0.0
        %2588 = vmatprep.subr.mxu0 0.0
        %2589 = vmatpush1.msra.mxu0 0.0
        %2590 = vmatprep.subr.mxu0 0.0
        %2591 = vmatpush1.msra.mxu0 0.0
        %2592 = vmatprep.subr.mxu0 0.0
        %2593 = vmatpush1.msra.mxu0 0.0
        %2594 = vmatprep.subr.mxu0 0.0
        %2595 = vmatpush1.msra.mxu0 0.0
        %2596 = vmatprep.subr.mxu0 0.0
        %2597 = vmatpush1.msra.mxu0 0.0
        %2598 = vmatprep.mubr.f32.mxu0 0.0
        %2599 = vmatmul.mubr.f32.gmra.mrb[0].mxu0 %v2511
        %v2600 = vpop.f32.mrb[0].mxu0
        %v2601 = vadd.f32 %v2472, %v2600
        %v2602 = vpop.f32.mrb[0].mxu0
        %2603 = vmatprep.mubr.f32.mxu0 0.0
        %2604 = vmatmul.mubr.f32.gmra.mrb[0].mxu0 %v2514
        %v2605 = vpop.f32.mrb[0].mxu0
        %v2606 = vadd.f32 %v2477, %v2605
        %v2607 = vpop.f32.mrb[0].mxu0
        %2608 = vmatprep.mubr.f32.mxu0 0.0
        %2609 = vmatmul.mubr.f32.gmra.mrb[0].mxu0 %v2517
        %v2610 = vpop.f32.mrb[0].mxu0
        %v2611 = vadd.f32 %v2482, %v2610
        %v2612 = vpop.f32.mrb[0].mxu0
        %2613 = vmatprep.mubr.f32.mxu0 0.0
        %2614 = vmatmul.mubr.f32.gmra.mrb[0].mxu0 %v2520
        %v2615 = vpop.f32.mrb[0].mxu0
        %v2616 = vadd.f32 %v2487, %v2615
        %v2617 = vpop.f32.mrb[0].mxu0
        %2618 = vmatprep.mubr.f32.mxu0 0.0
        %2619 = vmatmul.mubr.f32.gmra.mrb[0].mxu0 %v2523
        %v2620 = vpop.f32.mrb[0].mxu0
        %v2621 = vadd.f32 %v2492, %v2620
        %v2622 = vpop.f32.mrb[0].mxu0
        %2623 = vmatprep.mubr.f32.mxu0 0.0
        %2624 = vmatmul.mubr.f32.gmra.mrb[0].mxu0 %v2526
        %v2625 = vpop.f32.mrb[0].mxu0
        %v2626 = vadd.f32 %v2497, %v2625
        %v2627 = vpop.f32.mrb[0].mxu0
        %2628 = vmatprep.mubr.f32.mxu0 0.0
        %2629 = vmatmul.mubr.f32.gmra.mrb[0].mxu0 %v2529
        %v2630 = vpop.f32.mrb[0].mxu0
        %v2631 = vadd.f32 %v2502, %v2630
        %v2632 = vpop.f32.mrb[0].mxu0
        %2633 = vmatprep.mubr.f32.mxu0 0.0
        %2634 = vmatmul.mubr.f32.gmra.mrb[0].mxu0 %v2532
        %v2635 = vpop.f32.mrb[0].mxu0
        %v2636 = vadd.f32 %v2507, %v2635
        %v2637 = vpop.f32.mrb[0].mxu0
        %2638 = vdwg.mxu0
        %v2639 = vld [vmem:[#allocation3 + $0x9] sm:$0xff]
        %v2640 = vld [vmem:[#allocation3 + $0x21] sm:$0xff]
        %v2641 = vld [vmem:[#allocation3 + $0x39] sm:$0xff]
        %v2642 = vld [vmem:[#allocation3 + $0x51] sm:$0xff]
        %v2643 = vld [vmem:[#allocation3 + $0x69] sm:$0xff]
        %v2644 = vld [vmem:[#allocation3 + $0x81] sm:$0xff]
        %v2645 = vld [vmem:[#allocation3 + $0x99] sm:$0xff]
        %v2646 = vld [vmem:[#allocation3 + $0xb1] sm:$0xff]
        %s2647 = scalar_lea.vmem [#allocation9], 64
        %v2648 = vld [vmem:[%s2647] sm:$0xff]
        %v2649 = vld [vmem:[%s2647 + $0x8] sm:$0xff]
        %v2650 = vld [vmem:[%s2647 + $0x10] sm:$0xff]
        %v2651 = vld [vmem:[%s2647 + $0x18] sm:$0xff]
        %v2653 = vsel %vm2065, %v2639, 0
        %v2656 = vsel %vm2065, %v2640, 0
        %v2659 = vsel %vm2065, %v2641, 0
        %v2662 = vsel %vm2065, %v2642, 0
        %v2665 = vsel %vm2065, %v2643, 0
        %v2668 = vsel %vm2065, %v2644, 0
        %v2671 = vsel %vm2065, %v2645, 0
        %v2674 = vsel %vm2065, %v2646, 0
        %2676 = vmatprep.subr.mxu0 0.0
        %2677 = vmatpush1.msra.mxu0 %v2648
        %2678 = vmatprep.subr.mxu0 0.0
        %2679 = vmatpush1.msra.mxu0 %v2649
        %2680 = vmatprep.subr.mxu0 0.0
        %2681 = vmatpush1.msra.mxu0 %v2650
        %2682 = vmatprep.subr.mxu0 0.0
        %2683 = vmatpush1.msra.mxu0 %v2651
        %2684 = vmatprep.subr.mxu0 0.0
        %2685 = vmatpush1.msra.mxu0 0.0
        %2686 = vmatprep.subr.mxu0 0.0
        %2687 = vmatpush1.msra.mxu0 0.0
        %2688 = vmatprep.subr.mxu0 0.0
        %2689 = vmatpush1.msra.mxu0 0.0
        %2690 = vmatprep.subr.mxu0 0.0
        %2691 = vmatpush1.msra.mxu0 0.0
        %2692 = vmatprep.subr.mxu0 0.0
        %2693 = vmatpush1.msra.mxu0 0.0
        %2694 = vmatprep.subr.mxu0 0.0
        %2695 = vmatpush1.msra.mxu0 0.0
        %2696 = vmatprep.subr.mxu0 0.0
        %2697 = vmatpush1.msra.mxu0 0.0
        %2698 = vmatprep.subr.mxu0 0.0
        %2699 = vmatpush1.msra.mxu0 0.0
        %2700 = vmatprep.subr.mxu0 0.0
        %2701 = vmatpush1.msra.mxu0 0.0
        %2702 = vmatprep.subr.mxu0 0.0
        %2703 = vmatpush1.msra.mxu0 0.0
        %2704 = vmatprep.subr.mxu0 0.0
        %2705 = vmatpush1.msra.mxu0 0.0
        %2706 = vmatprep.subr.mxu0 0.0
        %2707 = vmatpush1.msra.mxu0 0.0
        %2708 = vmatprep.subr.mxu0 0.0
        %2709 = vmatpush1.msra.mxu0 0.0
        %2710 = vmatprep.subr.mxu0 0.0
        %2711 = vmatpush1.msra.mxu0 0.0
        %2712 = vmatprep.subr.mxu0 0.0
        %2713 = vmatpush1.msra.mxu0 0.0
        %2714 = vmatprep.subr.mxu0 0.0
        %2715 = vmatpush1.msra.mxu0 0.0
        %2716 = vmatprep.subr.mxu0 0.0
        %2717 = vmatpush1.msra.mxu0 0.0
        %2718 = vmatprep.subr.mxu0 0.0
        %2719 = vmatpush1.msra.mxu0 0.0
        %2720 = vmatprep.subr.mxu0 0.0
        %2721 = vmatpush1.msra.mxu0 0.0
        %2722 = vmatprep.subr.mxu0 0.0
        %2723 = vmatpush1.msra.mxu0 0.0
        %2724 = vmatprep.subr.mxu0 0.0
        %2725 = vmatpush1.msra.mxu0 0.0
        %2726 = vmatprep.subr.mxu0 0.0
        %2727 = vmatpush1.msra.mxu0 0.0
        %2728 = vmatprep.subr.mxu0 0.0
        %2729 = vmatpush1.msra.mxu0 0.0
        %2730 = vmatprep.subr.mxu0 0.0
        %2731 = vmatpush1.msra.mxu0 0.0
        %2732 = vmatprep.subr.mxu0 0.0
        %2733 = vmatpush1.msra.mxu0 0.0
        %2734 = vmatprep.subr.mxu0 0.0
        %2735 = vmatpush1.msra.mxu0 0.0
        %2736 = vmatprep.subr.mxu0 0.0
        %2737 = vmatpush1.msra.mxu0 0.0
        %2738 = vmatprep.subr.mxu0 0.0
        %2739 = vmatpush1.msra.mxu0 0.0
        %2740 = vmatprep.mubr.f32.mxu0 0.0
        %2741 = vmatmul.mubr.f32.gmra.mrb[0].mxu0 %v2653
        %v2742 = vpop.f32.mrb[0].mxu0
        %v2743 = vadd.f32 0.0, %v2742
        %v2744 = vpop.f32.mrb[0].mxu0
        %2745 = vmatprep.mubr.f32.mxu0 0.0
        %2746 = vmatmul.mubr.f32.gmra.mrb[0].mxu0 %v2656
        %v2747 = vpop.f32.mrb[0].mxu0
        %v2748 = vadd.f32 0.0, %v2747
        %v2749 = vpop.f32.mrb[0].mxu0
        %2750 = vmatprep.mubr.f32.mxu0 0.0
        %2751 = vmatmul.mubr.f32.gmra.mrb[0].mxu0 %v2659
        %v2752 = vpop.f32.mrb[0].mxu0
        %v2753 = vadd.f32 0.0, %v2752
        %v2754 = vpop.f32.mrb[0].mxu0
        %2755 = vmatprep.mubr.f32.mxu0 0.0
        %2756 = vmatmul.mubr.f32.gmra.mrb[0].mxu0 %v2662
        %v2757 = vpop.f32.mrb[0].mxu0
        %v2758 = vadd.f32 0.0, %v2757
        %v2759 = vpop.f32.mrb[0].mxu0
        %2760 = vmatprep.mubr.f32.mxu0 0.0
        %2761 = vmatmul.mubr.f32.gmra.mrb[0].mxu0 %v2665
        %v2762 = vpop.f32.mrb[0].mxu0
        %v2763 = vadd.f32 0.0, %v2762
        %v2764 = vpop.f32.mrb[0].mxu0
        %2765 = vmatprep.mubr.f32.mxu0 0.0
        %2766 = vmatmul.mubr.f32.gmra.mrb[0].mxu0 %v2668
        %v2767 = vpop.f32.mrb[0].mxu0
        %v2768 = vadd.f32 0.0, %v2767
        %v2769 = vpop.f32.mrb[0].mxu0
        %2770 = vmatprep.mubr.f32.mxu0 0.0
        %2771 = vmatmul.mubr.f32.gmra.mrb[0].mxu0 %v2671
        %v2772 = vpop.f32.mrb[0].mxu0
        %v2773 = vadd.f32 0.0, %v2772
        %v2774 = vpop.f32.mrb[0].mxu0
        %2775 = vmatprep.mubr.f32.mxu0 0.0
        %2776 = vmatmul.mubr.f32.gmra.mrb[0].mxu0 %v2674
        %v2777 = vpop.f32.mrb[0].mxu0
        %v2778 = vadd.f32 0.0, %v2777
        %v2779 = vpop.f32.mrb[0].mxu0
        %2780 = vdwg.mxu0
        %v2781 = vadd.f32 %v2601, %v2743
        %v2782 = vadd.f32 %v2606, %v2748
        %v2783 = vadd.f32 %v2611, %v2753
        %v2784 = vadd.f32 %v2616, %v2758
        %v2785 = vadd.f32 %v2621, %v2763
        %v2786 = vadd.f32 %v2626, %v2768
        %v2787 = vadd.f32 %v2631, %v2773
        %v2788 = vadd.f32 %v2636, %v2778
        %v2789 = vld [vmem:[%s2347 + $0x7] sm:$0xff]
        %v2790 = vld [vmem:[%s2347 + $0x1f] sm:$0xff]
        %v2791 = vld [vmem:[%s2347 + $0x37] sm:$0xff]
        %v2792 = vld [vmem:[%s2347 + $0x4f] sm:$0xff]
        %v2793 = vld [vmem:[%s2347 + $0x67] sm:$0xff]
        %v2794 = vld [vmem:[%s2347 + $0x7f] sm:$0xff]
        %v2795 = vld [vmem:[%s2347 + $0x97] sm:$0xff]
        %v2796 = vld [vmem:[%s2347 + $0xaf] sm:$0xff]
        %s2797 = scalar_lea.vmem [#allocation9], 96
        %v2798 = vld [vmem:[%s2797] sm:$0xff]
        %v2799 = vld [vmem:[%s2797 + $0x8] sm:$0xff]
        %v2800 = vld [vmem:[%s2797 + $0x10] sm:$0xff]
        %v2801 = vld [vmem:[%s2797 + $0x18] sm:$0xff]
        %v2803 = vsel %vm2065, %v2789, 0
        %v2806 = vsel %vm2065, %v2790, 0
        %v2809 = vsel %vm2065, %v2791, 0
        %v2812 = vsel %vm2065, %v2792, 0
        %v2815 = vsel %vm2065, %v2793, 0
        %v2818 = vsel %vm2065, %v2794, 0
        %v2821 = vsel %vm2065, %v2795, 0
        %v2824 = vsel %vm2065, %v2796, 0
        %2826 = vmatprep.subr.mxu0 0.0
        %2827 = vmatpush1.msra.mxu0 %v2798
        %2828 = vmatprep.subr.mxu0 0.0
        %2829 = vmatpush1.msra.mxu0 %v2799
        %2830 = vmatprep.subr.mxu0 0.0
        %2831 = vmatpush1.msra.mxu0 %v2800
        %2832 = vmatprep.subr.mxu0 0.0
        %2833 = vmatpush1.msra.mxu0 %v2801
        %2834 = vmatprep.subr.mxu0 0.0
        %2835 = vmatpush1.msra.mxu0 0.0
        %2836 = vmatprep.subr.mxu0 0.0
        %2837 = vmatpush1.msra.mxu0 0.0
        %2838 = vmatprep.subr.mxu0 0.0
        %2839 = vmatpush1.msra.mxu0 0.0
        %2840 = vmatprep.subr.mxu0 0.0
        %2841 = vmatpush1.msra.mxu0 0.0
        %2842 = vmatprep.subr.mxu0 0.0
        %2843 = vmatpush1.msra.mxu0 0.0
        %2844 = vmatprep.subr.mxu0 0.0
        %2845 = vmatpush1.msra.mxu0 0.0
        %2846 = vmatprep.subr.mxu0 0.0
        %2847 = vmatpush1.msra.mxu0 0.0
        %2848 = vmatprep.subr.mxu0 0.0
        %2849 = vmatpush1.msra.mxu0 0.0
        %2850 = vmatprep.subr.mxu0 0.0
        %2851 = vmatpush1.msra.mxu0 0.0
        %2852 = vmatprep.subr.mxu0 0.0
        %2853 = vmatpush1.msra.mxu0 0.0
        %2854 = vmatprep.subr.mxu0 0.0
        %2855 = vmatpush1.msra.mxu0 0.0
        %2856 = vmatprep.subr.mxu0 0.0
        %2857 = vmatpush1.msra.mxu0 0.0
        %2858 = vmatprep.subr.mxu0 0.0
        %2859 = vmatpush1.msra.mxu0 0.0
        %2860 = vmatprep.subr.mxu0 0.0
        %2861 = vmatpush1.msra.mxu0 0.0
        %2862 = vmatprep.subr.mxu0 0.0
        %2863 = vmatpush1.msra.mxu0 0.0
        %2864 = vmatprep.subr.mxu0 0.0
        %2865 = vmatpush1.msra.mxu0 0.0
        %2866 = vmatprep.subr.mxu0 0.0
        %2867 = vmatpush1.msra.mxu0 0.0
        %2868 = vmatprep.subr.mxu0 0.0
        %2869 = vmatpush1.msra.mxu0 0.0
        %2870 = vmatprep.subr.mxu0 0.0
        %2871 = vmatpush1.msra.mxu0 0.0
        %2872 = vmatprep.subr.mxu0 0.0
        %2873 = vmatpush1.msra.mxu0 0.0
        %2874 = vmatprep.subr.mxu0 0.0
        %2875 = vmatpush1.msra.mxu0 0.0
        %2876 = vmatprep.subr.mxu0 0.0
        %2877 = vmatpush1.msra.mxu0 0.0
        %2878 = vmatprep.subr.mxu0 0.0
        %2879 = vmatpush1.msra.mxu0 0.0
        %2880 = vmatprep.subr.mxu0 0.0
        %2881 = vmatpush1.msra.mxu0 0.0
        %2882 = vmatprep.subr.mxu0 0.0
        %2883 = vmatpush1.msra.mxu0 0.0
        %2884 = vmatprep.subr.mxu0 0.0
        %2885 = vmatpush1.msra.mxu0 0.0
        %2886 = vmatprep.subr.mxu0 0.0
        %2887 = vmatpush1.msra.mxu0 0.0
        %2888 = vmatprep.subr.mxu0 0.0
        %2889 = vmatpush1.msra.mxu0 0.0
        %2890 = vmatprep.mubr.f32.mxu0 0.0
        %2891 = vmatmul.mubr.f32.gmra.mrb[0].mxu0 %v2803
        %v2892 = vpop.f32.mrb[0].mxu0
        %v2893 = vadd.f32 0.0, %v2892
        %v2894 = vpop.f32.mrb[0].mxu0
        %2895 = vmatprep.mubr.f32.mxu0 0.0
        %2896 = vmatmul.mubr.f32.gmra.mrb[0].mxu0 %v2806
        %v2897 = vpop.f32.mrb[0].mxu0
        %v2898 = vadd.f32 0.0, %v2897
        %v2899 = vpop.f32.mrb[0].mxu0
        %2900 = vmatprep.mubr.f32.mxu0 0.0
        %2901 = vmatmul.mubr.f32.gmra.mrb[0].mxu0 %v2809
        %v2902 = vpop.f32.mrb[0].mxu0
        %v2903 = vadd.f32 0.0, %v2902
        %v2904 = vpop.f32.mrb[0].mxu0
        %2905 = vmatprep.mubr.f32.mxu0 0.0
        %2906 = vmatmul.mubr.f32.gmra.mrb[0].mxu0 %v2812
        %v2907 = vpop.f32.mrb[0].mxu0
        %v2908 = vadd.f32 0.0, %v2907
        %v2909 = vpop.f32.mrb[0].mxu0
        %2910 = vmatprep.mubr.f32.mxu0 0.0
        %2911 = vmatmul.mubr.f32.gmra.mrb[0].mxu0 %v2815
        %v2912 = vpop.f32.mrb[0].mxu0
        %v2913 = vadd.f32 0.0, %v2912
        %v2914 = vpop.f32.mrb[0].mxu0
        %2915 = vmatprep.mubr.f32.mxu0 0.0
        %2916 = vmatmul.mubr.f32.gmra.mrb[0].mxu0 %v2818
        %v2917 = vpop.f32.mrb[0].mxu0
        %v2918 = vadd.f32 0.0, %v2917
        %v2919 = vpop.f32.mrb[0].mxu0
        %2920 = vmatprep.mubr.f32.mxu0 0.0
        %2921 = vmatmul.mubr.f32.gmra.mrb[0].mxu0 %v2821
        %v2922 = vpop.f32.mrb[0].mxu0
        %v2923 = vadd.f32 0.0, %v2922
        %v2924 = vpop.f32.mrb[0].mxu0
        %2925 = vmatprep.mubr.f32.mxu0 0.0
        %2926 = vmatmul.mubr.f32.gmra.mrb[0].mxu0 %v2824
        %v2927 = vpop.f32.mrb[0].mxu0
        %v2928 = vadd.f32 0.0, %v2927
        %v2929 = vpop.f32.mrb[0].mxu0
        %2930 = vdwg.mxu0
        %v2931 = vadd.f32 %v2781, %v2893
        %v2932 = vadd.f32 %v2782, %v2898
        %v2933 = vadd.f32 %v2783, %v2903
        %v2934 = vadd.f32 %v2784, %v2908
        %v2935 = vadd.f32 %v2785, %v2913
        %v2936 = vadd.f32 %v2786, %v2918
        %v2937 = vadd.f32 %v2787, %v2923
        %v2938 = vadd.f32 %v2788, %v2928
        %v2939 = vld [vmem:[%s2347 + $0x8] sm:$0xff]
        %v2940 = vld [vmem:[%s2347 + $0x20] sm:$0xff]
        %v2941 = vld [vmem:[%s2347 + $0x38] sm:$0xff]
        %v2942 = vld [vmem:[%s2347 + $0x50] sm:$0xff]
        %v2943 = vld [vmem:[%s2347 + $0x68] sm:$0xff]
        %v2944 = vld [vmem:[%s2347 + $0x80] sm:$0xff]
        %v2945 = vld [vmem:[%s2347 + $0x98] sm:$0xff]
        %v2946 = vld [vmem:[%s2347 + $0xb0] sm:$0xff]
        %s2947 = scalar_lea.vmem [#allocation9], 128
        %v2948 = vld [vmem:[%s2947] sm:$0xff]
        %v2949 = vld [vmem:[%s2947 + $0x8] sm:$0xff]
        %v2950 = vld [vmem:[%s2947 + $0x10] sm:$0xff]
        %v2951 = vld [vmem:[%s2947 + $0x18] sm:$0xff]
        %v2953 = vsel %vm2065, %v2939, 0
        %v2956 = vsel %vm2065, %v2940, 0
        %v2959 = vsel %vm2065, %v2941, 0
        %v2962 = vsel %vm2065, %v2942, 0
        %v2965 = vsel %vm2065, %v2943, 0
        %v2968 = vsel %vm2065, %v2944, 0
        %v2971 = vsel %vm2065, %v2945, 0
        %v2974 = vsel %vm2065, %v2946, 0
        %2976 = vmatprep.subr.mxu0 0.0
        %2977 = vmatpush1.msra.mxu0 %v2948
        %2978 = vmatprep.subr.mxu0 0.0
        %2979 = vmatpush1.msra.mxu0 %v2949
        %2980 = vmatprep.subr.mxu0 0.0
        %2981 = vmatpush1.msra.mxu0 %v2950
        %2982 = vmatprep.subr.mxu0 0.0
        %2983 = vmatpush1.msra.mxu0 %v2951
        %2984 = vmatprep.subr.mxu0 0.0
        %2985 = vmatpush1.msra.mxu0 0.0
        %2986 = vmatprep.subr.mxu0 0.0
        %2987 = vmatpush1.msra.mxu0 0.0
        %2988 = vmatprep.subr.mxu0 0.0
        %2989 = vmatpush1.msra.mxu0 0.0
        %2990 = vmatprep.subr.mxu0 0.0
        %2991 = vmatpush1.msra.mxu0 0.0
        %2992 = vmatprep.subr.mxu0 0.0
        %2993 = vmatpush1.msra.mxu0 0.0
        %2994 = vmatprep.subr.mxu0 0.0
        %2995 = vmatpush1.msra.mxu0 0.0
        %2996 = vmatprep.subr.mxu0 0.0
        %2997 = vmatpush1.msra.mxu0 0.0
        %2998 = vmatprep.subr.mxu0 0.0
        %2999 = vmatpush1.msra.mxu0 0.0
        %3000 = vmatprep.subr.mxu0 0.0
        %3001 = vmatpush1.msra.mxu0 0.0
        %3002 = vmatprep.subr.mxu0 0.0
        %3003 = vmatpush1.msra.mxu0 0.0
        %3004 = vmatprep.subr.mxu0 0.0
        %3005 = vmatpush1.msra.mxu0 0.0
        %3006 = vmatprep.subr.mxu0 0.0
        %3007 = vmatpush1.msra.mxu0 0.0
        %3008 = vmatprep.subr.mxu0 0.0
        %3009 = vmatpush1.msra.mxu0 0.0
        %3010 = vmatprep.subr.mxu0 0.0
        %3011 = vmatpush1.msra.mxu0 0.0
        %3012 = vmatprep.subr.mxu0 0.0
        %3013 = vmatpush1.msra.mxu0 0.0
        %3014 = vmatprep.subr.mxu0 0.0
        %3015 = vmatpush1.msra.mxu0 0.0
        %3016 = vmatprep.subr.mxu0 0.0
        %3017 = vmatpush1.msra.mxu0 0.0
        %3018 = vmatprep.subr.mxu0 0.0
        %3019 = vmatpush1.msra.mxu0 0.0
        %3020 = vmatprep.subr.mxu0 0.0
        %3021 = vmatpush1.msra.mxu0 0.0
        %3022 = vmatprep.subr.mxu0 0.0
        %3023 = vmatpush1.msra.mxu0 0.0
        %3024 = vmatprep.subr.mxu0 0.0
        %3025 = vmatpush1.msra.mxu0 0.0
        %3026 = vmatprep.subr.mxu0 0.0
        %3027 = vmatpush1.msra.mxu0 0.0
        %3028 = vmatprep.subr.mxu0 0.0
        %3029 = vmatpush1.msra.mxu0 0.0
        %3030 = vmatprep.subr.mxu0 0.0
        %3031 = vmatpush1.msra.mxu0 0.0
        %3032 = vmatprep.subr.mxu0 0.0
        %3033 = vmatpush1.msra.mxu0 0.0
        %3034 = vmatprep.subr.mxu0 0.0
        %3035 = vmatpush1.msra.mxu0 0.0
        %3036 = vmatprep.subr.mxu0 0.0
        %3037 = vmatpush1.msra.mxu0 0.0
        %3038 = vmatprep.subr.mxu0 0.0
        %3039 = vmatpush1.msra.mxu0 0.0
        %3040 = vmatprep.mubr.f32.mxu0 0.0
        %3041 = vmatmul.mubr.f32.gmra.mrb[0].mxu0 %v2953
        %v3042 = vpop.f32.mrb[0].mxu0
        %v3043 = vadd.f32 0.0, %v3042
        %v3044 = vpop.f32.mrb[0].mxu0
        %3045 = vmatprep.mubr.f32.mxu0 0.0
        %3046 = vmatmul.mubr.f32.gmra.mrb[0].mxu0 %v2956
        %v3047 = vpop.f32.mrb[0].mxu0
        %v3048 = vadd.f32 0.0, %v3047
        %v3049 = vpop.f32.mrb[0].mxu0
        %3050 = vmatprep.mubr.f32.mxu0 0.0
        %3051 = vmatmul.mubr.f32.gmra.mrb[0].mxu0 %v2959
        %v3052 = vpop.f32.mrb[0].mxu0
        %v3053 = vadd.f32 0.0, %v3052
        %v3054 = vpop.f32.mrb[0].mxu0
        %3055 = vmatprep.mubr.f32.mxu0 0.0
        %3056 = vmatmul.mubr.f32.gmra.mrb[0].mxu0 %v2962
        %v3057 = vpop.f32.mrb[0].mxu0
        %v3058 = vadd.f32 0.0, %v3057
        %v3059 = vpop.f32.mrb[0].mxu0
        %3060 = vmatprep.mubr.f32.mxu0 0.0
        %3061 = vmatmul.mubr.f32.gmra.mrb[0].mxu0 %v2965
        %v3062 = vpop.f32.mrb[0].mxu0
        %v3063 = vadd.f32 0.0, %v3062
        %v3064 = vpop.f32.mrb[0].mxu0
        %3065 = vmatprep.mubr.f32.mxu0 0.0
        %3066 = vmatmul.mubr.f32.gmra.mrb[0].mxu0 %v2968
        %v3067 = vpop.f32.mrb[0].mxu0
        %v3068 = vadd.f32 0.0, %v3067
        %v3069 = vpop.f32.mrb[0].mxu0
        %3070 = vmatprep.mubr.f32.mxu0 0.0
        %3071 = vmatmul.mubr.f32.gmra.mrb[0].mxu0 %v2971
        %v3072 = vpop.f32.mrb[0].mxu0
        %v3073 = vadd.f32 0.0, %v3072
        %v3074 = vpop.f32.mrb[0].mxu0
        %3075 = vmatprep.mubr.f32.mxu0 0.0
        %3076 = vmatmul.mubr.f32.gmra.mrb[0].mxu0 %v2974
        %v3077 = vpop.f32.mrb[0].mxu0
        %v3078 = vadd.f32 0.0, %v3077
        %v3079 = vpop.f32.mrb[0].mxu0
        %3080 = vdwg.mxu0
        %v3081 = vadd.f32 %v2931, %v3043
        %v3082 = vadd.f32 %v2932, %v3048
        %v3083 = vadd.f32 %v2933, %v3053
        %v3084 = vadd.f32 %v2934, %v3058
        %v3085 = vadd.f32 %v2935, %v3063
        %v3086 = vadd.f32 %v2936, %v3068
        %v3087 = vadd.f32 %v2937, %v3073
        %v3088 = vadd.f32 %v2938, %v3078
        %v3089 = vld [vmem:[%s2347 + $0x9] sm:$0xff]
        %v3090 = vld [vmem:[%s2347 + $0x21] sm:$0xff]
        %v3091 = vld [vmem:[%s2347 + $0x39] sm:$0xff]
        %v3092 = vld [vmem:[%s2347 + $0x51] sm:$0xff]
        %v3093 = vld [vmem:[%s2347 + $0x69] sm:$0xff]
        %v3094 = vld [vmem:[%s2347 + $0x81] sm:$0xff]
        %v3095 = vld [vmem:[%s2347 + $0x99] sm:$0xff]
        %v3096 = vld [vmem:[%s2347 + $0xb1] sm:$0xff]
        %s3097 = scalar_lea.vmem [#allocation9], 160
        %v3098 = vld [vmem:[%s3097] sm:$0xff]
        %v3099 = vld [vmem:[%s3097 + $0x8] sm:$0xff]
        %v3100 = vld [vmem:[%s3097 + $0x10] sm:$0xff]
        %v3101 = vld [vmem:[%s3097 + $0x18] sm:$0xff]
        %v3103 = vsel %vm2065, %v3089, 0
        %v3106 = vsel %vm2065, %v3090, 0
        %v3109 = vsel %vm2065, %v3091, 0
        %v3112 = vsel %vm2065, %v3092, 0
        %v3115 = vsel %vm2065, %v3093, 0
        %v3118 = vsel %vm2065, %v3094, 0
        %v3121 = vsel %vm2065, %v3095, 0
        %v3124 = vsel %vm2065, %v3096, 0
        %3126 = vmatprep.subr.mxu0 0.0
        %3127 = vmatpush1.msra.mxu0 %v3098
        %3128 = vmatprep.subr.mxu0 0.0
        %3129 = vmatpush1.msra.mxu0 %v3099
        %3130 = vmatprep.subr.mxu0 0.0
        %3131 = vmatpush1.msra.mxu0 %v3100
        %3132 = vmatprep.subr.mxu0 0.0
        %3133 = vmatpush1.msra.mxu0 %v3101
        %3134 = vmatprep.subr.mxu0 0.0
        %3135 = vmatpush1.msra.mxu0 0.0
        %3136 = vmatprep.subr.mxu0 0.0
        %3137 = vmatpush1.msra.mxu0 0.0
        %3138 = vmatprep.subr.mxu0 0.0
        %3139 = vmatpush1.msra.mxu0 0.0
        %3140 = vmatprep.subr.mxu0 0.0
        %3141 = vmatpush1.msra.mxu0 0.0
        %3142 = vmatprep.subr.mxu0 0.0
        %3143 = vmatpush1.msra.mxu0 0.0
        %3144 = vmatprep.subr.mxu0 0.0
        %3145 = vmatpush1.msra.mxu0 0.0
        %3146 = vmatprep.subr.mxu0 0.0
        %3147 = vmatpush1.msra.mxu0 0.0
        %3148 = vmatprep.subr.mxu0 0.0
        %3149 = vmatpush1.msra.mxu0 0.0
        %3150 = vmatprep.subr.mxu0 0.0
        %3151 = vmatpush1.msra.mxu0 0.0
        %3152 = vmatprep.subr.mxu0 0.0
        %3153 = vmatpush1.msra.mxu0 0.0
        %3154 = vmatprep.subr.mxu0 0.0
        %3155 = vmatpush1.msra.mxu0 0.0
        %3156 = vmatprep.subr.mxu0 0.0
        %3157 = vmatpush1.msra.mxu0 0.0
        %3158 = vmatprep.subr.mxu0 0.0
        %3159 = vmatpush1.msra.mxu0 0.0
        %3160 = vmatprep.subr.mxu0 0.0
        %3161 = vmatpush1.msra.mxu0 0.0
        %3162 = vmatprep.subr.mxu0 0.0
        %3163 = vmatpush1.msra.mxu0 0.0
        %3164 = vmatprep.subr.mxu0 0.0
        %3165 = vmatpush1.msra.mxu0 0.0
        %3166 = vmatprep.subr.mxu0 0.0
        %3167 = vmatpush1.msra.mxu0 0.0
        %3168 = vmatprep.subr.mxu0 0.0
        %3169 = vmatpush1.msra.mxu0 0.0
        %3170 = vmatprep.subr.mxu0 0.0
        %3171 = vmatpush1.msra.mxu0 0.0
        %3172 = vmatprep.subr.mxu0 0.0
        %3173 = vmatpush1.msra.mxu0 0.0
        %3174 = vmatprep.subr.mxu0 0.0
        %3175 = vmatpush1.msra.mxu0 0.0
        %3176 = vmatprep.subr.mxu0 0.0
        %3177 = vmatpush1.msra.mxu0 0.0
        %3178 = vmatprep.subr.mxu0 0.0
        %3179 = vmatpush1.msra.mxu0 0.0
        %3180 = vmatprep.subr.mxu0 0.0
        %3181 = vmatpush1.msra.mxu0 0.0
        %3182 = vmatprep.subr.mxu0 0.0
        %3183 = vmatpush1.msra.mxu0 0.0
        %3184 = vmatprep.subr.mxu0 0.0
        %3185 = vmatpush1.msra.mxu0 0.0
        %3186 = vmatprep.subr.mxu0 0.0
        %3187 = vmatpush1.msra.mxu0 0.0
        %3188 = vmatprep.subr.mxu0 0.0
        %3189 = vmatpush1.msra.mxu0 0.0
        %3190 = vmatprep.mubr.f32.mxu0 0.0
        %3191 = vmatmul.mubr.f32.gmra.mrb[0].mxu0 %v3103
        %v3192 = vpop.f32.mrb[0].mxu0
        %v3193 = vadd.f32 0.0, %v3192
        %v3194 = vpop.f32.mrb[0].mxu0
        %3195 = vmatprep.mubr.f32.mxu0 0.0
        %3196 = vmatmul.mubr.f32.gmra.mrb[0].mxu0 %v3106
        %v3197 = vpop.f32.mrb[0].mxu0
        %v3198 = vadd.f32 0.0, %v3197
        %v3199 = vpop.f32.mrb[0].mxu0
        %3200 = vmatprep.mubr.f32.mxu0 0.0
        %3201 = vmatmul.mubr.f32.gmra.mrb[0].mxu0 %v3109
        %v3202 = vpop.f32.mrb[0].mxu0
        %v3203 = vadd.f32 0.0, %v3202
        %v3204 = vpop.f32.mrb[0].mxu0
        %3205 = vmatprep.mubr.f32.mxu0 0.0
        %3206 = vmatmul.mubr.f32.gmra.mrb[0].mxu0 %v3112
        %v3207 = vpop.f32.mrb[0].mxu0
        %v3208 = vadd.f32 0.0, %v3207
        %v3209 = vpop.f32.mrb[0].mxu0
        %3210 = vmatprep.mubr.f32.mxu0 0.0
        %3211 = vmatmul.mubr.f32.gmra.mrb[0].mxu0 %v3115
        %v3212 = vpop.f32.mrb[0].mxu0
        %v3213 = vadd.f32 0.0, %v3212
        %v3214 = vpop.f32.mrb[0].mxu0
        %3215 = vmatprep.mubr.f32.mxu0 0.0
        %3216 = vmatmul.mubr.f32.gmra.mrb[0].mxu0 %v3118
        %v3217 = vpop.f32.mrb[0].mxu0
        %v3218 = vadd.f32 0.0, %v3217
        %v3219 = vpop.f32.mrb[0].mxu0
        %3220 = vmatprep.mubr.f32.mxu0 0.0
        %3221 = vmatmul.mubr.f32.gmra.mrb[0].mxu0 %v3121
        %v3222 = vpop.f32.mrb[0].mxu0
        %v3223 = vadd.f32 0.0, %v3222
        %v3224 = vpop.f32.mrb[0].mxu0
        %3225 = vmatprep.mubr.f32.mxu0 0.0
        %3226 = vmatmul.mubr.f32.gmra.mrb[0].mxu0 %v3124
        %v3227 = vpop.f32.mrb[0].mxu0
        %v3228 = vadd.f32 0.0, %v3227
        %v3229 = vpop.f32.mrb[0].mxu0
        %3230 = vdwg.mxu0
        %v3231 = vadd.f32 %v3081, %v3193
        %v3232 = vadd.f32 %v3082, %v3198
        %v3233 = vadd.f32 %v3083, %v3203
        %v3234 = vadd.f32 %v3084, %v3208
        %v3235 = vadd.f32 %v3085, %v3213
        %v3236 = vadd.f32 %v3086, %v3218
        %v3237 = vadd.f32 %v3087, %v3223
        %v3238 = vadd.f32 %v3088, %v3228
        %s3239 = scalar_lea.vmem [#allocation3], 48
        %v3240 = vld [vmem:[%s3239 + $0x7] sm:$0xff]
        %v3241 = vld [vmem:[%s3239 + $0x1f] sm:$0xff]
        %v3242 = vld [vmem:[%s3239 + $0x37] sm:$0xff]
        %v3243 = vld [vmem:[%s3239 + $0x4f] sm:$0xff]
        %v3244 = vld [vmem:[%s3239 + $0x67] sm:$0xff]
        %v3245 = vld [vmem:[%s3239 + $0x7f] sm:$0xff]
        %v3246 = vld [vmem:[%s3239 + $0x97] sm:$0xff]
        %v3247 = vld [vmem:[%s3239 + $0xaf] sm:$0xff]
        %s3248 = scalar_lea.vmem [#allocation9], 192
        %v3249 = vld [vmem:[%s3248] sm:$0xff]
        %v3250 = vld [vmem:[%s3248 + $0x8] sm:$0xff]
        %v3251 = vld [vmem:[%s3248 + $0x10] sm:$0xff]
        %v3252 = vld [vmem:[%s3248 + $0x18] sm:$0xff]
        %v3254 = vsel %vm2065, %v3240, 0
        %v3257 = vsel %vm2065, %v3241, 0
        %v3260 = vsel %vm2065, %v3242, 0
        %v3263 = vsel %vm2065, %v3243, 0
        %v3266 = vsel %vm2065, %v3244, 0
        %v3269 = vsel %vm2065, %v3245, 0
        %v3272 = vsel %vm2065, %v3246, 0
        %v3275 = vsel %vm2065, %v3247, 0
        %3277 = vmatprep.subr.mxu0 0.0
        %3278 = vmatpush1.msra.mxu0 %v3249
        %3279 = vmatprep.subr.mxu0 0.0
        %3280 = vmatpush1.msra.mxu0 %v3250
        %3281 = vmatprep.subr.mxu0 0.0
        %3282 = vmatpush1.msra.mxu0 %v3251
        %3283 = vmatprep.subr.mxu0 0.0
        %3284 = vmatpush1.msra.mxu0 %v3252
        %3285 = vmatprep.subr.mxu0 0.0
        %3286 = vmatpush1.msra.mxu0 0.0
        %3287 = vmatprep.subr.mxu0 0.0
        %3288 = vmatpush1.msra.mxu0 0.0
        %3289 = vmatprep.subr.mxu0 0.0
        %3290 = vmatpush1.msra.mxu0 0.0
        %3291 = vmatprep.subr.mxu0 0.0
        %3292 = vmatpush1.msra.mxu0 0.0
        %3293 = vmatprep.subr.mxu0 0.0
        %3294 = vmatpush1.msra.mxu0 0.0
        %3295 = vmatprep.subr.mxu0 0.0
        %3296 = vmatpush1.msra.mxu0 0.0
        %3297 = vmatprep.subr.mxu0 0.0
        %3298 = vmatpush1.msra.mxu0 0.0
        %3299 = vmatprep.subr.mxu0 0.0
        %3300 = vmatpush1.msra.mxu0 0.0
        %3301 = vmatprep.subr.mxu0 0.0
        %3302 = vmatpush1.msra.mxu0 0.0
        %3303 = vmatprep.subr.mxu0 0.0
        %3304 = vmatpush1.msra.mxu0 0.0
        %3305 = vmatprep.subr.mxu0 0.0
        %3306 = vmatpush1.msra.mxu0 0.0
        %3307 = vmatprep.subr.mxu0 0.0
        %3308 = vmatpush1.msra.mxu0 0.0
        %3309 = vmatprep.subr.mxu0 0.0
        %3310 = vmatpush1.msra.mxu0 0.0
        %3311 = vmatprep.subr.mxu0 0.0
        %3312 = vmatpush1.msra.mxu0 0.0
        %3313 = vmatprep.subr.mxu0 0.0
        %3314 = vmatpush1.msra.mxu0 0.0
        %3315 = vmatprep.subr.mxu0 0.0
        %3316 = vmatpush1.msra.mxu0 0.0
        %3317 = vmatprep.subr.mxu0 0.0
        %3318 = vmatpush1.msra.mxu0 0.0
        %3319 = vmatprep.subr.mxu0 0.0
        %3320 = vmatpush1.msra.mxu0 0.0
        %3321 = vmatprep.subr.mxu0 0.0
        %3322 = vmatpush1.msra.mxu0 0.0
        %3323 = vmatprep.subr.mxu0 0.0
        %3324 = vmatpush1.msra.mxu0 0.0
        %3325 = vmatprep.subr.mxu0 0.0
        %3326 = vmatpush1.msra.mxu0 0.0
        %3327 = vmatprep.subr.mxu0 0.0
        %3328 = vmatpush1.msra.mxu0 0.0
        %3329 = vmatprep.subr.mxu0 0.0
        %3330 = vmatpush1.msra.mxu0 0.0
        %3331 = vmatprep.subr.mxu0 0.0
        %3332 = vmatpush1.msra.mxu0 0.0
        %3333 = vmatprep.subr.mxu0 0.0
        %3334 = vmatpush1.msra.mxu0 0.0
        %3335 = vmatprep.subr.mxu0 0.0
        %3336 = vmatpush1.msra.mxu0 0.0
        %3337 = vmatprep.subr.mxu0 0.0
        %3338 = vmatpush1.msra.mxu0 0.0
        %3339 = vmatprep.subr.mxu0 0.0
        %3340 = vmatpush1.msra.mxu0 0.0
        %3341 = vmatprep.mubr.f32.mxu0 0.0
        %3342 = vmatmul.mubr.f32.gmra.mrb[0].mxu0 %v3254
        %v3343 = vpop.f32.mrb[0].mxu0
        %v3344 = vadd.f32 0.0, %v3343
        %v3345 = vpop.f32.mrb[0].mxu0
        %3346 = vmatprep.mubr.f32.mxu0 0.0
        %3347 = vmatmul.mubr.f32.gmra.mrb[0].mxu0 %v3257
        %v3348 = vpop.f32.mrb[0].mxu0
        %v3349 = vadd.f32 0.0, %v3348
        %v3350 = vpop.f32.mrb[0].mxu0
        %3351 = vmatprep.mubr.f32.mxu0 0.0
        %3352 = vmatmul.mubr.f32.gmra.mrb[0].mxu0 %v3260
        %v3353 = vpop.f32.mrb[0].mxu0
        %v3354 = vadd.f32 0.0, %v3353
        %v3355 = vpop.f32.mrb[0].mxu0
        %3356 = vmatprep.mubr.f32.mxu0 0.0
        %3357 = vmatmul.mubr.f32.gmra.mrb[0].mxu0 %v3263
        %v3358 = vpop.f32.mrb[0].mxu0
        %v3359 = vadd.f32 0.0, %v3358
        %v3360 = vpop.f32.mrb[0].mxu0
        %3361 = vmatprep.mubr.f32.mxu0 0.0
        %3362 = vmatmul.mubr.f32.gmra.mrb[0].mxu0 %v3266
        %v3363 = vpop.f32.mrb[0].mxu0
        %v3364 = vadd.f32 0.0, %v3363
        %v3365 = vpop.f32.mrb[0].mxu0
        %3366 = vmatprep.mubr.f32.mxu0 0.0
        %3367 = vmatmul.mubr.f32.gmra.mrb[0].mxu0 %v3269
        %v3368 = vpop.f32.mrb[0].mxu0
        %v3369 = vadd.f32 0.0, %v3368
        %v3370 = vpop.f32.mrb[0].mxu0
        %3371 = vmatprep.mubr.f32.mxu0 0.0
        %3372 = vmatmul.mubr.f32.gmra.mrb[0].mxu0 %v3272
        %v3373 = vpop.f32.mrb[0].mxu0
        %v3374 = vadd.f32 0.0, %v3373
        %v3375 = vpop.f32.mrb[0].mxu0
        %3376 = vmatprep.mubr.f32.mxu0 0.0
        %3377 = vmatmul.mubr.f32.gmra.mrb[0].mxu0 %v3275
        %v3378 = vpop.f32.mrb[0].mxu0
        %v3379 = vadd.f32 0.0, %v3378
        %v3380 = vpop.f32.mrb[0].mxu0
        %3381 = vdwg.mxu0
        %v3382 = vadd.f32 %v3231, %v3344
        %v3383 = vadd.f32 %v3232, %v3349
        %v3384 = vadd.f32 %v3233, %v3354
        %v3385 = vadd.f32 %v3234, %v3359
        %v3386 = vadd.f32 %v3235, %v3364
        %v3387 = vadd.f32 %v3236, %v3369
        %v3388 = vadd.f32 %v3237, %v3374
        %v3389 = vadd.f32 %v3238, %v3379
        %v3390 = vld [vmem:[%s3239 + $0x8] sm:$0xff]
        %v3391 = vld [vmem:[%s3239 + $0x20] sm:$0xff]
        %v3392 = vld [vmem:[%s3239 + $0x38] sm:$0xff]
        %v3393 = vld [vmem:[%s3239 + $0x50] sm:$0xff]
        %v3394 = vld [vmem:[%s3239 + $0x68] sm:$0xff]
        %v3395 = vld [vmem:[%s3239 + $0x80] sm:$0xff]
        %v3396 = vld [vmem:[%s3239 + $0x98] sm:$0xff]
        %v3397 = vld [vmem:[%s3239 + $0xb0] sm:$0xff]
        %s3398 = scalar_lea.vmem [#allocation9], 224
        %v3399 = vld [vmem:[%s3398] sm:$0xff]
        %v3400 = vld [vmem:[%s3398 + $0x8] sm:$0xff]
        %v3401 = vld [vmem:[%s3398 + $0x10] sm:$0xff]
        %v3402 = vld [vmem:[%s3398 + $0x18] sm:$0xff]
        %v3404 = vsel %vm2065, %v3390, 0
        %v3407 = vsel %vm2065, %v3391, 0
        %v3410 = vsel %vm2065, %v3392, 0
        %v3413 = vsel %vm2065, %v3393, 0
        %v3416 = vsel %vm2065, %v3394, 0
        %v3419 = vsel %vm2065, %v3395, 0
        %v3422 = vsel %vm2065, %v3396, 0
        %v3425 = vsel %vm2065, %v3397, 0
        %3427 = vmatprep.subr.mxu0 0.0
        %3428 = vmatpush1.msra.mxu0 %v3399
        %3429 = vmatprep.subr.mxu0 0.0
        %3430 = vmatpush1.msra.mxu0 %v3400
        %3431 = vmatprep.subr.mxu0 0.0
        %3432 = vmatpush1.msra.mxu0 %v3401
        %3433 = vmatprep.subr.mxu0 0.0
        %3434 = vmatpush1.msra.mxu0 %v3402
        %3435 = vmatprep.subr.mxu0 0.0
        %3436 = vmatpush1.msra.mxu0 0.0
        %3437 = vmatprep.subr.mxu0 0.0
        %3438 = vmatpush1.msra.mxu0 0.0
        %3439 = vmatprep.subr.mxu0 0.0
        %3440 = vmatpush1.msra.mxu0 0.0
        %3441 = vmatprep.subr.mxu0 0.0
        %3442 = vmatpush1.msra.mxu0 0.0
        %3443 = vmatprep.subr.mxu0 0.0
        %3444 = vmatpush1.msra.mxu0 0.0
        %3445 = vmatprep.subr.mxu0 0.0
        %3446 = vmatpush1.msra.mxu0 0.0
        %3447 = vmatprep.subr.mxu0 0.0
        %3448 = vmatpush1.msra.mxu0 0.0
        %3449 = vmatprep.subr.mxu0 0.0
        %3450 = vmatpush1.msra.mxu0 0.0
        %3451 = vmatprep.subr.mxu0 0.0
        %3452 = vmatpush1.msra.mxu0 0.0
        %3453 = vmatprep.subr.mxu0 0.0
        %3454 = vmatpush1.msra.mxu0 0.0
        %3455 = vmatprep.subr.mxu0 0.0
        %3456 = vmatpush1.msra.mxu0 0.0
        %3457 = vmatprep.subr.mxu0 0.0
        %3458 = vmatpush1.msra.mxu0 0.0
        %3459 = vmatprep.subr.mxu0 0.0
        %3460 = vmatpush1.msra.mxu0 0.0
        %3461 = vmatprep.subr.mxu0 0.0
        %3462 = vmatpush1.msra.mxu0 0.0
        %3463 = vmatprep.subr.mxu0 0.0
        %3464 = vmatpush1.msra.mxu0 0.0
        %3465 = vmatprep.subr.mxu0 0.0
        %3466 = vmatpush1.msra.mxu0 0.0
        %3467 = vmatprep.subr.mxu0 0.0
        %3468 = vmatpush1.msra.mxu0 0.0
        %3469 = vmatprep.subr.mxu0 0.0
        %3470 = vmatpush1.msra.mxu0 0.0
        %3471 = vmatprep.subr.mxu0 0.0
        %3472 = vmatpush1.msra.mxu0 0.0
        %3473 = vmatprep.subr.mxu0 0.0
        %3474 = vmatpush1.msra.mxu0 0.0
        %3475 = vmatprep.subr.mxu0 0.0
        %3476 = vmatpush1.msra.mxu0 0.0
        %3477 = vmatprep.subr.mxu0 0.0
        %3478 = vmatpush1.msra.mxu0 0.0
        %3479 = vmatprep.subr.mxu0 0.0
        %3480 = vmatpush1.msra.mxu0 0.0
        %3481 = vmatprep.subr.mxu0 0.0
        %3482 = vmatpush1.msra.mxu0 0.0
        %3483 = vmatprep.subr.mxu0 0.0
        %3484 = vmatpush1.msra.mxu0 0.0
        %3485 = vmatprep.subr.mxu0 0.0
        %3486 = vmatpush1.msra.mxu0 0.0
        %3487 = vmatprep.subr.mxu0 0.0
        %3488 = vmatpush1.msra.mxu0 0.0
        %3489 = vmatprep.subr.mxu0 0.0
        %3490 = vmatpush1.msra.mxu0 0.0
        %3491 = vmatprep.mubr.f32.mxu0 0.0
        %3492 = vmatmul.mubr.f32.gmra.mrb[0].mxu0 %v3404
        %v3493 = vpop.f32.mrb[0].mxu0
        %v3494 = vadd.f32 0.0, %v3493
        %v3495 = vpop.f32.mrb[0].mxu0
        %3496 = vmatprep.mubr.f32.mxu0 0.0
        %3497 = vmatmul.mubr.f32.gmra.mrb[0].mxu0 %v3407
        %v3498 = vpop.f32.mrb[0].mxu0
        %v3499 = vadd.f32 0.0, %v3498
        %v3500 = vpop.f32.mrb[0].mxu0
        %3501 = vmatprep.mubr.f32.mxu0 0.0
        %3502 = vmatmul.mubr.f32.gmra.mrb[0].mxu0 %v3410
        %v3503 = vpop.f32.mrb[0].mxu0
        %v3504 = vadd.f32 0.0, %v3503
        %v3505 = vpop.f32.mrb[0].mxu0
        %3506 = vmatprep.mubr.f32.mxu0 0.0
        %3507 = vmatmul.mubr.f32.gmra.mrb[0].mxu0 %v3413
        %v3508 = vpop.f32.mrb[0].mxu0
        %v3509 = vadd.f32 0.0, %v3508
        %v3510 = vpop.f32.mrb[0].mxu0
        %3511 = vmatprep.mubr.f32.mxu0 0.0
        %3512 = vmatmul.mubr.f32.gmra.mrb[0].mxu0 %v3416
        %v3513 = vpop.f32.mrb[0].mxu0
        %v3514 = vadd.f32 0.0, %v3513
        %v3515 = vpop.f32.mrb[0].mxu0
        %3516 = vmatprep.mubr.f32.mxu0 0.0
        %3517 = vmatmul.mubr.f32.gmra.mrb[0].mxu0 %v3419
        %v3518 = vpop.f32.mrb[0].mxu0
        %v3519 = vadd.f32 0.0, %v3518
        %v3520 = vpop.f32.mrb[0].mxu0
        %3521 = vmatprep.mubr.f32.mxu0 0.0
        %3522 = vmatmul.mubr.f32.gmra.mrb[0].mxu0 %v3422
        %v3523 = vpop.f32.mrb[0].mxu0
        %v3524 = vadd.f32 0.0, %v3523
        %v3525 = vpop.f32.mrb[0].mxu0
        %3526 = vmatprep.mubr.f32.mxu0 0.0
        %3527 = vmatmul.mubr.f32.gmra.mrb[0].mxu0 %v3425
        %v3528 = vpop.f32.mrb[0].mxu0
        %v3529 = vadd.f32 0.0, %v3528
        %v3530 = vpop.f32.mrb[0].mxu0
        %3531 = vdwg.mxu0
        %v3532 = vadd.f32 %v3382, %v3494
        %v3533 = vadd.f32 %v3383, %v3499
        %v3534 = vadd.f32 %v3384, %v3504
        %v3535 = vadd.f32 %v3385, %v3509
        %v3536 = vadd.f32 %v3386, %v3514
        %v3537 = vadd.f32 %v3387, %v3519
        %v3538 = vadd.f32 %v3388, %v3524
        %v3539 = vadd.f32 %v3389, %v3529
        %v3540 = vld [vmem:[%s3239 + $0x9] sm:$0xff]
        %v3541 = vld [vmem:[%s3239 + $0x21] sm:$0xff]
        %v3542 = vld [vmem:[%s3239 + $0x39] sm:$0xff]
        %v3543 = vld [vmem:[%s3239 + $0x51] sm:$0xff]
        %v3544 = vld [vmem:[%s3239 + $0x69] sm:$0xff]
        %v3545 = vld [vmem:[%s3239 + $0x81] sm:$0xff]
        %v3546 = vld [vmem:[%s3239 + $0x99] sm:$0xff]
        %v3547 = vld [vmem:[%s3239 + $0xb1] sm:$0xff]
        %s3548 = scalar_lea.vmem [#allocation9], 256
        %v3549 = vld [vmem:[%s3548] sm:$0xff]
        %v3550 = vld [vmem:[%s3548 + $0x8] sm:$0xff]
        %v3551 = vld [vmem:[%s3548 + $0x10] sm:$0xff]
        %v3552 = vld [vmem:[%s3548 + $0x18] sm:$0xff]
        %v3554 = vsel %vm2065, %v3540, 0
        %v3557 = vsel %vm2065, %v3541, 0
        %v3560 = vsel %vm2065, %v3542, 0
        %v3563 = vsel %vm2065, %v3543, 0
        %v3566 = vsel %vm2065, %v3544, 0
        %v3569 = vsel %vm2065, %v3545, 0
        %v3572 = vsel %vm2065, %v3546, 0
        %v3575 = vsel %vm2065, %v3547, 0
        %3577 = vmatprep.subr.mxu0 0.0
        %3578 = vmatpush1.msra.mxu0 %v3549
        %3579 = vmatprep.subr.mxu0 0.0
        %3580 = vmatpush1.msra.mxu0 %v3550
        %3581 = vmatprep.subr.mxu0 0.0
        %3582 = vmatpush1.msra.mxu0 %v3551
        %3583 = vmatprep.subr.mxu0 0.0
        %3584 = vmatpush1.msra.mxu0 %v3552
        %3585 = vmatprep.subr.mxu0 0.0
        %3586 = vmatpush1.msra.mxu0 0.0
        %3587 = vmatprep.subr.mxu0 0.0
        %3588 = vmatpush1.msra.mxu0 0.0
        %3589 = vmatprep.subr.mxu0 0.0
        %3590 = vmatpush1.msra.mxu0 0.0
        %3591 = vmatprep.subr.mxu0 0.0
        %3592 = vmatpush1.msra.mxu0 0.0
        %3593 = vmatprep.subr.mxu0 0.0
        %3594 = vmatpush1.msra.mxu0 0.0
        %3595 = vmatprep.subr.mxu0 0.0
        %3596 = vmatpush1.msra.mxu0 0.0
        %3597 = vmatprep.subr.mxu0 0.0
        %3598 = vmatpush1.msra.mxu0 0.0
        %3599 = vmatprep.subr.mxu0 0.0
        %3600 = vmatpush1.msra.mxu0 0.0
        %3601 = vmatprep.subr.mxu0 0.0
        %3602 = vmatpush1.msra.mxu0 0.0
        %3603 = vmatprep.subr.mxu0 0.0
        %3604 = vmatpush1.msra.mxu0 0.0
        %3605 = vmatprep.subr.mxu0 0.0
        %3606 = vmatpush1.msra.mxu0 0.0
        %3607 = vmatprep.subr.mxu0 0.0
        %3608 = vmatpush1.msra.mxu0 0.0
        %3609 = vmatprep.subr.mxu0 0.0
        %3610 = vmatpush1.msra.mxu0 0.0
        %3611 = vmatprep.subr.mxu0 0.0
        %3612 = vmatpush1.msra.mxu0 0.0
        %3613 = vmatprep.subr.mxu0 0.0
        %3614 = vmatpush1.msra.mxu0 0.0
        %3615 = vmatprep.subr.mxu0 0.0
        %3616 = vmatpush1.msra.mxu0 0.0
        %3617 = vmatprep.subr.mxu0 0.0
        %3618 = vmatpush1.msra.mxu0 0.0
        %3619 = vmatprep.subr.mxu0 0.0
        %3620 = vmatpush1.msra.mxu0 0.0
        %3621 = vmatprep.subr.mxu0 0.0
        %3622 = vmatpush1.msra.mxu0 0.0
        %3623 = vmatprep.subr.mxu0 0.0
        %3624 = vmatpush1.msra.mxu0 0.0
        %3625 = vmatprep.subr.mxu0 0.0
        %3626 = vmatpush1.msra.mxu0 0.0
        %3627 = vmatprep.subr.mxu0 0.0
        %3628 = vmatpush1.msra.mxu0 0.0
        %3629 = vmatprep.subr.mxu0 0.0
        %3630 = vmatpush1.msra.mxu0 0.0
        %3631 = vmatprep.subr.mxu0 0.0
        %3632 = vmatpush1.msra.mxu0 0.0
        %3633 = vmatprep.subr.mxu0 0.0
        %3634 = vmatpush1.msra.mxu0 0.0
        %3635 = vmatprep.subr.mxu0 0.0
        %3636 = vmatpush1.msra.mxu0 0.0
        %3637 = vmatprep.subr.mxu0 0.0
        %3638 = vmatpush1.msra.mxu0 0.0
        %3639 = vmatprep.subr.mxu0 0.0
        %3640 = vmatpush1.msra.mxu0 0.0
        %3641 = vmatprep.mubr.f32.mxu0 0.0
        %3642 = vmatmul.mubr.f32.gmra.mrb[0].mxu0 %v3554
        %v3643 = vpop.f32.mrb[0].mxu0
        %v3644 = vadd.f32 0.0, %v3643
        %v3645 = vpop.f32.mrb[0].mxu0
        %3646 = vmatprep.mubr.f32.mxu0 0.0
        %3647 = vmatmul.mubr.f32.gmra.mrb[0].mxu0 %v3557
        %v3648 = vpop.f32.mrb[0].mxu0
        %v3649 = vadd.f32 0.0, %v3648
        %v3650 = vpop.f32.mrb[0].mxu0
        %3651 = vmatprep.mubr.f32.mxu0 0.0
        %3652 = vmatmul.mubr.f32.gmra.mrb[0].mxu0 %v3560
        %v3653 = vpop.f32.mrb[0].mxu0
        %v3654 = vadd.f32 0.0, %v3653
        %v3655 = vpop.f32.mrb[0].mxu0
        %3656 = vmatprep.mubr.f32.mxu0 0.0
        %3657 = vmatmul.mubr.f32.gmra.mrb[0].mxu0 %v3563
        %v3658 = vpop.f32.mrb[0].mxu0
        %v3659 = vadd.f32 0.0, %v3658
        %v3660 = vpop.f32.mrb[0].mxu0
        %3661 = vmatprep.mubr.f32.mxu0 0.0
        %3662 = vmatmul.mubr.f32.gmra.mrb[0].mxu0 %v3566
        %v3663 = vpop.f32.mrb[0].mxu0
        %v3664 = vadd.f32 0.0, %v3663
        %v3665 = vpop.f32.mrb[0].mxu0
        %3666 = vmatprep.mubr.f32.mxu0 0.0
        %3667 = vmatmul.mubr.f32.gmra.mrb[0].mxu0 %v3569
        %v3668 = vpop.f32.mrb[0].mxu0
        %v3669 = vadd.f32 0.0, %v3668
        %v3670 = vpop.f32.mrb[0].mxu0
        %3671 = vmatprep.mubr.f32.mxu0 0.0
        %3672 = vmatmul.mubr.f32.gmra.mrb[0].mxu0 %v3572
        %v3673 = vpop.f32.mrb[0].mxu0
        %v3674 = vadd.f32 0.0, %v3673
        %v3675 = vpop.f32.mrb[0].mxu0
        %3676 = vmatprep.mubr.f32.mxu0 0.0
        %3677 = vmatmul.mubr.f32.gmra.mrb[0].mxu0 %v3575
        %v3678 = vpop.f32.mrb[0].mxu0
        %v3679 = vadd.f32 0.0, %v3678
        %v3680 = vpop.f32.mrb[0].mxu0
        %3681 = vdwg.mxu0
        %v3682 = vadd.f32 %v3532, %v3644
        %v3683 = vadd.f32 %v3533, %v3649
        %v3684 = vadd.f32 %v3534, %v3654
        %v3685 = vadd.f32 %v3535, %v3659
        %v3686 = vadd.f32 %v3536, %v3664
        %v3687 = vadd.f32 %v3537, %v3669
        %v3688 = vadd.f32 %v3538, %v3674
        %v3689 = vadd.f32 %v3539, %v3679
        %v3690 = vld [vmem:[%s12] sm:$0xff]
        %v3691 = vld [vmem:[%s12 + $0x8] sm:$0xff]
        %v3692 = vld [vmem:[%s13] sm:$0x1]
        %v3694 = vlaneseq
        %v3695 = vshrl.u32 %v3694, 7
        %v3696 = vsub.s32 0, %v3695
        %v3697 = vrot.slane %v3692, %v3696
        %v3700 = vsel %vm537, %v529, 0
        %v3703 = vsel %vm537, %v530, 0
        %v3706 = vsel %vm537, %v531, 0
        %v3709 = vsel %vm537, %v532, 0
        %v3712 = vsel %vm537, %v533, 0
        %v3715 = vsel %vm537, %v534, 0
        %v3718 = vsel %vm537, %v535, 0
        %v3721 = vsel %vm537, %v536, 0
        %3723 = vmatprep.subr.mxu0 0.0
        %3724 = vmatpush1.msra.mxu0 %v3690
        %3725 = vmatprep.subr.mxu0 0.0
        %3726 = vmatpush1.msra.mxu0 %v3691
        %3727 = vmatprep.subr.mxu0 0.0
        %3728 = vmatpush1.msra.mxu0 0.0
        %3729 = vmatprep.subr.mxu0 0.0
        %3730 = vmatpush1.msra.mxu0 0.0
        %3731 = vmatprep.subr.mxu0 0.0
        %3732 = vmatpush1.msra.mxu0 0.0
        %3733 = vmatprep.subr.mxu0 0.0
        %3734 = vmatpush1.msra.mxu0 0.0
        %3735 = vmatprep.subr.mxu0 0.0
        %3736 = vmatpush1.msra.mxu0 0.0
        %3737 = vmatprep.subr.mxu0 0.0
        %3738 = vmatpush1.msra.mxu0 0.0
        %3739 = vmatprep.subr.mxu0 0.0
        %3740 = vmatpush1.msra.mxu0 0.0
        %3741 = vmatprep.subr.mxu0 0.0
        %3742 = vmatpush1.msra.mxu0 0.0
        %3743 = vmatprep.subr.mxu0 0.0
        %3744 = vmatpush1.msra.mxu0 0.0
        %3745 = vmatprep.subr.mxu0 0.0
        %3746 = vmatpush1.msra.mxu0 0.0
        %3747 = vmatprep.subr.mxu0 0.0
        %3748 = vmatpush1.msra.mxu0 0.0
        %3749 = vmatprep.subr.mxu0 0.0
        %3750 = vmatpush1.msra.mxu0 0.0
        %3751 = vmatprep.subr.mxu0 0.0
        %3752 = vmatpush1.msra.mxu0 0.0
        %3753 = vmatprep.subr.mxu0 0.0
        %3754 = vmatpush1.msra.mxu0 0.0
        %3755 = vmatprep.subr.mxu0 0.0
        %3756 = vmatpush1.msra.mxu0 0.0
        %3757 = vmatprep.subr.mxu0 0.0
        %3758 = vmatpush1.msra.mxu0 0.0
        %3759 = vmatprep.subr.mxu0 0.0
        %3760 = vmatpush1.msra.mxu0 0.0
        %3761 = vmatprep.subr.mxu0 0.0
        %3762 = vmatpush1.msra.mxu0 0.0
        %3763 = vmatprep.subr.mxu0 0.0
        %3764 = vmatpush1.msra.mxu0 0.0
        %3765 = vmatprep.subr.mxu0 0.0
        %3766 = vmatpush1.msra.mxu0 0.0
        %3767 = vmatprep.subr.mxu0 0.0
        %3768 = vmatpush1.msra.mxu0 0.0
        %3769 = vmatprep.subr.mxu0 0.0
        %3770 = vmatpush1.msra.mxu0 0.0
        %3771 = vmatprep.subr.mxu0 0.0
        %3772 = vmatpush1.msra.mxu0 0.0
        %3773 = vmatprep.subr.mxu0 0.0
        %3774 = vmatpush1.msra.mxu0 0.0
        %3775 = vmatprep.subr.mxu0 0.0
        %3776 = vmatpush1.msra.mxu0 0.0
        %3777 = vmatprep.subr.mxu0 0.0
        %3778 = vmatpush1.msra.mxu0 0.0
        %3779 = vmatprep.subr.mxu0 0.0
        %3780 = vmatpush1.msra.mxu0 0.0
        %3781 = vmatprep.subr.mxu0 0.0
        %3782 = vmatpush1.msra.mxu0 0.0
        %3783 = vmatprep.subr.mxu0 0.0
        %3784 = vmatpush1.msra.mxu0 0.0
        %3785 = vmatprep.subr.mxu0 0.0
        %3786 = vmatpush1.msra.mxu0 0.0
        %3787 = vmatprep.mubr.f32.mxu0 0.0
        %3788 = vmatmul.mubr.f32.gmra.mrb[0].mxu0 %v3700
        %v3789 = vpop.f32.mrb[0].mxu0
        %v3790 = vadd.f32 %v3697, %v3789
        %v3791 = vpop.f32.mrb[0].mxu0
        %3792 = vmatprep.mubr.f32.mxu0 0.0
        %3793 = vmatmul.mubr.f32.gmra.mrb[0].mxu0 %v3703
        %v3794 = vpop.f32.mrb[0].mxu0
        %v3795 = vadd.f32 %v3697, %v3794
        %v3796 = vpop.f32.mrb[0].mxu0
        %3797 = vmatprep.mubr.f32.mxu0 0.0
        %3798 = vmatmul.mubr.f32.gmra.mrb[0].mxu0 %v3706
        %v3799 = vpop.f32.mrb[0].mxu0
        %v3800 = vadd.f32 %v3697, %v3799
        %v3801 = vpop.f32.mrb[0].mxu0
        %3802 = vmatprep.mubr.f32.mxu0 0.0
        %3803 = vmatmul.mubr.f32.gmra.mrb[0].mxu0 %v3709
        %v3804 = vpop.f32.mrb[0].mxu0
        %v3805 = vadd.f32 %v3697, %v3804
        %v3806 = vpop.f32.mrb[0].mxu0
        %3807 = vmatprep.mubr.f32.mxu0 0.0
        %3808 = vmatmul.mubr.f32.gmra.mrb[0].mxu0 %v3712
        %v3809 = vpop.f32.mrb[0].mxu0
        %v3810 = vadd.f32 %v3697, %v3809
        %v3811 = vpop.f32.mrb[0].mxu0
        %3812 = vmatprep.mubr.f32.mxu0 0.0
        %3813 = vmatmul.mubr.f32.gmra.mrb[0].mxu0 %v3715
        %v3814 = vpop.f32.mrb[0].mxu0
        %v3815 = vadd.f32 %v3697, %v3814
        %v3816 = vpop.f32.mrb[0].mxu0
        %3817 = vmatprep.mubr.f32.mxu0 0.0
        %3818 = vmatmul.mubr.f32.gmra.mrb[0].mxu0 %v3718
        %v3819 = vpop.f32.mrb[0].mxu0
        %v3820 = vadd.f32 %v3697, %v3819
        %v3821 = vpop.f32.mrb[0].mxu0
        %3822 = vmatprep.mubr.f32.mxu0 0.0
        %3823 = vmatmul.mubr.f32.gmra.mrb[0].mxu0 %v3721
        %v3824 = vpop.f32.mrb[0].mxu0
        %v3825 = vadd.f32 %v3697, %v3824
        %v3826 = vpop.f32.mrb[0].mxu0
        %3827 = vdwg.mxu0
        %v3828 = vld [vmem:[%s11] sm:$0x1]
        %v3830 = vlaneseq
        %v3831 = vshrl.u32 %v3830, 7
        %v3832 = vsub.s32 0, %v3831
        %v3833 = vrot.slane %v3828, %v3832
        %v3835 = vadd.f32 %v3682, %v3833
        %v3836 = vadd.f32 %v3683, %v3833
        %v3837 = vadd.f32 %v3684, %v3833
        %v3838 = vadd.f32 %v3685, %v3833
        %v3839 = vadd.f32 %v3686, %v3833
        %v3840 = vadd.f32 %v3687, %v3833
        %v3841 = vadd.f32 %v3688, %v3833
        %v3842 = vadd.f32 %v3689, %v3833
        %v3843 = vadd.f32 %v3835, %v3790
        %v3844 = vadd.f32 %v3836, %v3795
        %v3845 = vadd.f32 %v3837, %v3800
        %v3846 = vadd.f32 %v3838, %v3805
        %v3847 = vadd.f32 %v3839, %v3810
        %v3848 = vadd.f32 %v3840, %v3815
        %v3849 = vadd.f32 %v3841, %v3820
        %v3850 = vadd.f32 %v3842, %v3825
        %3851 = vst.msk [vmem:[%s525] sm:$0xff] %vm2065, %v3843
        %3852 = vst.msk [vmem:[%s525 + $0x8] sm:$0xff] %vm2065, %v3844
        %3853 = vst.msk [vmem:[%s525 + $0x10] sm:$0xff] %vm2065, %v3845
        %3854 = vst.msk [vmem:[%s525 + $0x18] sm:$0xff] %vm2065, %v3846
        %3855 = vst.msk [vmem:[%s525 + $0x20] sm:$0xff] %vm2065, %v3847
        %3856 = vst.msk [vmem:[%s525 + $0x28] sm:$0xff] %vm2065, %v3848
        %3857 = vst.msk [vmem:[%s525 + $0x30] sm:$0xff] %vm2065, %v3849
        %3858 = vst.msk [vmem:[%s525 + $0x38] sm:$0xff] %vm2065, %v3850
        %s3859 = sand.u32 %s344, 1
        %s3860 = scalar_lea.sflag [#allocation6], %s3859
        %s3861 = sand.u32 %s344, 1
        %s3862 = smul.addr %s3861, 64
        %s3863 = scalar_lea.vmem [#allocation10], %s3862
        // Predicated region
        $region89: #{resblockg_forward.1} parent=75 // pred_check
          %p3864 = pneg %p354
        $region90: #{resblockg_forward.1} parent=75 // pred_check_branch
          %3866 = sbr.rel (%p3864) target = $region92
        $region91: #{resblockg_forward.1} parent=75 // pred_region
          %s3868 = ssub.s32 1024, 1024
          %3869 = vsyncadd %s3860, %s3868
          %s3870 = smul.addr %s32, 8
          %s3871 = smul.addr %s3870, 128
          %s3872 = scalar_lea.hbm %s14, %s3871
          %s3873 = sshll.u32 %s3863, 4
          %s3874 = int_to_ptr.vmem [resolvable:$true] %s3873
          %3879 = dma.vmem_to_hbm [thread:$0]  %s3874, 1024, %s3872, %s3860, 128, 128, 8
        $region92: #{resblockg_forward.1} parent=75 // pred_fallthru
          _
      $region76: #{resblockg_forward.1} parent=5 // pred_fallthru
        _
      %p3880 = scmp.le.s32.totalorder 2, %s27
      // Predicated region
      $region93: #{resblockg_forward.1} parent=5 // pred_check
        %p3881 = pneg %p3880
      $region94: #{resblockg_forward.1} parent=5 // pred_check_branch
        %3883 = sbr.rel (%p3881) target = $region96
      $region95: #{resblockg_forward.1} parent=5 // pred_region
        %s3884 = ssub.s32 %s27, 2
        // Predicated region
        $region97: #{resblockg_forward.1} parent=95 // pred_check
          %p3885 = pneg %p360
        $region98: #{resblockg_forward.1} parent=95 // pred_check_branch
          %3887 = sbr.rel (%p3885) target = $region100
        $region99: #{resblockg_forward.1} parent=95 // pred_region
          %s3888 = sand.u32 %s345, 1
          %s3889 = scalar_lea.sflag [#allocation6], %s3888
          %s3890 = sand.u32 %s345, 1
          %s3891 = smul.addr %s3890, 64
          %s3892 = scalar_lea.vmem [#allocation10], %s3891
          %3893 = dma.done %s3889, 1024
        $region100: #{resblockg_forward.1} parent=95 // pred_fallthru
          _
      $region96: #{resblockg_forward.1} parent=5 // pred_fallthru
        _
    $region6: #{resblockg_forward.1} parent=1 // loop_footer
      %s31 = sadd.s32 1, %s27
    $region7: #{resblockg_forward.1} parent=1 // loop_footer_branch
      %26 = sbr.rel target = $region3
    $region8: #{resblockg_forward.1} parent=1 // loop_exit
      _
    %3894 = vsyncpa [#allocation5], 1
    %s3895 = scalar_lea.sflag [#allocation5], 1
    %3896 = vsyncpa %s3895, 1
    %3897 = vsyncpa [#allocation8], 1
    %3898 = vsyncpa [#allocation6], 1
    %s3899 = scalar_lea.sflag [#allocation6], 1
    %3900 = vsyncpa %s3899, 1

</llo_original>
